<compile_context>
chip_gen: v7x
topology: tpu7x:2x2x1
jax: 0.10.0
libtpu: 0.0.40
codegen_flags: <defaults>
</compile_context>

<pallas_src>
import functools

import jax
import jax.numpy as jnp
from jax.experimental import pallas as pl
from jax.experimental.pallas import tpu as pltpu


def _resblock_kernel(x_ref, w1_ref, w2_ref, flip_ref, o_ref, pad_ref, cols_ref,
                     *, eps: float, pad: int, taps: int):
    """Fused ResBlock forward for one batch block.  All refs live in VMEM.

    x_ref   : (Bt, C, L)    input slab, native NCL layout (time on lanes)
    w1_ref  : (C, K*C)      conv1 im2col weight: [o, k*C + c] = w1[o, c, k]
    w2_ref  : (C, K*C)      conv2 im2col weight
    flip_ref: (p, p)        anti-diagonal exchange matrix (lane reversal)
    o_ref   : (Bt, C, L)
    pad_ref : (C, L + 2p)   scratch: reflection-padded activation
    cols_ref: (K*C, L)      scratch: im2col operand
    """
    chans = x_ref.shape[1]
    length = x_ref.shape[2]
    flip = flip_ref[...]
    w1 = w1_ref[...]
    w2 = w2_ref[...]

    def reflect_pad(v):
        # ReflectionPad1d(p): middle = v, boundaries = reversed edge slabs.
        # The (p, p) exchange-matrix dot is exact with one-hot weights, so
        # HIGHEST precision here is free-ish and avoids rounding activations
        # before the convs (review correctness note).
        left = jnp.dot(v[:, 1:pad + 1], flip,
                       precision=jax.lax.Precision.HIGHEST,
                       preferred_element_type=jnp.float32)
        right = jnp.dot(v[:, length - pad - 1:length - 1], flip,
                        precision=jax.lax.Precision.HIGHEST,
                        preferred_element_type=jnp.float32)
        pad_ref[:, 0:pad] = left
        pad_ref[:, pad:pad + length] = v
        pad_ref[:, pad + length:2 * pad + length] = right

    def conv(w2d):
        # im2col: cols[k*C + c, t] = pad[c, t + k]; one deep-contraction matmul
        # (K*C = 124) instead of K depth-C matmuls.
        vpad = pad_ref[...]
        for k in range(taps):                      # taps static -> unrolled
            cols_ref[k * chans:(k + 1) * chans, :] = vpad[:, k:k + length]
        return jnp.dot(w2d, cols_ref[...], preferred_element_type=jnp.float32)

    def instance_norm(v):
        # InstanceNorm1d (affine=False): per-channel stats over time = lanes.
        mean = jnp.mean(v, axis=1, keepdims=True)
        centered = v - mean
        var = jnp.mean(centered * centered, axis=1, keepdims=True)
        return centered * jax.lax.rsqrt(var + eps)

    for bi in range(x_ref.shape[0]):               # static batch block
        x = x_ref[bi].astype(jnp.float32)          # (C, L)
        reflect_pad(x)
        h = jnp.maximum(instance_norm(conv(w1)), 0.0)
        reflect_pad(h)
        y = instance_norm(conv(w2)) + x
        o_ref[bi] = y.astype(o_ref.dtype)


def resblock_forward(x, conv1_w, conv2_w, *, eps: float = 1e-5,
                     batch_block: int = 1):
    """ResBlock forward.

    x       : (B, C, L)      PyTorch NCL layout (kept end-to-end; no transposes)
    conv1_w : (Cout, Cin, K) PyTorch Conv1d weight layout
    conv2_w : (Cout, Cout, K)
    batch_block: samples per grid step.  Use >1 on single-TC chips (v5e/v6e) to
                 amortize per-step overhead; keep >=2 grid steps for v7x's 2 TCs.
    """
    b, c_in, length = x.shape
    c_out, c_in_w, k = conv1_w.shape
    pad = (k - 1) // 2
    assert c_in_w == c_in and conv2_w.shape == (c_out, c_out, k)
    assert c_out == c_in, "residual add requires ic == oc"
    assert length > pad, "ReflectionPad1d requires pad < signal length"
    assert pad >= 1
    assert b % batch_block == 0

    # (Cout, Cin, K) -> (Cout, K*Cin): each conv becomes one im2col matmul.
    w1 = jnp.transpose(conv1_w, (0, 2, 1)).reshape(c_out, k * c_in)
    w1 = w1.astype(jnp.float32)
    w2 = jnp.transpose(conv2_w, (0, 2, 1)).reshape(c_out, k * c_out)
    w2 = w2.astype(jnp.float32)
    # (p, p) anti-diagonal exchange matrix: (slab @ flip) reverses the last axis.
    flip = jnp.flip(jnp.eye(pad, dtype=jnp.float32), axis=0)

    kernel = functools.partial(_resblock_kernel, eps=eps, pad=pad, taps=k)
    out = pl.pallas_call(
        kernel,
        out_shape=jax.ShapeDtypeStruct((b, c_out, length), x.dtype),
        grid=(b // batch_block,),                  # one batch block per step
        in_specs=[
            pl.BlockSpec((batch_block, c_in, length), lambda i: (i, 0, 0)),
            pl.BlockSpec((c_out, k * c_in), lambda i: (0, 0)),
            pl.BlockSpec((c_out, k * c_out), lambda i: (0, 0)),
            pl.BlockSpec((pad, pad), lambda i: (0, 0)),
        ],
        out_specs=pl.BlockSpec((batch_block, c_out, length), lambda i: (i, 0, 0)),
        scratch_shapes=[
            pltpu.VMEM((c_out, length + 2 * pad), jnp.float32),   # padded act
            pltpu.VMEM((k * c_out, length), jnp.float32),         # im2col cols
        ],
        # VMEM use ~ 4*K*C*L bytes (e.g. ~2 MiB at L=4096) -> well under the
        # default scoped limit, so no explicit vmem_limit_bytes needed.
        compiler_params=pltpu.CompilerParams(
            dimension_semantics=("parallel",),     # batch shards across TCs (v7x)
        ),
    )(x, w1, w2, flip)
    return out


def _resblock_reference(x, conv1_w, conv2_w, eps=1e-5):
    """Pure-JAX reference matching the PyTorch module forward (f32 convs)."""
    pad = (conv1_w.shape[-1] - 1) // 2

    def conv(v, w):
        vp = jnp.pad(v, ((0, 0), (0, 0), (pad, pad)), mode="reflect")
        return jax.lax.conv_general_dilated(
            vp, w, window_strides=(1,), padding="VALID",
            dimension_numbers=("NCH", "OIH", "NCH"),
            precision=jax.lax.Precision.HIGHEST)

    def inorm(v):
        m = jnp.mean(v, axis=-1, keepdims=True)
        c = v - m
        var = jnp.mean(c * c, axis=-1, keepdims=True)
        return c * jax.lax.rsqrt(var + eps)

    h = jax.nn.relu(inorm(conv(x, conv1_w)))
    return inorm(conv(h, conv2_w)) + x


if __name__ == "__main__":
    key = jax.random.PRNGKey(0)
    k_x, k_w1, k_w2 = jax.random.split(key, 3)

    B, C, L, K = 2, 4, 128, 31        # ic = oc = 4, seq length 128 (> pad of 15)
    x = jax.random.normal(k_x, (B, C, L), dtype=jnp.float32)
    scale = 1.0 / float(jnp.sqrt(C * K))
    conv1_w = jax.random.normal(k_w1, (C, C, K), dtype=jnp.float32) * scale
    conv2_w = jax.random.normal(k_w2, (C, C, K), dtype=jnp.float32) * scale

    y = jax.jit(resblock_forward)(x, conv1_w, conv2_w)
    jax.block_until_ready(y)

    assert y.shape == x.shape and y.dtype == x.dtype

    y_ref = _resblock_reference(x, conv1_w, conv2_w)
    max_err = float(jnp.max(jnp.abs(y - y_ref)))
    # Conv matmuls run at default MXU precision (per review); tolerance covers
    # bf16-level rounding relative to the f32 reference.
    assert max_err < 5e-2, f"max abs error vs reference: {max_err}"

    print("KERNEL_OK")
</pallas_src>

<mosaic_0001>
module attributes {stable_mosaic.version = 11 : i64} {
  func.func @_resblock_kernel(%arg0: i32, %arg1: memref<1x4x128xf32, #tpu.memory_space<vmem>>, %arg2: memref<4x124xf32, #tpu.memory_space<vmem>>, %arg3: memref<4x124xf32, #tpu.memory_space<vmem>>, %arg4: memref<15x15xf32, #tpu.memory_space<vmem>>, %arg5: memref<1x4x128xf32, #tpu.memory_space<vmem>>, %arg6: memref<4x158xf32, #tpu.memory_space<vmem>>, %arg7: memref<124x128xf32, #tpu.memory_space<vmem>>) attributes {dimension_semantics = [#tpu.dimension_semantics<parallel>], iteration_bounds = array<i64: 2>, scalar_prefetch = 0 : i64, scratch_operands = 2 : i64, tpu.core_type = #tpu.core_type<tc>, window_params = [{transform_indices = @transform_0, window_bounds = array<i64: 1, 4, 128>}, {pipeline_mode = #tpu.pipeline_mode<synchronous>, transform_indices = @transform_1, window_bounds = array<i64: 4, 124>}, {pipeline_mode = #tpu.pipeline_mode<synchronous>, transform_indices = @transform_2, window_bounds = array<i64: 4, 124>}, {pipeline_mode = #tpu.pipeline_mode<synchronous>, transform_indices = @transform_3, window_bounds = array<i64: 15, 15>}, {transform_indices = @transform_4, window_bounds = array<i64: 1, 4, 128>}]} {
    %c0 = arith.constant 0 : index
    %c0_0 = arith.constant 0 : index
    %0 = vector.load %arg4[%c0, %c0_0] : memref<15x15xf32, #tpu.memory_space<vmem>>, vector<15x15xf32>
    %c0_1 = arith.constant 0 : index
    %c0_2 = arith.constant 0 : index
    %1 = vector.load %arg2[%c0_1, %c0_2] : memref<4x124xf32, #tpu.memory_space<vmem>>, vector<4x124xf32>
    %c0_3 = arith.constant 0 : index
    %c0_4 = arith.constant 0 : index
    %2 = vector.load %arg3[%c0_3, %c0_4] : memref<4x124xf32, #tpu.memory_space<vmem>>, vector<4x124xf32>
    %c0_5 = arith.constant 0 : index
    %c0_6 = arith.constant 0 : index
    %c0_7 = arith.constant 0 : index
    %3 = vector.load %arg1[%c0_5, %c0_6, %c0_7] : memref<1x4x128xf32, #tpu.memory_space<vmem>>, vector<1x4x128xf32>
    %4 = vector.shape_cast %3 : vector<1x4x128xf32> to vector<4x128xf32>
    %5 = vector.extract_strided_slice %4 {offsets = [0, 1], sizes = [4, 15], strides = [1, 1]} : vector<4x128xf32> to vector<4x15xf32>
    %cst = arith.constant dense<0.000000e+00> : vector<4x15xf32>
    %6 = tpu.matmul %5, %0, %cst {dimension_numbers = #tpu.dot_dimension_numbers<[1], [0], [0], [1], [0, 0, 1, 1], [], []>, precision = #tpu.contract_precision<fp32>} : vector<4x15xf32>, vector<15x15xf32>, vector<4x15xf32> -> vector<4x15xf32>
    %7 = vector.extract_strided_slice %4 {offsets = [0, 112], sizes = [4, 15], strides = [1, 1]} : vector<4x128xf32> to vector<4x15xf32>
    %cst_8 = arith.constant dense<0.000000e+00> : vector<4x15xf32>
    %8 = tpu.matmul %7, %0, %cst_8 {dimension_numbers = #tpu.dot_dimension_numbers<[1], [0], [0], [1], [0, 0, 1, 1], [], []>, precision = #tpu.contract_precision<fp32>} : vector<4x15xf32>, vector<15x15xf32>, vector<4x15xf32> -> vector<4x15xf32>
    %c0_9 = arith.constant 0 : index
    %c0_10 = arith.constant 0 : index
    %9 = vector.load %arg6[%c0_9, %c0_10] : memref<4x158xf32, #tpu.memory_space<vmem>>, vector<4x15xf32>
    tpu.vector_store %arg6[%c0_9, %c0_10], %6 {strides = array<i32>} : memref<4x158xf32, #tpu.memory_space<vmem>>, vector<4x15xf32>,
    %c0_11 = arith.constant 0 : index
    %c15 = arith.constant 15 : index
    %10 = vector.load %arg6[%c0_11, %c15] : memref<4x158xf32, #tpu.memory_space<vmem>>, vector<4x128xf32>
    tpu.vector_store %arg6[%c0_11, %c15], %4 {strides = array<i32>} : memref<4x158xf32, #tpu.memory_space<vmem>>, vector<4x128xf32>,
    %c0_12 = arith.constant 0 : index
    %c143 = arith.constant 143 : index
    %11 = vector.load %arg6[%c0_12, %c143] : memref<4x158xf32, #tpu.memory_space<vmem>>, vector<4x15xf32>
    tpu.vector_store %arg6[%c0_12, %c143], %8 {strides = array<i32>} : memref<4x158xf32, #tpu.memory_space<vmem>>, vector<4x15xf32>,
    %c0_13 = arith.constant 0 : index
    %c0_14 = arith.constant 0 : index
    %12 = vector.load %arg6[%c0_13, %c0_14] : memref<4x158xf32, #tpu.memory_space<vmem>>, vector<4x158xf32>
    %13 = vector.extract_strided_slice %12 {offsets = [0, 0], sizes = [4, 128], strides = [1, 1]} : vector<4x158xf32> to vector<4x128xf32>
    %c0_15 = arith.constant 0 : index
    %c0_16 = arith.constant 0 : index
    %14 = vector.load %arg7[%c0_15, %c0_16] : memref<124x128xf32, #tpu.memory_space<vmem>>, vector<4x128xf32>
    tpu.vector_store %arg7[%c0_15, %c0_16], %13 {strides = array<i32>} : memref<124x128xf32, #tpu.memory_space<vmem>>, vector<4x128xf32>,
    %15 = vector.extract_strided_slice %12 {offsets = [0, 1], sizes = [4, 128], strides = [1, 1]} : vector<4x158xf32> to vector<4x128xf32>
    %c4 = arith.constant 4 : index
    %c0_17 = arith.constant 0 : index
    %16 = vector.load %arg7[%c4, %c0_17] : memref<124x128xf32, #tpu.memory_space<vmem>>, vector<4x128xf32>
    tpu.vector_store %arg7[%c4, %c0_17], %15 {strides = array<i32>} : memref<124x128xf32, #tpu.memory_space<vmem>>, vector<4x128xf32>,
    %17 = vector.extract_strided_slice %12 {offsets = [0, 2], sizes = [4, 128], strides = [1, 1]} : vector<4x158xf32> to vector<4x128xf32>
    %c8 = arith.constant 8 : index
    %c0_18 = arith.constant 0 : index
    %18 = vector.load %arg7[%c8, %c0_18] : memref<124x128xf32, #tpu.memory_space<vmem>>, vector<4x128xf32>
    tpu.vector_store %arg7[%c8, %c0_18], %17 {strides = array<i32>} : memref<124x128xf32, #tpu.memory_space<vmem>>, vector<4x128xf32>,
    %19 = vector.extract_strided_slice %12 {offsets = [0, 3], sizes = [4, 128], strides = [1, 1]} : vector<4x158xf32> to vector<4x128xf32>
    %c12 = arith.constant 12 : index
    %c0_19 = arith.constant 0 : index
    %20 = vector.load %arg7[%c12, %c0_19] : memref<124x128xf32, #tpu.memory_space<vmem>>, vector<4x128xf32>
    tpu.vector_store %arg7[%c12, %c0_19], %19 {strides = array<i32>} : memref<124x128xf32, #tpu.memory_space<vmem>>, vector<4x128xf32>,
    %21 = vector.extract_strided_slice %12 {offsets = [0, 4], sizes = [4, 128], strides = [1, 1]} : vector<4x158xf32> to vector<4x128xf32>
    %c16 = arith.constant 16 : index
    %c0_20 = arith.constant 0 : index
    %22 = vector.load %arg7[%c16, %c0_20] : memref<124x128xf32, #tpu.memory_space<vmem>>, vector<4x128xf32>
    tpu.vector_store %arg7[%c16, %c0_20], %21 {strides = array<i32>} : memref<124x128xf32, #tpu.memory_space<vmem>>, vector<4x128xf32>,
    %23 = vector.extract_strided_slice %12 {offsets = [0, 5], sizes = [4, 128], strides = [1, 1]} : vector<4x158xf32> to vector<4x128xf32>
    %c20 = arith.constant 20 : index
    %c0_21 = arith.constant 0 : index
    %24 = vector.load %arg7[%c20, %c0_21] : memref<124x128xf32, #tpu.memory_space<vmem>>, vector<4x128xf32>
    tpu.vector_store %arg7[%c20, %c0_21], %23 {strides = array<i32>} : memref<124x128xf32, #tpu.memory_space<vmem>>, vector<4x128xf32>,
    %25 = vector.extract_strided_slice %12 {offsets = [0, 6], sizes = [4, 128], strides = [1, 1]} : vector<4x158xf32> to vector<4x128xf32>
    %c24 = arith.constant 24 : index
    %c0_22 = arith.constant 0 : index
    %26 = vector.load %arg7[%c24, %c0_22] : memref<124x128xf32, #tpu.memory_space<vmem>>, vector<4x128xf32>
    tpu.vector_store %arg7[%c24, %c0_22], %25 {strides = array<i32>} : memref<124x128xf32, #tpu.memory_space<vmem>>, vector<4x128xf32>,
    %27 = vector.extract_strided_slice %12 {offsets = [0, 7], sizes = [4, 128], strides = [1, 1]} : vector<4x158xf32> to vector<4x128xf32>
    %c28 = arith.constant 28 : index
    %c0_23 = arith.constant 0 : index
    %28 = vector.load %arg7[%c28, %c0_23] : memref<124x128xf32, #tpu.memory_space<vmem>>, vector<4x128xf32>
    tpu.vector_store %arg7[%c28, %c0_23], %27 {strides = array<i32>} : memref<124x128xf32, #tpu.memory_space<vmem>>, vector<4x128xf32>,
    %29 = vector.extract_strided_slice %12 {offsets = [0, 8], sizes = [4, 128], strides = [1, 1]} : vector<4x158xf32> to vector<4x128xf32>
    %c32 = arith.constant 32 : index
    %c0_24 = arith.constant 0 : index
    %30 = vector.load %arg7[%c32, %c0_24] : memref<124x128xf32, #tpu.memory_space<vmem>>, vector<4x128xf32>
    tpu.vector_store %arg7[%c32, %c0_24], %29 {strides = array<i32>} : memref<124x128xf32, #tpu.memory_space<vmem>>, vector<4x128xf32>,
    %31 = vector.extract_strided_slice %12 {offsets = [0, 9], sizes = [4, 128], strides = [1, 1]} : vector<4x158xf32> to vector<4x128xf32>
    %c36 = arith.constant 36 : index
    %c0_25 = arith.constant 0 : index
    %32 = vector.load %arg7[%c36, %c0_25] : memref<124x128xf32, #tpu.memory_space<vmem>>, vector<4x128xf32>
    tpu.vector_store %arg7[%c36, %c0_25], %31 {strides = array<i32>} : memref<124x128xf32, #tpu.memory_space<vmem>>, vector<4x128xf32>,
    %33 = vector.extract_strided_slice %12 {offsets = [0, 10], sizes = [4, 128], strides = [1, 1]} : vector<4x158xf32> to vector<4x128xf32>
    %c40 = arith.constant 40 : index
    %c0_26 = arith.constant 0 : index
    %34 = vector.load %arg7[%c40, %c0_26] : memref<124x128xf32, #tpu.memory_space<vmem>>, vector<4x128xf32>
    tpu.vector_store %arg7[%c40, %c0_26], %33 {strides = array<i32>} : memref<124x128xf32, #tpu.memory_space<vmem>>, vector<4x128xf32>,
    %35 = vector.extract_strided_slice %12 {offsets = [0, 11], sizes = [4, 128], strides = [1, 1]} : vector<4x158xf32> to vector<4x128xf32>
    %c44 = arith.constant 44 : index
    %c0_27 = arith.constant 0 : index
    %36 = vector.load %arg7[%c44, %c0_27] : memref<124x128xf32, #tpu.memory_space<vmem>>, vector<4x128xf32>
    tpu.vector_store %arg7[%c44, %c0_27], %35 {strides = array<i32>} : memref<124x128xf32, #tpu.memory_space<vmem>>, vector<4x128xf32>,
    %37 = vector.extract_strided_slice %12 {offsets = [0, 12], sizes = [4, 128], strides = [1, 1]} : vector<4x158xf32> to vector<4x128xf32>
    %c48 = arith.constant 48 : index
    %c0_28 = arith.constant 0 : index
    %38 = vector.load %arg7[%c48, %c0_28] : memref<124x128xf32, #tpu.memory_space<vmem>>, vector<4x128xf32>
    tpu.vector_store %arg7[%c48, %c0_28], %37 {strides = array<i32>} : memref<124x128xf32, #tpu.memory_space<vmem>>, vector<4x128xf32>,
    %39 = vector.extract_strided_slice %12 {offsets = [0, 13], sizes = [4, 128], strides = [1, 1]} : vector<4x158xf32> to vector<4x128xf32>
    %c52 = arith.constant 52 : index
    %c0_29 = arith.constant 0 : index
    %40 = vector.load %arg7[%c52, %c0_29] : memref<124x128xf32, #tpu.memory_space<vmem>>, vector<4x128xf32>
    tpu.vector_store %arg7[%c52, %c0_29], %39 {strides = array<i32>} : memref<124x128xf32, #tpu.memory_space<vmem>>, vector<4x128xf32>,
    %41 = vector.extract_strided_slice %12 {offsets = [0, 14], sizes = [4, 128], strides = [1, 1]} : vector<4x158xf32> to vector<4x128xf32>
    %c56 = arith.constant 56 : index
    %c0_30 = arith.constant 0 : index
    %42 = vector.load %arg7[%c56, %c0_30] : memref<124x128xf32, #tpu.memory_space<vmem>>, vector<4x128xf32>
    tpu.vector_store %arg7[%c56, %c0_30], %41 {strides = array<i32>} : memref<124x128xf32, #tpu.memory_space<vmem>>, vector<4x128xf32>,
    %43 = vector.extract_strided_slice %12 {offsets = [0, 15], sizes = [4, 128], strides = [1, 1]} : vector<4x158xf32> to vector<4x128xf32>
    %c60 = arith.constant 60 : index
    %c0_31 = arith.constant 0 : index
    %44 = vector.load %arg7[%c60, %c0_31] : memref<124x128xf32, #tpu.memory_space<vmem>>, vector<4x128xf32>
    tpu.vector_store %arg7[%c60, %c0_31], %43 {strides = array<i32>} : memref<124x128xf32, #tpu.memory_space<vmem>>, vector<4x128xf32>,
    %45 = vector.extract_strided_slice %12 {offsets = [0, 16], sizes = [4, 128], strides = [1, 1]} : vector<4x158xf32> to vector<4x128xf32>
    %c64 = arith.constant 64 : index
    %c0_32 = arith.constant 0 : index
    %46 = vector.load %arg7[%c64, %c0_32] : memref<124x128xf32, #tpu.memory_space<vmem>>, vector<4x128xf32>
    tpu.vector_store %arg7[%c64, %c0_32], %45 {strides = array<i32>} : memref<124x128xf32, #tpu.memory_space<vmem>>, vector<4x128xf32>,
    %47 = vector.extract_strided_slice %12 {offsets = [0, 17], sizes = [4, 128], strides = [1, 1]} : vector<4x158xf32> to vector<4x128xf32>
    %c68 = arith.constant 68 : index
    %c0_33 = arith.constant 0 : index
    %48 = vector.load %arg7[%c68, %c0_33] : memref<124x128xf32, #tpu.memory_space<vmem>>, vector<4x128xf32>
    tpu.vector_store %arg7[%c68, %c0_33], %47 {strides = array<i32>} : memref<124x128xf32, #tpu.memory_space<vmem>>, vector<4x128xf32>,
    %49 = vector.extract_strided_slice %12 {offsets = [0, 18], sizes = [4, 128], strides = [1, 1]} : vector<4x158xf32> to vector<4x128xf32>
    %c72 = arith.constant 72 : index
    %c0_34 = arith.constant 0 : index
    %50 = vector.load %arg7[%c72, %c0_34] : memref<124x128xf32, #tpu.memory_space<vmem>>, vector<4x128xf32>
    tpu.vector_store %arg7[%c72, %c0_34], %49 {strides = array<i32>} : memref<124x128xf32, #tpu.memory_space<vmem>>, vector<4x128xf32>,
    %51 = vector.extract_strided_slice %12 {offsets = [0, 19], sizes = [4, 128], strides = [1, 1]} : vector<4x158xf32> to vector<4x128xf32>
    %c76 = arith.constant 76 : index
    %c0_35 = arith.constant 0 : index
    %52 = vector.load %arg7[%c76, %c0_35] : memref<124x128xf32, #tpu.memory_space<vmem>>, vector<4x128xf32>
    tpu.vector_store %arg7[%c76, %c0_35], %51 {strides = array<i32>} : memref<124x128xf32, #tpu.memory_space<vmem>>, vector<4x128xf32>,
    %53 = vector.extract_strided_slice %12 {offsets = [0, 20], sizes = [4, 128], strides = [1, 1]} : vector<4x158xf32> to vector<4x128xf32>
    %c80 = arith.constant 80 : index
    %c0_36 = arith.constant 0 : index
    %54 = vector.load %arg7[%c80, %c0_36] : memref<124x128xf32, #tpu.memory_space<vmem>>, vector<4x128xf32>
    tpu.vector_store %arg7[%c80, %c0_36], %53 {strides = array<i32>} : memref<124x128xf32, #tpu.memory_space<vmem>>, vector<4x128xf32>,
    %55 = vector.extract_strided_slice %12 {offsets = [0, 21], sizes = [4, 128], strides = [1, 1]} : vector<4x158xf32> to vector<4x128xf32>
    %c84 = arith.constant 84 : index
    %c0_37 = arith.constant 0 : index
    %56 = vector.load %arg7[%c84, %c0_37] : memref<124x128xf32, #tpu.memory_space<vmem>>, vector<4x128xf32>
    tpu.vector_store %arg7[%c84, %c0_37], %55 {strides = array<i32>} : memref<124x128xf32, #tpu.memory_space<vmem>>, vector<4x128xf32>,
    %57 = vector.extract_strided_slice %12 {offsets = [0, 22], sizes = [4, 128], strides = [1, 1]} : vector<4x158xf32> to vector<4x128xf32>
    %c88 = arith.constant 88 : index
    %c0_38 = arith.constant 0 : index
    %58 = vector.load %arg7[%c88, %c0_38] : memref<124x128xf32, #tpu.memory_space<vmem>>, vector<4x128xf32>
    tpu.vector_store %arg7[%c88, %c0_38], %57 {strides = array<i32>} : memref<124x128xf32, #tpu.memory_space<vmem>>, vector<4x128xf32>,
    %59 = vector.extract_strided_slice %12 {offsets = [0, 23], sizes = [4, 128], strides = [1, 1]} : vector<4x158xf32> to vector<4x128xf32>
    %c92 = arith.constant 92 : index
    %c0_39 = arith.constant 0 : index
    %60 = vector.load %arg7[%c92, %c0_39] : memref<124x128xf32, #tpu.memory_space<vmem>>, vector<4x128xf32>
    tpu.vector_store %arg7[%c92, %c0_39], %59 {strides = array<i32>} : memref<124x128xf32, #tpu.memory_space<vmem>>, vector<4x128xf32>,
    %61 = vector.extract_strided_slice %12 {offsets = [0, 24], sizes = [4, 128], strides = [1, 1]} : vector<4x158xf32> to vector<4x128xf32>
    %c96 = arith.constant 96 : index
    %c0_40 = arith.constant 0 : index
    %62 = vector.load %arg7[%c96, %c0_40] : memref<124x128xf32, #tpu.memory_space<vmem>>, vector<4x128xf32>
    tpu.vector_store %arg7[%c96, %c0_40], %61 {strides = array<i32>} : memref<124x128xf32, #tpu.memory_space<vmem>>, vector<4x128xf32>,
    %63 = vector.extract_strided_slice %12 {offsets = [0, 25], sizes = [4, 128], strides = [1, 1]} : vector<4x158xf32> to vector<4x128xf32>
    %c100 = arith.constant 100 : index
    %c0_41 = arith.constant 0 : index
    %64 = vector.load %arg7[%c100, %c0_41] : memref<124x128xf32, #tpu.memory_space<vmem>>, vector<4x128xf32>
    tpu.vector_store %arg7[%c100, %c0_41], %63 {strides = array<i32>} : memref<124x128xf32, #tpu.memory_space<vmem>>, vector<4x128xf32>,
    %65 = vector.extract_strided_slice %12 {offsets = [0, 26], sizes = [4, 128], strides = [1, 1]} : vector<4x158xf32> to vector<4x128xf32>
    %c104 = arith.constant 104 : index
    %c0_42 = arith.constant 0 : index
    %66 = vector.load %arg7[%c104, %c0_42] : memref<124x128xf32, #tpu.memory_space<vmem>>, vector<4x128xf32>
    tpu.vector_store %arg7[%c104, %c0_42], %65 {strides = array<i32>} : memref<124x128xf32, #tpu.memory_space<vmem>>, vector<4x128xf32>,
    %67 = vector.extract_strided_slice %12 {offsets = [0, 27], sizes = [4, 128], strides = [1, 1]} : vector<4x158xf32> to vector<4x128xf32>
    %c108 = arith.constant 108 : index
    %c0_43 = arith.constant 0 : index
    %68 = vector.load %arg7[%c108, %c0_43] : memref<124x128xf32, #tpu.memory_space<vmem>>, vector<4x128xf32>
    tpu.vector_store %arg7[%c108, %c0_43], %67 {strides = array<i32>} : memref<124x128xf32, #tpu.memory_space<vmem>>, vector<4x128xf32>,
    %69 = vector.extract_strided_slice %12 {offsets = [0, 28], sizes = [4, 128], strides = [1, 1]} : vector<4x158xf32> to vector<4x128xf32>
    %c112 = arith.constant 112 : index
    %c0_44 = arith.constant 0 : index
    %70 = vector.load %arg7[%c112, %c0_44] : memref<124x128xf32, #tpu.memory_space<vmem>>, vector<4x128xf32>
    tpu.vector_store %arg7[%c112, %c0_44], %69 {strides = array<i32>} : memref<124x128xf32, #tpu.memory_space<vmem>>, vector<4x128xf32>,
    %71 = vector.extract_strided_slice %12 {offsets = [0, 29], sizes = [4, 128], strides = [1, 1]} : vector<4x158xf32> to vector<4x128xf32>
    %c116 = arith.constant 116 : index
    %c0_45 = arith.constant 0 : index
    %72 = vector.load %arg7[%c116, %c0_45] : memref<124x128xf32, #tpu.memory_space<vmem>>, vector<4x128xf32>
    tpu.vector_store %arg7[%c116, %c0_45], %71 {strides = array<i32>} : memref<124x128xf32, #tpu.memory_space<vmem>>, vector<4x128xf32>,
    %73 = vector.extract_strided_slice %12 {offsets = [0, 30], sizes = [4, 128], strides = [1, 1]} : vector<4x158xf32> to vector<4x128xf32>
    %c120 = arith.constant 120 : index
    %c0_46 = arith.constant 0 : index
    %74 = vector.load %arg7[%c120, %c0_46] : memref<124x128xf32, #tpu.memory_space<vmem>>, vector<4x128xf32>
    tpu.vector_store %arg7[%c120, %c0_46], %73 {strides = array<i32>} : memref<124x128xf32, #tpu.memory_space<vmem>>, vector<4x128xf32>,
    %c0_47 = arith.constant 0 : index
    %c0_48 = arith.constant 0 : index
    %75 = vector.load %arg7[%c0_47, %c0_48] : memref<124x128xf32, #tpu.memory_space<vmem>>, vector<124x128xf32>
    %cst_49 = arith.constant dense<0.000000e+00> : vector<4x128xf32>
    %76 = tpu.matmul %1, %75, %cst_49 {dimension_numbers = #tpu.dot_dimension_numbers<[1], [0], [0], [1], [0, 0, 1, 1], [], []>} : vector<4x124xf32>, vector<124x128xf32>, vector<4x128xf32> -> vector<4x128xf32>
    %cst_50 = arith.constant dense<0.000000e+00> : vector<4xf32>
    %77 = vector.multi_reduction <add>, %76, %cst_50 [1] : vector<4x128xf32> to vector<4xf32>
    %78 = vector.shape_cast %77 : vector<4xf32> to vector<4x1xf32>
    %cst_51 = arith.constant 1.280000e+02 : f32
    %79 = vector.broadcast %cst_51 : f32 to vector<4x1xf32>
    %80 = arith.divf %78, %79 : vector<4x1xf32>
    %81 = vector.broadcast %80 : vector<4x1xf32> to vector<4x128xf32>
    %82 = arith.subf %76, %81 : vector<4x128xf32>
    %83 = arith.mulf %82, %82 : vector<4x128xf32>
    %cst_52 = arith.constant dense<0.000000e+00> : vector<4xf32>
    %84 = vector.multi_reduction <add>, %83, %cst_52 [1] : vector<4x128xf32> to vector<4xf32>
    %85 = vector.shape_cast %84 : vector<4xf32> to vector<4x1xf32>
    %cst_53 = arith.constant 1.280000e+02 : f32
    %86 = vector.broadcast %cst_53 : f32 to vector<4x1xf32>
    %87 = arith.divf %85, %86 : vector<4x1xf32>
    %cst_54 = arith.constant 9.99999974E-6 : f32
    %88 = vector.broadcast %cst_54 : f32 to vector<4x1xf32>
    %89 = arith.addf %87, %88 : vector<4x1xf32>
    %90 = math.rsqrt %89 : vector<4x1xf32>
    %91 = vector.broadcast %90 : vector<4x1xf32> to vector<4x128xf32>
    %92 = arith.mulf %82, %91 : vector<4x128xf32>
    %cst_55 = arith.constant 0.000000e+00 : f32
    %93 = vector.broadcast %cst_55 : f32 to vector<4x128xf32>
    %94 = arith.maximumf %92, %93 : vector<4x128xf32>
    %95 = vector.extract_strided_slice %94 {offsets = [0, 1], sizes = [4, 15], strides = [1, 1]} : vector<4x128xf32> to vector<4x15xf32>
    %cst_56 = arith.constant dense<0.000000e+00> : vector<4x15xf32>
    %96 = tpu.matmul %95, %0, %cst_56 {dimension_numbers = #tpu.dot_dimension_numbers<[1], [0], [0], [1], [0, 0, 1, 1], [], []>, precision = #tpu.contract_precision<fp32>} : vector<4x15xf32>, vector<15x15xf32>, vector<4x15xf32> -> vector<4x15xf32>
    %97 = vector.extract_strided_slice %94 {offsets = [0, 112], sizes = [4, 15], strides = [1, 1]} : vector<4x128xf32> to vector<4x15xf32>
    %cst_57 = arith.constant dense<0.000000e+00> : vector<4x15xf32>
    %98 = tpu.matmul %97, %0, %cst_57 {dimension_numbers = #tpu.dot_dimension_numbers<[1], [0], [0], [1], [0, 0, 1, 1], [], []>, precision = #tpu.contract_precision<fp32>} : vector<4x15xf32>, vector<15x15xf32>, vector<4x15xf32> -> vector<4x15xf32>
    %c0_58 = arith.constant 0 : index
    %c0_59 = arith.constant 0 : index
    %99 = vector.load %arg6[%c0_58, %c0_59] : memref<4x158xf32, #tpu.memory_space<vmem>>, vector<4x15xf32>
    tpu.vector_store %arg6[%c0_58, %c0_59], %96 {strides = array<i32>} : memref<4x158xf32, #tpu.memory_space<vmem>>, vector<4x15xf32>,
    %c0_60 = arith.constant 0 : index
    %c15_61 = arith.constant 15 : index
    %100 = vector.load %arg6[%c0_60, %c15_61] : memref<4x158xf32, #tpu.memory_space<vmem>>, vector<4x128xf32>
    tpu.vector_store %arg6[%c0_60, %c15_61], %94 {strides = array<i32>} : memref<4x158xf32, #tpu.memory_space<vmem>>, vector<4x128xf32>,
    %c0_62 = arith.constant 0 : index
    %c143_63 = arith.constant 143 : index
    %101 = vector.load %arg6[%c0_62, %c143_63] : memref<4x158xf32, #tpu.memory_space<vmem>>, vector<4x15xf32>
    tpu.vector_store %arg6[%c0_62, %c143_63], %98 {strides = array<i32>} : memref<4x158xf32, #tpu.memory_space<vmem>>, vector<4x15xf32>,
    %c0_64 = arith.constant 0 : index
    %c0_65 = arith.constant 0 : index
    %102 = vector.load %arg6[%c0_64, %c0_65] : memref<4x158xf32, #tpu.memory_space<vmem>>, vector<4x158xf32>
    %103 = vector.extract_strided_slice %102 {offsets = [0, 0], sizes = [4, 128], strides = [1, 1]} : vector<4x158xf32> to vector<4x128xf32>
    %c0_66 = arith.constant 0 : index
    %c0_67 = arith.constant 0 : index
    %104 = vector.load %arg7[%c0_66, %c0_67] : memref<124x128xf32, #tpu.memory_space<vmem>>, vector<4x128xf32>
    tpu.vector_store %arg7[%c0_66, %c0_67], %103 {strides = array<i32>} : memref<124x128xf32, #tpu.memory_space<vmem>>, vector<4x128xf32>,
    %105 = vector.extract_strided_slice %102 {offsets = [0, 1], sizes = [4, 128], strides = [1, 1]} : vector<4x158xf32> to vector<4x128xf32>
    %c4_68 = arith.constant 4 : index
    %c0_69 = arith.constant 0 : index
    %106 = vector.load %arg7[%c4_68, %c0_69] : memref<124x128xf32, #tpu.memory_space<vmem>>, vector<4x128xf32>
    tpu.vector_store %arg7[%c4_68, %c0_69], %105 {strides = array<i32>} : memref<124x128xf32, #tpu.memory_space<vmem>>, vector<4x128xf32>,
    %107 = vector.extract_strided_slice %102 {offsets = [0, 2], sizes = [4, 128], strides = [1, 1]} : vector<4x158xf32> to vector<4x128xf32>
    %c8_70 = arith.constant 8 : index
    %c0_71 = arith.constant 0 : index
    %108 = vector.load %arg7[%c8_70, %c0_71] : memref<124x128xf32, #tpu.memory_space<vmem>>, vector<4x128xf32>
    tpu.vector_store %arg7[%c8_70, %c0_71], %107 {strides = array<i32>} : memref<124x128xf32, #tpu.memory_space<vmem>>, vector<4x128xf32>,
    %109 = vector.extract_strided_slice %102 {offsets = [0, 3], sizes = [4, 128], strides = [1, 1]} : vector<4x158xf32> to vector<4x128xf32>
    %c12_72 = arith.constant 12 : index
    %c0_73 = arith.constant 0 : index
    %110 = vector.load %arg7[%c12_72, %c0_73] : memref<124x128xf32, #tpu.memory_space<vmem>>, vector<4x128xf32>
    tpu.vector_store %arg7[%c12_72, %c0_73], %109 {strides = array<i32>} : memref<124x128xf32, #tpu.memory_space<vmem>>, vector<4x128xf32>,
    %111 = vector.extract_strided_slice %102 {offsets = [0, 4], sizes = [4, 128], strides = [1, 1]} : vector<4x158xf32> to vector<4x128xf32>
    %c16_74 = arith.constant 16 : index
    %c0_75 = arith.constant 0 : index
    %112 = vector.load %arg7[%c16_74, %c0_75] : memref<124x128xf32, #tpu.memory_space<vmem>>, vector<4x128xf32>
    tpu.vector_store %arg7[%c16_74, %c0_75], %111 {strides = array<i32>} : memref<124x128xf32, #tpu.memory_space<vmem>>, vector<4x128xf32>,
    %113 = vector.extract_strided_slice %102 {offsets = [0, 5], sizes = [4, 128], strides = [1, 1]} : vector<4x158xf32> to vector<4x128xf32>
    %c20_76 = arith.constant 20 : index
    %c0_77 = arith.constant 0 : index
    %114 = vector.load %arg7[%c20_76, %c0_77] : memref<124x128xf32, #tpu.memory_space<vmem>>, vector<4x128xf32>
    tpu.vector_store %arg7[%c20_76, %c0_77], %113 {strides = array<i32>} : memref<124x128xf32, #tpu.memory_space<vmem>>, vector<4x128xf32>,
    %115 = vector.extract_strided_slice %102 {offsets = [0, 6], sizes = [4, 128], strides = [1, 1]} : vector<4x158xf32> to vector<4x128xf32>
    %c24_78 = arith.constant 24 : index
    %c0_79 = arith.constant 0 : index
    %116 = vector.load %arg7[%c24_78, %c0_79] : memref<124x128xf32, #tpu.memory_space<vmem>>, vector<4x128xf32>
    tpu.vector_store %arg7[%c24_78, %c0_79], %115 {strides = array<i32>} : memref<124x128xf32, #tpu.memory_space<vmem>>, vector<4x128xf32>,
    %117 = vector.extract_strided_slice %102 {offsets = [0, 7], sizes = [4, 128], strides = [1, 1]} : vector<4x158xf32> to vector<4x128xf32>
    %c28_80 = arith.constant 28 : index
    %c0_81 = arith.constant 0 : index
    %118 = vector.load %arg7[%c28_80, %c0_81] : memref<124x128xf32, #tpu.memory_space<vmem>>, vector<4x128xf32>
    tpu.vector_store %arg7[%c28_80, %c0_81], %117 {strides = array<i32>} : memref<124x128xf32, #tpu.memory_space<vmem>>, vector<4x128xf32>,
    %119 = vector.extract_strided_slice %102 {offsets = [0, 8], sizes = [4, 128], strides = [1, 1]} : vector<4x158xf32> to vector<4x128xf32>
    %c32_82 = arith.constant 32 : index
    %c0_83 = arith.constant 0 : index
    %120 = vector.load %arg7[%c32_82, %c0_83] : memref<124x128xf32, #tpu.memory_space<vmem>>, vector<4x128xf32>
    tpu.vector_store %arg7[%c32_82, %c0_83], %119 {strides = array<i32>} : memref<124x128xf32, #tpu.memory_space<vmem>>, vector<4x128xf32>,
    %121 = vector.extract_strided_slice %102 {offsets = [0, 9], sizes = [4, 128], strides = [1, 1]} : vector<4x158xf32> to vector<4x128xf32>
    %c36_84 = arith.constant 36 : index
    %c0_85 = arith.constant 0 : index
    %122 = vector.load %arg7[%c36_84, %c0_85] : memref<124x128xf32, #tpu.memory_space<vmem>>, vector<4x128xf32>
    tpu.vector_store %arg7[%c36_84, %c0_85], %121 {strides = array<i32>} : memref<124x128xf32, #tpu.memory_space<vmem>>, vector<4x128xf32>,
    %123 = vector.extract_strided_slice %102 {offsets = [0, 10], sizes = [4, 128], strides = [1, 1]} : vector<4x158xf32> to vector<4x128xf32>
    %c40_86 = arith.constant 40 : index
    %c0_87 = arith.constant 0 : index
    %124 = vector.load %arg7[%c40_86, %c0_87] : memref<124x128xf32, #tpu.memory_space<vmem>>, vector<4x128xf32>
    tpu.vector_store %arg7[%c40_86, %c0_87], %123 {strides = array<i32>} : memref<124x128xf32, #tpu.memory_space<vmem>>, vector<4x128xf32>,
    %125 = vector.extract_strided_slice %102 {offsets = [0, 11], sizes = [4, 128], strides = [1, 1]} : vector<4x158xf32> to vector<4x128xf32>
    %c44_88 = arith.constant 44 : index
    %c0_89 = arith.constant 0 : index
    %126 = vector.load %arg7[%c44_88, %c0_89] : memref<124x128xf32, #tpu.memory_space<vmem>>, vector<4x128xf32>
    tpu.vector_store %arg7[%c44_88, %c0_89], %125 {strides = array<i32>} : memref<124x128xf32, #tpu.memory_space<vmem>>, vector<4x128xf32>,
    %127 = vector.extract_strided_slice %102 {offsets = [0, 12], sizes = [4, 128], strides = [1, 1]} : vector<4x158xf32> to vector<4x128xf32>
    %c48_90 = arith.constant 48 : index
    %c0_91 = arith.constant 0 : index
    %128 = vector.load %arg7[%c48_90, %c0_91] : memref<124x128xf32, #tpu.memory_space<vmem>>, vector<4x128xf32>
    tpu.vector_store %arg7[%c48_90, %c0_91], %127 {strides = array<i32>} : memref<124x128xf32, #tpu.memory_space<vmem>>, vector<4x128xf32>,
    %129 = vector.extract_strided_slice %102 {offsets = [0, 13], sizes = [4, 128], strides = [1, 1]} : vector<4x158xf32> to vector<4x128xf32>
    %c52_92 = arith.constant 52 : index
    %c0_93 = arith.constant 0 : index
    %130 = vector.load %arg7[%c52_92, %c0_93] : memref<124x128xf32, #tpu.memory_space<vmem>>, vector<4x128xf32>
    tpu.vector_store %arg7[%c52_92, %c0_93], %129 {strides = array<i32>} : memref<124x128xf32, #tpu.memory_space<vmem>>, vector<4x128xf32>,
    %131 = vector.extract_strided_slice %102 {offsets = [0, 14], sizes = [4, 128], strides = [1, 1]} : vector<4x158xf32> to vector<4x128xf32>
    %c56_94 = arith.constant 56 : index
    %c0_95 = arith.constant 0 : index
    %132 = vector.load %arg7[%c56_94, %c0_95] : memref<124x128xf32, #tpu.memory_space<vmem>>, vector<4x128xf32>
    tpu.vector_store %arg7[%c56_94, %c0_95], %131 {strides = array<i32>} : memref<124x128xf32, #tpu.memory_space<vmem>>, vector<4x128xf32>,
    %133 = vector.extract_strided_slice %102 {offsets = [0, 15], sizes = [4, 128], strides = [1, 1]} : vector<4x158xf32> to vector<4x128xf32>
    %c60_96 = arith.constant 60 : index
    %c0_97 = arith.constant 0 : index
    %134 = vector.load %arg7[%c60_96, %c0_97] : memref<124x128xf32, #tpu.memory_space<vmem>>, vector<4x128xf32>
    tpu.vector_store %arg7[%c60_96, %c0_97], %133 {strides = array<i32>} : memref<124x128xf32, #tpu.memory_space<vmem>>, vector<4x128xf32>,
    %135 = vector.extract_strided_slice %102 {offsets = [0, 16], sizes = [4, 128], strides = [1, 1]} : vector<4x158xf32> to vector<4x128xf32>
    %c64_98 = arith.constant 64 : index
    %c0_99 = arith.constant 0 : index
    %136 = vector.load %arg7[%c64_98, %c0_99] : memref<124x128xf32, #tpu.memory_space<vmem>>, vector<4x128xf32>
    tpu.vector_store %arg7[%c64_98, %c0_99], %135 {strides = array<i32>} : memref<124x128xf32, #tpu.memory_space<vmem>>, vector<4x128xf32>,
    %137 = vector.extract_strided_slice %102 {offsets = [0, 17], sizes = [4, 128], strides = [1, 1]} : vector<4x158xf32> to vector<4x128xf32>
    %c68_100 = arith.constant 68 : index
    %c0_101 = arith.constant 0 : index
    %138 = vector.load %arg7[%c68_100, %c0_101] : memref<124x128xf32, #tpu.memory_space<vmem>>, vector<4x128xf32>
    tpu.vector_store %arg7[%c68_100, %c0_101], %137 {strides = array<i32>} : memref<124x128xf32, #tpu.memory_space<vmem>>, vector<4x128xf32>,
    %139 = vector.extract_strided_slice %102 {offsets = [0, 18], sizes = [4, 128], strides = [1, 1]} : vector<4x158xf32> to vector<4x128xf32>
    %c72_102 = arith.constant 72 : index
    %c0_103 = arith.constant 0 : index
    %140 = vector.load %arg7[%c72_102, %c0_103] : memref<124x128xf32, #tpu.memory_space<vmem>>, vector<4x128xf32>
    tpu.vector_store %arg7[%c72_102, %c0_103], %139 {strides = array<i32>} : memref<124x128xf32, #tpu.memory_space<vmem>>, vector<4x128xf32>,
    %141 = vector.extract_strided_slice %102 {offsets = [0, 19], sizes = [4, 128], strides = [1, 1]} : vector<4x158xf32> to vector<4x128xf32>
    %c76_104 = arith.constant 76 : index
    %c0_105 = arith.constant 0 : index
    %142 = vector.load %arg7[%c76_104, %c0_105] : memref<124x128xf32, #tpu.memory_space<vmem>>, vector<4x128xf32>
    tpu.vector_store %arg7[%c76_104, %c0_105], %141 {strides = array<i32>} : memref<124x128xf32, #tpu.memory_space<vmem>>, vector<4x128xf32>,
    %143 = vector.extract_strided_slice %102 {offsets = [0, 20], sizes = [4, 128], strides = [1, 1]} : vector<4x158xf32> to vector<4x128xf32>
    %c80_106 = arith.constant 80 : index
    %c0_107 = arith.constant 0 : index
    %144 = vector.load %arg7[%c80_106, %c0_107] : memref<124x128xf32, #tpu.memory_space<vmem>>, vector<4x128xf32>
    tpu.vector_store %arg7[%c80_106, %c0_107], %143 {strides = array<i32>} : memref<124x128xf32, #tpu.memory_space<vmem>>, vector<4x128xf32>,
    %145 = vector.extract_strided_slice %102 {offsets = [0, 21], sizes = [4, 128], strides = [1, 1]} : vector<4x158xf32> to vector<4x128xf32>
    %c84_108 = arith.constant 84 : index
    %c0_109 = arith.constant 0 : index
    %146 = vector.load %arg7[%c84_108, %c0_109] : memref<124x128xf32, #tpu.memory_space<vmem>>, vector<4x128xf32>
    tpu.vector_store %arg7[%c84_108, %c0_109], %145 {strides = array<i32>} : memref<124x128xf32, #tpu.memory_space<vmem>>, vector<4x128xf32>,
    %147 = vector.extract_strided_slice %102 {offsets = [0, 22], sizes = [4, 128], strides = [1, 1]} : vector<4x158xf32> to vector<4x128xf32>
    %c88_110 = arith.constant 88 : index
    %c0_111 = arith.constant 0 : index
    %148 = vector.load %arg7[%c88_110, %c0_111] : memref<124x128xf32, #tpu.memory_space<vmem>>, vector<4x128xf32>
    tpu.vector_store %arg7[%c88_110, %c0_111], %147 {strides = array<i32>} : memref<124x128xf32, #tpu.memory_space<vmem>>, vector<4x128xf32>,
    %149 = vector.extract_strided_slice %102 {offsets = [0, 23], sizes = [4, 128], strides = [1, 1]} : vector<4x158xf32> to vector<4x128xf32>
    %c92_112 = arith.constant 92 : index
    %c0_113 = arith.constant 0 : index
    %150 = vector.load %arg7[%c92_112, %c0_113] : memref<124x128xf32, #tpu.memory_space<vmem>>, vector<4x128xf32>
    tpu.vector_store %arg7[%c92_112, %c0_113], %149 {strides = array<i32>} : memref<124x128xf32, #tpu.memory_space<vmem>>, vector<4x128xf32>,
    %151 = vector.extract_strided_slice %102 {offsets = [0, 24], sizes = [4, 128], strides = [1, 1]} : vector<4x158xf32> to vector<4x128xf32>
    %c96_114 = arith.constant 96 : index
    %c0_115 = arith.constant 0 : index
    %152 = vector.load %arg7[%c96_114, %c0_115] : memref<124x128xf32, #tpu.memory_space<vmem>>, vector<4x128xf32>
    tpu.vector_store %arg7[%c96_114, %c0_115], %151 {strides = array<i32>} : memref<124x128xf32, #tpu.memory_space<vmem>>, vector<4x128xf32>,
    %153 = vector.extract_strided_slice %102 {offsets = [0, 25], sizes = [4, 128], strides = [1, 1]} : vector<4x158xf32> to vector<4x128xf32>
    %c100_116 = arith.constant 100 : index
    %c0_117 = arith.constant 0 : index
    %154 = vector.load %arg7[%c100_116, %c0_117] : memref<124x128xf32, #tpu.memory_space<vmem>>, vector<4x128xf32>
    tpu.vector_store %arg7[%c100_116, %c0_117], %153 {strides = array<i32>} : memref<124x128xf32, #tpu.memory_space<vmem>>, vector<4x128xf32>,
    %155 = vector.extract_strided_slice %102 {offsets = [0, 26], sizes = [4, 128], strides = [1, 1]} : vector<4x158xf32> to vector<4x128xf32>
    %c104_118 = arith.constant 104 : index
    %c0_119 = arith.constant 0 : index
    %156 = vector.load %arg7[%c104_118, %c0_119] : memref<124x128xf32, #tpu.memory_space<vmem>>, vector<4x128xf32>
    tpu.vector_store %arg7[%c104_118, %c0_119], %155 {strides = array<i32>} : memref<124x128xf32, #tpu.memory_space<vmem>>, vector<4x128xf32>,
    %157 = vector.extract_strided_slice %102 {offsets = [0, 27], sizes = [4, 128], strides = [1, 1]} : vector<4x158xf32> to vector<4x128xf32>
    %c108_120 = arith.constant 108 : index
    %c0_121 = arith.constant 0 : index
    %158 = vector.load %arg7[%c108_120, %c0_121] : memref<124x128xf32, #tpu.memory_space<vmem>>, vector<4x128xf32>
    tpu.vector_store %arg7[%c108_120, %c0_121], %157 {strides = array<i32>} : memref<124x128xf32, #tpu.memory_space<vmem>>, vector<4x128xf32>,
    %159 = vector.extract_strided_slice %102 {offsets = [0, 28], sizes = [4, 128], strides = [1, 1]} : vector<4x158xf32> to vector<4x128xf32>
    %c112_122 = arith.constant 112 : index
    %c0_123 = arith.constant 0 : index
    %160 = vector.load %arg7[%c112_122, %c0_123] : memref<124x128xf32, #tpu.memory_space<vmem>>, vector<4x128xf32>
    tpu.vector_store %arg7[%c112_122, %c0_123], %159 {strides = array<i32>} : memref<124x128xf32, #tpu.memory_space<vmem>>, vector<4x128xf32>,
    %161 = vector.extract_strided_slice %102 {offsets = [0, 29], sizes = [4, 128], strides = [1, 1]} : vector<4x158xf32> to vector<4x128xf32>
    %c116_124 = arith.constant 116 : index
    %c0_125 = arith.constant 0 : index
    %162 = vector.load %arg7[%c116_124, %c0_125] : memref<124x128xf32, #tpu.memory_space<vmem>>, vector<4x128xf32>
    tpu.vector_store %arg7[%c116_124, %c0_125], %161 {strides = array<i32>} : memref<124x128xf32, #tpu.memory_space<vmem>>, vector<4x128xf32>,
    %163 = vector.extract_strided_slice %102 {offsets = [0, 30], sizes = [4, 128], strides = [1, 1]} : vector<4x158xf32> to vector<4x128xf32>
    %c120_126 = arith.constant 120 : index
    %c0_127 = arith.constant 0 : index
    %164 = vector.load %arg7[%c120_126, %c0_127] : memref<124x128xf32, #tpu.memory_space<vmem>>, vector<4x128xf32>
    tpu.vector_store %arg7[%c120_126, %c0_127], %163 {strides = array<i32>} : memref<124x128xf32, #tpu.memory_space<vmem>>, vector<4x128xf32>,
    %c0_128 = arith.constant 0 : index
    %c0_129 = arith.constant 0 : index
    %165 = vector.load %arg7[%c0_128, %c0_129] : memref<124x128xf32, #tpu.memory_space<vmem>>, vector<124x128xf32>
    %cst_130 = arith.constant dense<0.000000e+00> : vector<4x128xf32>
    %166 = tpu.matmul %2, %165, %cst_130 {dimension_numbers = #tpu.dot_dimension_numbers<[1], [0], [0], [1], [0, 0, 1, 1], [], []>} : vector<4x124xf32>, vector<124x128xf32>, vector<4x128xf32> -> vector<4x128xf32>
    %cst_131 = arith.constant dense<0.000000e+00> : vector<4xf32>
    %167 = vector.multi_reduction <add>, %166, %cst_131 [1] : vector<4x128xf32> to vector<4xf32>
    %168 = vector.shape_cast %167 : vector<4xf32> to vector<4x1xf32>
    %cst_132 = arith.constant 1.280000e+02 : f32
    %169 = vector.broadcast %cst_132 : f32 to vector<4x1xf32>
    %170 = arith.divf %168, %169 : vector<4x1xf32>
    %171 = vector.broadcast %170 : vector<4x1xf32> to vector<4x128xf32>
    %172 = arith.subf %166, %171 : vector<4x128xf32>
    %173 = arith.mulf %172, %172 : vector<4x128xf32>
    %cst_133 = arith.constant dense<0.000000e+00> : vector<4xf32>
    %174 = vector.multi_reduction <add>, %173, %cst_133 [1] : vector<4x128xf32> to vector<4xf32>
    %175 = vector.shape_cast %174 : vector<4xf32> to vector<4x1xf32>
    %cst_134 = arith.constant 1.280000e+02 : f32
    %176 = vector.broadcast %cst_134 : f32 to vector<4x1xf32>
    %177 = arith.divf %175, %176 : vector<4x1xf32>
    %cst_135 = arith.constant 9.99999974E-6 : f32
    %178 = vector.broadcast %cst_135 : f32 to vector<4x1xf32>
    %179 = arith.addf %177, %178 : vector<4x1xf32>
    %180 = math.rsqrt %179 : vector<4x1xf32>
    %181 = vector.broadcast %180 : vector<4x1xf32> to vector<4x128xf32>
    %182 = arith.mulf %172, %181 : vector<4x128xf32>
    %183 = arith.addf %182, %4 : vector<4x128xf32>
    %c0_136 = arith.constant 0 : index
    %c0_137 = arith.constant 0 : index
    %c0_138 = arith.constant 0 : index
    %184 = vector.load %arg5[%c0_136, %c0_137, %c0_138] : memref<1x4x128xf32, #tpu.memory_space<vmem>>, vector<1x4x128xf32>
    %185 = vector.shape_cast %184 : vector<1x4x128xf32> to vector<4x128xf32>
    %186 = vector.shape_cast %183 : vector<4x128xf32> to vector<1x4x128xf32>
    tpu.vector_store %arg5[%c0_136, %c0_137, %c0_138], %186 {strides = array<i32>} : memref<1x4x128xf32, #tpu.memory_space<vmem>>, vector<1x4x128xf32>,
    return
  }
  func.func @transform_0(%arg0: i32) -> (i32, i32, i32) {
    %c0_i32 = arith.constant 0 : i32
    %c0_i32_0 = arith.constant 0 : i32
    %c0_i32_1 = arith.constant 0 : i32
    return %arg0, %c0_i32, %c0_i32_0 : i32, i32, i32
  }
  func.func @transform_1(%arg0: i32) -> (i32, i32) {
    %c0_i32 = arith.constant 0 : i32
    %c0_i32_0 = arith.constant 0 : i32
    %c0_i32_1 = arith.constant 0 : i32
    return %c0_i32, %c0_i32_0 : i32, i32
  }
  func.func @transform_2(%arg0: i32) -> (i32, i32) {
    %c0_i32 = arith.constant 0 : i32
    %c0_i32_0 = arith.constant 0 : i32
    %c0_i32_1 = arith.constant 0 : i32
    return %c0_i32, %c0_i32_0 : i32, i32
  }
  func.func @transform_3(%arg0: i32) -> (i32, i32) {
    %c0_i32 = arith.constant 0 : i32
    %c0_i32_0 = arith.constant 0 : i32
    %c0_i32_1 = arith.constant 0 : i32
    return %c0_i32, %c0_i32_0 : i32, i32
  }
  func.func @transform_4(%arg0: i32) -> (i32, i32, i32) {
    %c0_i32 = arith.constant 0 : i32
    %c0_i32_0 = arith.constant 0 : i32
    %c0_i32_1 = arith.constant 0 : i32
    return %arg0, %c0_i32, %c0_i32_0 : i32, i32, i32
  }
}

</mosaic_0001>

<llo_original>
// kernel: resblock_forward.1
$region0: #{resblock_forward.1}
  #allocation0 [shape = 'u32[]', space=smem, size = 0x4, offset = 0x4, fixed_abs, tag = 'smem constant byte address 0x4 - core index']
  #allocation1 [shape = 'u32[144,128]{1,0:T(1,128)}', space=vmem, size = 0x12000, scoped, tag = 'internal scratch']
  #allocation2 [shape = 'f32[4,158]{1,0:T(4,128)}', space=vmem, size = 0x1000, scoped, tag = 'scratch operand']
  #allocation3 [shape = 'f32[124,128]{1,0:T(8,128)}', space=vmem, size = 0x10000, scoped, tag = 'scratch operand']
  %s0 = inlined_call_operand.vmem [shape: f32[2,4,128], index: 0, kind: input, shape index: {}]
  %s1 = inlined_call_operand.vmem [shape: f32[4,124], index: 1, kind: input, shape index: {}]
  %s2 = inlined_call_operand.vmem [shape: f32[4,124], index: 2, kind: input, shape index: {}]
  %s3 = inlined_call_operand.vmem [shape: f32[15,15], index: 3, kind: input, shape index: {}]
  %s4 = inlined_call_operand.hbm [shape: f32[2,4,128], index: 4, kind: output, shape index: {}]
  %s5 = sld [smem:[#allocation0]]
  $region49: #{resblock_forward.1} parent=0
    _
  %s7 = ssub.s32 1, %s5
  %s8 = scalar_select 0, %s7, %s5
  $region1: #{resblock_forward.1} parent=0
    #allocation4 [shape = 'u8[4096]{0}', space=vmem, size = 0x1000, scoped, tag = 'output window, operand 0']
    #allocation5 [shape = 's32[2]{0}', space=sflag, size = 0x8, scoped, tag = 'scoped memory for resblock_forward.1']
    %9 = vsyncpa [#allocation5], 0
    %s10 = scalar_lea.sflag [#allocation5], 1
    %11 = vsyncpa %s10, 0
    loop: start=0, step=1, limit=4
    $region2: #{resblock_forward.1} parent=1 // loop_pre_header
      _
    $region3: #{resblock_forward.1} parent=1 // loop_header
      %s13 = sphi 0, %s17
      %p14 = scmp.ge.s32.totalorder %s13, 4
      %s23 = sphi 0, %s25
      %s26 = sphi 0, %s23
      %s27 = sphi 0, %s26
      %s43 = sphi 0, %s27
      %s47 = sphi 0, %s47
      %s49 = sphi 0, %s47
      %s50 = sphi 0, %s49
      %s64 = sphi 0, %s50
      %s68 = sphi 0, %s68
      %s70 = sphi 0, %s68
      %s71 = sphi 0, %s70
      %s85 = sphi 0, %s71
      %s89 = sphi 0, %s89
      %s91 = sphi 0, %s89
      %s92 = sphi 0, %s91
      %s106 = sphi 0, %s92
      %s112 = sphi 0, %s114
      %s115 = sphi 0, %s112
      %s116 = sphi 0, %s115
      %s132 = sphi 0, %s116
    $region4: #{resblock_forward.1} parent=1 // loop_header_branch
      %16 = sbr.rel (%p14) target = $region8
    $region5: #{resblock_forward.1} parent=1 // loop_body
      %s18 = ssub.s32 %s13, 1
      %s19 = ssub.s32 %s13, 2
      %s20 = sadd.s32 %s13, 1
      %s21 = ssub.s32 %s13, %s20
      %p22 = scmp.eq.s32.totalorder %s21, 0
      %s24 = sadd.s32 %s23, 1
      %s25 = scalar_select %p22, %s23, %s24
      %p28 = pneg %p22
      %p29 = scmp.eq.s32.totalorder %s13, 1
      %p30 = por %p28, %p29
      %p31 = scmp.ne.s32.totalorder %s23, %s26
      %p32 = scmp.eq.s32.totalorder %s13, 0
      %p33 = por %p31, %p32
      %p34 = scmp.ne.s32.totalorder %s23, %s26
      %p35 = scmp.eq.s32.totalorder %s18, 1
      %p36 = por %p34, %p35
      %p37 = scmp.ne.s32.totalorder %s26, %s27
      %p38 = scmp.eq.s32.totalorder %s18, 0
      %p39 = por %p37, %p38
      %p40 = scmp.ne.s32.totalorder %s26, %s27
      %p41 = scmp.eq.s32.totalorder %s19, 1
      %p42 = por %p40, %p41
      %p44 = scmp.ne.s32.totalorder %s27, %s43
      %p45 = scmp.eq.s32.totalorder %s19, 0
      %p46 = por %p44, %p45
      %s48 = sadd.s32 %s47, 1
      %p51 = scmp.eq.s32.totalorder %s13, 1
      %p52 = scmp.ne.s32.totalorder %s47, %s49
      %p53 = scmp.eq.s32.totalorder %s13, 0
      %p54 = por %p52, %p53
      %p55 = scmp.ne.s32.totalorder %s47, %s49
      %p56 = scmp.eq.s32.totalorder %s18, 1
      %p57 = por %p55, %p56
      %p58 = scmp.ne.s32.totalorder %s49, %s50
      %p59 = scmp.eq.s32.totalorder %s18, 0
      %p60 = por %p58, %p59
      %p61 = scmp.ne.s32.totalorder %s49, %s50
      %p62 = scmp.eq.s32.totalorder %s19, 1
      %p63 = por %p61, %p62
      %p65 = scmp.ne.s32.totalorder %s50, %s64
      %p66 = scmp.eq.s32.totalorder %s19, 0
      %p67 = por %p65, %p66
      %s69 = sadd.s32 %s68, 1
      %p72 = scmp.eq.s32.totalorder %s13, 1
      %p73 = scmp.ne.s32.totalorder %s68, %s70
      %p74 = scmp.eq.s32.totalorder %s13, 0
      %p75 = por %p73, %p74
      %p76 = scmp.ne.s32.totalorder %s68, %s70
      %p77 = scmp.eq.s32.totalorder %s18, 1
      %p78 = por %p76, %p77
      %p79 = scmp.ne.s32.totalorder %s70, %s71
      %p80 = scmp.eq.s32.totalorder %s18, 0
      %p81 = por %p79, %p80
      %p82 = scmp.ne.s32.totalorder %s70, %s71
      %p83 = scmp.eq.s32.totalorder %s19, 1
      %p84 = por %p82, %p83
      %p86 = scmp.ne.s32.totalorder %s71, %s85
      %p87 = scmp.eq.s32.totalorder %s19, 0
      %p88 = por %p86, %p87
      %s90 = sadd.s32 %s89, 1
      %p93 = scmp.eq.s32.totalorder %s13, 1
      %p94 = scmp.ne.s32.totalorder %s89, %s91
      %p95 = scmp.eq.s32.totalorder %s13, 0
      %p96 = por %p94, %p95
      %p97 = scmp.ne.s32.totalorder %s89, %s91
      %p98 = scmp.eq.s32.totalorder %s18, 1
      %p99 = por %p97, %p98
      %p100 = scmp.ne.s32.totalorder %s91, %s92
      %p101 = scmp.eq.s32.totalorder %s18, 0
      %p102 = por %p100, %p101
      %p103 = scmp.ne.s32.totalorder %s91, %s92
      %p104 = scmp.eq.s32.totalorder %s19, 1
      %p105 = por %p103, %p104
      %p107 = scmp.ne.s32.totalorder %s92, %s106
      %p108 = scmp.eq.s32.totalorder %s19, 0
      %p109 = por %p107, %p108
      %s110 = ssub.s32 %s13, %s20
      %p111 = scmp.eq.s32.totalorder %s110, 0
      %s113 = sadd.s32 %s112, 1
      %s114 = scalar_select %p111, %s112, %s113
      %p117 = pneg %p111
      %p118 = scmp.eq.s32.totalorder %s13, 1
      %p119 = por %p117, %p118
      %p120 = scmp.ne.s32.totalorder %s112, %s115
      %p121 = scmp.eq.s32.totalorder %s13, 0
      %p122 = por %p120, %p121
      %p123 = scmp.ne.s32.totalorder %s112, %s115
      %p124 = scmp.eq.s32.totalorder %s18, 1
      %p125 = por %p123, %p124
      %p126 = scmp.ne.s32.totalorder %s115, %s116
      %p127 = scmp.eq.s32.totalorder %s18, 0
      %p128 = por %p126, %p127
      %p129 = scmp.ne.s32.totalorder %s115, %s116
      %p130 = scmp.eq.s32.totalorder %s19, 1
      %p131 = por %p129, %p130
      %p133 = scmp.ne.s32.totalorder %s116, %s132
      %p134 = scmp.eq.s32.totalorder %s19, 0
      %p135 = por %p133, %p134
      %p136 = scmp.le.s32.totalorder 1, %s13
      %p137 = scmp.lt.s32.totalorder %s13, 3
      %p138 = pnand %p136, %p137
      %p139 = pneg %p138
      // Predicated region
      $region9: #{resblock_forward.1} parent=5 // pred_check
        _
      $region10: #{resblock_forward.1} parent=5 // pred_check_branch
        %141 = sbr.rel (%p138) target = $region12
      $region11: #{resblock_forward.1} parent=5 // pred_region
        %s142 = ssub.s32 %s13, 1
        // Predicated region
        $region13: #{resblock_forward.1} parent=11 // pred_check
          %p143 = pneg %p60
        $region14: #{resblock_forward.1} parent=11 // pred_check_branch
          %145 = sbr.rel (%p143) target = $region16
        $region15: #{resblock_forward.1} parent=11 // pred_region
          _
        $region16: #{resblock_forward.1} parent=11 // pred_fallthru
          _
        // Predicated region
        $region17: #{resblock_forward.1} parent=11 // pred_check
          %p146 = pneg %p81
        $region18: #{resblock_forward.1} parent=11 // pred_check_branch
          %148 = sbr.rel (%p146) target = $region20
        $region19: #{resblock_forward.1} parent=11 // pred_region
          _
        $region20: #{resblock_forward.1} parent=11 // pred_fallthru
          _
        // Predicated region
        $region21: #{resblock_forward.1} parent=11 // pred_check
          %p149 = pneg %p102
        $region22: #{resblock_forward.1} parent=11 // pred_check_branch
          %151 = sbr.rel (%p149) target = $region24
        $region23: #{resblock_forward.1} parent=11 // pred_region
          _
        $region24: #{resblock_forward.1} parent=11 // pred_fallthru
          _
      $region12: #{resblock_forward.1} parent=5 // pred_fallthru
        _
      %p152 = scmp.lt.s32.totalorder %s13, 2
      // Predicated region
      $region25: #{resblock_forward.1} parent=5 // pred_check
        %p153 = pneg %p152
      $region26: #{resblock_forward.1} parent=5 // pred_check_branch
        %155 = sbr.rel (%p153) target = $region28
      $region27: #{resblock_forward.1} parent=5 // pred_region
        // Predicated region
        $region29: #{resblock_forward.1} parent=27 // pred_check
          %p156 = pneg %p33
        $region30: #{resblock_forward.1} parent=27 // pred_check_branch
          %158 = sbr.rel (%p156) target = $region32
        $region31: #{resblock_forward.1} parent=27 // pred_region
          %p159 = scmp.lt.s32.totalorder %s13, 1
          %s160 = scalar_select %p159, %s13, 1
          %s161 = smul.addr %s160, 4
          %s162 = scalar_lea.vmem %s0, %s161
        $region32: #{resblock_forward.1} parent=27 // pred_fallthru
          _
      $region28: #{resblock_forward.1} parent=5 // pred_fallthru
        _
      %p163 = scmp.le.s32.totalorder 1, %s13
      %p164 = scmp.lt.s32.totalorder %s13, 3
      %p165 = pnand %p163, %p164
      %p166 = pneg %p165
      // Predicated region
      $region33: #{resblock_forward.1} parent=5 // pred_check
        _
      $region34: #{resblock_forward.1} parent=5 // pred_check_branch
        %168 = sbr.rel (%p165) target = $region36
      $region35: #{resblock_forward.1} parent=5 // pred_region
        %s169 = ssub.s32 %s13, 1
        %p170 = scmp.lt.s32.totalorder %s18, 1
        %s171 = scalar_select %p170, %s18, 1
        %s172 = smul.addr %s171, 4
        %s173 = scalar_lea.vmem %s0, %s172
        %p174 = pneg %p39
        %p175 = pneg %p36
        %p176 = pneg %p60
        %p177 = pneg %p57
        %p178 = pneg %p81
        %p179 = pneg %p78
        %p180 = pneg %p102
        %p181 = pneg %p99
        %p182 = pneg %p128
        %p183 = pneg %p125
        %s184 = sand.u32 %s115, 1
        %s185 = scalar_lea.sflag [#allocation5], %s184
        %s186 = sand.u32 %s115, 1
        %s187 = smul.addr %s186, 4
        %s188 = scalar_lea.vmem [#allocation4], %s187
        %p189 = scmp.lt.s32.totalorder %s18, 1
        %s190 = scalar_select %p189, %s18, 1
        %s191 = smul.addr %s190, 4
        %s192 = scalar_lea.vmem %s0, %s191
        %v193 = vld [vmem:[%s3] sm:$0xff]
        %v194 = vld [vmem:[%s3 + $0x8] sm:$0x7f]
        %v195 = vld [vmem:[%s1] sm:$0xf]
        %v196 = vld [vmem:[%s2] sm:$0xf]
        %v197 = vld [vmem:[%s192] sm:$0xf]
        %199 = vrot.lane.b32.xlu0 %v197, 127
        %v200 = vpop.permute.xlu0 %199
        %vm201 = vcmask 121856
        %v202 = vsel %vm201, %v200, 0
        %vm204 = vcmask 1046528
        %v206 = vsel %vm204, %v194, 0
        %208 = vmatprep.subr.mxu0 0.0
        %v209 = vand.u32 %v193, 4294901760
        %210 = vmatpush1.msra.mxu0 %v209
        %211 = vmatprep.subr.mxu0 0.0
        %v212 = vand.u32 %v206, 4294901760
        %213 = vmatpush1.msra.mxu0 %v212
        %214 = vmatprep.subr.mxu0 0.0
        %215 = vmatpush1.msra.mxu0 0.0
        %216 = vmatprep.subr.mxu0 0.0
        %217 = vmatpush1.msra.mxu0 0.0
        %218 = vmatprep.subr.mxu0 0.0
        %219 = vmatpush1.msra.mxu0 0.0
        %220 = vmatprep.subr.mxu0 0.0
        %221 = vmatpush1.msra.mxu0 0.0
        %222 = vmatprep.subr.mxu0 0.0
        %223 = vmatpush1.msra.mxu0 0.0
        %224 = vmatprep.subr.mxu0 0.0
        %225 = vmatpush1.msra.mxu0 0.0
        %226 = vmatprep.subr.mxu0 0.0
        %227 = vmatpush1.msra.mxu0 0.0
        %228 = vmatprep.subr.mxu0 0.0
        %229 = vmatpush1.msra.mxu0 0.0
        %230 = vmatprep.subr.mxu0 0.0
        %231 = vmatpush1.msra.mxu0 0.0
        %232 = vmatprep.subr.mxu0 0.0
        %233 = vmatpush1.msra.mxu0 0.0
        %234 = vmatprep.subr.mxu0 0.0
        %235 = vmatpush1.msra.mxu0 0.0
        %236 = vmatprep.subr.mxu0 0.0
        %237 = vmatpush1.msra.mxu0 0.0
        %238 = vmatprep.subr.mxu0 0.0
        %239 = vmatpush1.msra.mxu0 0.0
        %240 = vmatprep.subr.mxu0 0.0
        %241 = vmatpush1.msra.mxu0 0.0
        %242 = vmatprep.subr.mxu0 0.0
        %243 = vmatpush1.msra.mxu0 0.0
        %244 = vmatprep.subr.mxu0 0.0
        %245 = vmatpush1.msra.mxu0 0.0
        %246 = vmatprep.subr.mxu0 0.0
        %247 = vmatpush1.msra.mxu0 0.0
        %248 = vmatprep.subr.mxu0 0.0
        %249 = vmatpush1.msra.mxu0 0.0
        %250 = vmatprep.subr.mxu0 0.0
        %251 = vmatpush1.msra.mxu0 0.0
        %252 = vmatprep.subr.mxu0 0.0
        %253 = vmatpush1.msra.mxu0 0.0
        %254 = vmatprep.subr.mxu0 0.0
        %255 = vmatpush1.msra.mxu0 0.0
        %256 = vmatprep.subr.mxu0 0.0
        %257 = vmatpush1.msra.mxu0 0.0
        %258 = vmatprep.subr.mxu0 0.0
        %259 = vmatpush1.msra.mxu0 0.0
        %260 = vmatprep.subr.mxu0 0.0
        %261 = vmatpush1.msra.mxu0 0.0
        %262 = vmatprep.subr.mxu0 0.0
        %263 = vmatpush1.msra.mxu0 0.0
        %264 = vmatprep.subr.mxu0 0.0
        %265 = vmatpush1.msra.mxu0 0.0
        %266 = vmatprep.subr.mxu0 0.0
        %267 = vmatpush1.msra.mxu0 0.0
        %268 = vmatprep.subr.mxu0 0.0
        %269 = vmatpush1.msra.mxu0 0.0
        %270 = vmatprep.subr.mxu0 0.0
        %271 = vmatpush1.msra.mxu0 0.0
        %272 = vmatprep.subr.mxu0 0.0
        %273 = vmatpush1.msra.mxu0 0.0
        %274 = vmatprep.mubr.f32.mxu0 0.0
        %v275 = vand.u32 %v202, 4294901760
        %v276 = vsub.f32 %v202, %v275
        %v277 = vand.u32 %v276, 4294901760
        %v278 = vsub.f32 %v276, %v277
        %v279 = vand.u32 %v278, 4294901760
        %280 = vmatmul.mubr.f32.gmra.mrb[0].mxu0 %v279
        %v281 = vpop.f32.mrb[0].mxu0
        %v282 = vadd.f32 0.0, %v281
        %v283 = vpop.f32.mrb[0].mxu0
        %284 = vdwg.mxu0
        %285 = vmatprep.subr.mxu0 0.0
        %v286 = vand.u32 %v193, 4294901760
        %v287 = vsub.f32 %v193, %v286
        %v288 = vand.u32 %v287, 4294901760
        %v289 = vsub.f32 %v287, %v288
        %v290 = vand.u32 %v289, 4294901760
        %291 = vmatpush1.msra.mxu0 %v290
        %292 = vmatprep.subr.mxu0 0.0
        %v293 = vand.u32 %v206, 4294901760
        %v294 = vsub.f32 %v206, %v293
        %v295 = vand.u32 %v294, 4294901760
        %v296 = vsub.f32 %v294, %v295
        %v297 = vand.u32 %v296, 4294901760
        %298 = vmatpush1.msra.mxu0 %v297
        %299 = vmatprep.subr.mxu0 0.0
        %300 = vmatpush1.msra.mxu0 0.0
        %301 = vmatprep.subr.mxu0 0.0
        %302 = vmatpush1.msra.mxu0 0.0
        %303 = vmatprep.subr.mxu0 0.0
        %304 = vmatpush1.msra.mxu0 0.0
        %305 = vmatprep.subr.mxu0 0.0
        %306 = vmatpush1.msra.mxu0 0.0
        %307 = vmatprep.subr.mxu0 0.0
        %308 = vmatpush1.msra.mxu0 0.0
        %309 = vmatprep.subr.mxu0 0.0
        %310 = vmatpush1.msra.mxu0 0.0
        %311 = vmatprep.subr.mxu0 0.0
        %312 = vmatpush1.msra.mxu0 0.0
        %313 = vmatprep.subr.mxu0 0.0
        %314 = vmatpush1.msra.mxu0 0.0
        %315 = vmatprep.subr.mxu0 0.0
        %316 = vmatpush1.msra.mxu0 0.0
        %317 = vmatprep.subr.mxu0 0.0
        %318 = vmatpush1.msra.mxu0 0.0
        %319 = vmatprep.subr.mxu0 0.0
        %320 = vmatpush1.msra.mxu0 0.0
        %321 = vmatprep.subr.mxu0 0.0
        %322 = vmatpush1.msra.mxu0 0.0
        %323 = vmatprep.subr.mxu0 0.0
        %324 = vmatpush1.msra.mxu0 0.0
        %325 = vmatprep.subr.mxu0 0.0
        %326 = vmatpush1.msra.mxu0 0.0
        %327 = vmatprep.subr.mxu0 0.0
        %328 = vmatpush1.msra.mxu0 0.0
        %329 = vmatprep.subr.mxu0 0.0
        %330 = vmatpush1.msra.mxu0 0.0
        %331 = vmatprep.subr.mxu0 0.0
        %332 = vmatpush1.msra.mxu0 0.0
        %333 = vmatprep.subr.mxu0 0.0
        %334 = vmatpush1.msra.mxu0 0.0
        %335 = vmatprep.subr.mxu0 0.0
        %336 = vmatpush1.msra.mxu0 0.0
        %337 = vmatprep.subr.mxu0 0.0
        %338 = vmatpush1.msra.mxu0 0.0
        %339 = vmatprep.subr.mxu0 0.0
        %340 = vmatpush1.msra.mxu0 0.0
        %341 = vmatprep.subr.mxu0 0.0
        %342 = vmatpush1.msra.mxu0 0.0
        %343 = vmatprep.subr.mxu0 0.0
        %344 = vmatpush1.msra.mxu0 0.0
        %345 = vmatprep.subr.mxu0 0.0
        %346 = vmatpush1.msra.mxu0 0.0
        %347 = vmatprep.subr.mxu0 0.0
        %348 = vmatpush1.msra.mxu0 0.0
        %349 = vmatprep.subr.mxu0 0.0
        %350 = vmatpush1.msra.mxu0 0.0
        %351 = vmatprep.subr.mxu0 0.0
        %352 = vmatpush1.msra.mxu0 0.0
        %353 = vmatprep.subr.mxu0 0.0
        %354 = vmatpush1.msra.mxu0 0.0
        %355 = vmatprep.subr.mxu0 0.0
        %356 = vmatpush1.msra.mxu0 0.0
        %357 = vmatprep.subr.mxu0 0.0
        %358 = vmatpush1.msra.mxu0 0.0
        %359 = vmatprep.mubr.f32.mxu0 0.0
        %v360 = vand.u32 %v202, 4294901760
        %361 = vmatmul.mubr.f32.gmra.mrb[0].mxu0 %v360
        %v362 = vpop.f32.mrb[0].mxu0
        %v363 = vadd.f32 %v282, %v362
        %v364 = vpop.f32.mrb[0].mxu0
        %365 = vdwg.mxu0
        %366 = vmatprep.subr.mxu0 0.0
        %v367 = vand.u32 %v193, 4294901760
        %v368 = vsub.f32 %v193, %v367
        %369 = vmatpush1.msra.mxu0 %v368
        %370 = vmatprep.subr.mxu0 0.0
        %v371 = vand.u32 %v206, 4294901760
        %v372 = vsub.f32 %v206, %v371
        %373 = vmatpush1.msra.mxu0 %v372
        %374 = vmatprep.subr.mxu0 0.0
        %375 = vmatpush1.msra.mxu0 0.0
        %376 = vmatprep.subr.mxu0 0.0
        %377 = vmatpush1.msra.mxu0 0.0
        %378 = vmatprep.subr.mxu0 0.0
        %379 = vmatpush1.msra.mxu0 0.0
        %380 = vmatprep.subr.mxu0 0.0
        %381 = vmatpush1.msra.mxu0 0.0
        %382 = vmatprep.subr.mxu0 0.0
        %383 = vmatpush1.msra.mxu0 0.0
        %384 = vmatprep.subr.mxu0 0.0
        %385 = vmatpush1.msra.mxu0 0.0
        %386 = vmatprep.subr.mxu0 0.0
        %387 = vmatpush1.msra.mxu0 0.0
        %388 = vmatprep.subr.mxu0 0.0
        %389 = vmatpush1.msra.mxu0 0.0
        %390 = vmatprep.subr.mxu0 0.0
        %391 = vmatpush1.msra.mxu0 0.0
        %392 = vmatprep.subr.mxu0 0.0
        %393 = vmatpush1.msra.mxu0 0.0
        %394 = vmatprep.subr.mxu0 0.0
        %395 = vmatpush1.msra.mxu0 0.0
        %396 = vmatprep.subr.mxu0 0.0
        %397 = vmatpush1.msra.mxu0 0.0
        %398 = vmatprep.subr.mxu0 0.0
        %399 = vmatpush1.msra.mxu0 0.0
        %400 = vmatprep.subr.mxu0 0.0
        %401 = vmatpush1.msra.mxu0 0.0
        %402 = vmatprep.subr.mxu0 0.0
        %403 = vmatpush1.msra.mxu0 0.0
        %404 = vmatprep.subr.mxu0 0.0
        %405 = vmatpush1.msra.mxu0 0.0
        %406 = vmatprep.subr.mxu0 0.0
        %407 = vmatpush1.msra.mxu0 0.0
        %408 = vmatprep.subr.mxu0 0.0
        %409 = vmatpush1.msra.mxu0 0.0
        %410 = vmatprep.subr.mxu0 0.0
        %411 = vmatpush1.msra.mxu0 0.0
        %412 = vmatprep.subr.mxu0 0.0
        %413 = vmatpush1.msra.mxu0 0.0
        %414 = vmatprep.subr.mxu0 0.0
        %415 = vmatpush1.msra.mxu0 0.0
        %416 = vmatprep.subr.mxu0 0.0
        %417 = vmatpush1.msra.mxu0 0.0
        %418 = vmatprep.subr.mxu0 0.0
        %419 = vmatpush1.msra.mxu0 0.0
        %420 = vmatprep.subr.mxu0 0.0
        %421 = vmatpush1.msra.mxu0 0.0
        %422 = vmatprep.subr.mxu0 0.0
        %423 = vmatpush1.msra.mxu0 0.0
        %424 = vmatprep.subr.mxu0 0.0
        %425 = vmatpush1.msra.mxu0 0.0
        %426 = vmatprep.subr.mxu0 0.0
        %427 = vmatpush1.msra.mxu0 0.0
        %428 = vmatprep.subr.mxu0 0.0
        %429 = vmatpush1.msra.mxu0 0.0
        %430 = vmatprep.subr.mxu0 0.0
        %431 = vmatpush1.msra.mxu0 0.0
        %432 = vmatprep.subr.mxu0 0.0
        %433 = vmatpush1.msra.mxu0 0.0
        %434 = vmatprep.mubr.f32.mxu0 0.0
        %v435 = vand.u32 %v202, 4294901760
        %v436 = vsub.f32 %v202, %v435
        %437 = vmatmul.mubr.f32.gmra.mrb[0].mxu0 %v436
        %v438 = vpop.f32.mrb[0].mxu0
        %v439 = vadd.f32 %v363, %v438
        %v440 = vpop.f32.mrb[0].mxu0
        %441 = vdwg.mxu0
        %442 = vmatprep.subr.mxu0 0.0
        %v443 = vand.u32 %v193, 4294901760
        %444 = vmatpush1.msra.mxu0 %v443
        %445 = vmatprep.subr.mxu0 0.0
        %v446 = vand.u32 %v206, 4294901760
        %447 = vmatpush1.msra.mxu0 %v446
        %448 = vmatprep.subr.mxu0 0.0
        %449 = vmatpush1.msra.mxu0 0.0
        %450 = vmatprep.subr.mxu0 0.0
        %451 = vmatpush1.msra.mxu0 0.0
        %452 = vmatprep.subr.mxu0 0.0
        %453 = vmatpush1.msra.mxu0 0.0
        %454 = vmatprep.subr.mxu0 0.0
        %455 = vmatpush1.msra.mxu0 0.0
        %456 = vmatprep.subr.mxu0 0.0
        %457 = vmatpush1.msra.mxu0 0.0
        %458 = vmatprep.subr.mxu0 0.0
        %459 = vmatpush1.msra.mxu0 0.0
        %460 = vmatprep.subr.mxu0 0.0
        %461 = vmatpush1.msra.mxu0 0.0
        %462 = vmatprep.subr.mxu0 0.0
        %463 = vmatpush1.msra.mxu0 0.0
        %464 = vmatprep.subr.mxu0 0.0
        %465 = vmatpush1.msra.mxu0 0.0
        %466 = vmatprep.subr.mxu0 0.0
        %467 = vmatpush1.msra.mxu0 0.0
        %468 = vmatprep.subr.mxu0 0.0
        %469 = vmatpush1.msra.mxu0 0.0
        %470 = vmatprep.subr.mxu0 0.0
        %471 = vmatpush1.msra.mxu0 0.0
        %472 = vmatprep.subr.mxu0 0.0
        %473 = vmatpush1.msra.mxu0 0.0
        %474 = vmatprep.subr.mxu0 0.0
        %475 = vmatpush1.msra.mxu0 0.0
        %476 = vmatprep.subr.mxu0 0.0
        %477 = vmatpush1.msra.mxu0 0.0
        %478 = vmatprep.subr.mxu0 0.0
        %479 = vmatpush1.msra.mxu0 0.0
        %480 = vmatprep.subr.mxu0 0.0
        %481 = vmatpush1.msra.mxu0 0.0
        %482 = vmatprep.subr.mxu0 0.0
        %483 = vmatpush1.msra.mxu0 0.0
        %484 = vmatprep.subr.mxu0 0.0
        %485 = vmatpush1.msra.mxu0 0.0
        %486 = vmatprep.subr.mxu0 0.0
        %487 = vmatpush1.msra.mxu0 0.0
        %488 = vmatprep.subr.mxu0 0.0
        %489 = vmatpush1.msra.mxu0 0.0
        %490 = vmatprep.subr.mxu0 0.0
        %491 = vmatpush1.msra.mxu0 0.0
        %492 = vmatprep.subr.mxu0 0.0
        %493 = vmatpush1.msra.mxu0 0.0
        %494 = vmatprep.subr.mxu0 0.0
        %495 = vmatpush1.msra.mxu0 0.0
        %496 = vmatprep.subr.mxu0 0.0
        %497 = vmatpush1.msra.mxu0 0.0
        %498 = vmatprep.subr.mxu0 0.0
        %499 = vmatpush1.msra.mxu0 0.0
        %500 = vmatprep.subr.mxu0 0.0
        %501 = vmatpush1.msra.mxu0 0.0
        %502 = vmatprep.subr.mxu0 0.0
        %503 = vmatpush1.msra.mxu0 0.0
        %504 = vmatprep.subr.mxu0 0.0
        %505 = vmatpush1.msra.mxu0 0.0
        %506 = vmatprep.subr.mxu0 0.0
        %507 = vmatpush1.msra.mxu0 0.0
        %508 = vmatprep.mubr.f32.mxu0 0.0
        %v509 = vand.u32 %v202, 4294901760
        %v510 = vsub.f32 %v202, %v509
        %v511 = vand.u32 %v510, 4294901760
        %512 = vmatmul.mubr.f32.gmra.mrb[0].mxu0 %v511
        %v513 = vpop.f32.mrb[0].mxu0
        %v514 = vadd.f32 %v439, %v513
        %v515 = vpop.f32.mrb[0].mxu0
        %516 = vdwg.mxu0
        %517 = vmatprep.subr.mxu0 0.0
        %v518 = vand.u32 %v193, 4294901760
        %v519 = vsub.f32 %v193, %v518
        %v520 = vand.u32 %v519, 4294901760
        %521 = vmatpush1.msra.mxu0 %v520
        %522 = vmatprep.subr.mxu0 0.0
        %v523 = vand.u32 %v206, 4294901760
        %v524 = vsub.f32 %v206, %v523
        %v525 = vand.u32 %v524, 4294901760
        %526 = vmatpush1.msra.mxu0 %v525
        %527 = vmatprep.subr.mxu0 0.0
        %528 = vmatpush1.msra.mxu0 0.0
        %529 = vmatprep.subr.mxu0 0.0
        %530 = vmatpush1.msra.mxu0 0.0
        %531 = vmatprep.subr.mxu0 0.0
        %532 = vmatpush1.msra.mxu0 0.0
        %533 = vmatprep.subr.mxu0 0.0
        %534 = vmatpush1.msra.mxu0 0.0
        %535 = vmatprep.subr.mxu0 0.0
        %536 = vmatpush1.msra.mxu0 0.0
        %537 = vmatprep.subr.mxu0 0.0
        %538 = vmatpush1.msra.mxu0 0.0
        %539 = vmatprep.subr.mxu0 0.0
        %540 = vmatpush1.msra.mxu0 0.0
        %541 = vmatprep.subr.mxu0 0.0
        %542 = vmatpush1.msra.mxu0 0.0
        %543 = vmatprep.subr.mxu0 0.0
        %544 = vmatpush1.msra.mxu0 0.0
        %545 = vmatprep.subr.mxu0 0.0
        %546 = vmatpush1.msra.mxu0 0.0
        %547 = vmatprep.subr.mxu0 0.0
        %548 = vmatpush1.msra.mxu0 0.0
        %549 = vmatprep.subr.mxu0 0.0
        %550 = vmatpush1.msra.mxu0 0.0
        %551 = vmatprep.subr.mxu0 0.0
        %552 = vmatpush1.msra.mxu0 0.0
        %553 = vmatprep.subr.mxu0 0.0
        %554 = vmatpush1.msra.mxu0 0.0
        %555 = vmatprep.subr.mxu0 0.0
        %556 = vmatpush1.msra.mxu0 0.0
        %557 = vmatprep.subr.mxu0 0.0
        %558 = vmatpush1.msra.mxu0 0.0
        %559 = vmatprep.subr.mxu0 0.0
        %560 = vmatpush1.msra.mxu0 0.0
        %561 = vmatprep.subr.mxu0 0.0
        %562 = vmatpush1.msra.mxu0 0.0
        %563 = vmatprep.subr.mxu0 0.0
        %564 = vmatpush1.msra.mxu0 0.0
        %565 = vmatprep.subr.mxu0 0.0
        %566 = vmatpush1.msra.mxu0 0.0
        %567 = vmatprep.subr.mxu0 0.0
        %568 = vmatpush1.msra.mxu0 0.0
        %569 = vmatprep.subr.mxu0 0.0
        %570 = vmatpush1.msra.mxu0 0.0
        %571 = vmatprep.subr.mxu0 0.0
        %572 = vmatpush1.msra.mxu0 0.0
        %573 = vmatprep.subr.mxu0 0.0
        %574 = vmatpush1.msra.mxu0 0.0
        %575 = vmatprep.subr.mxu0 0.0
        %576 = vmatpush1.msra.mxu0 0.0
        %577 = vmatprep.subr.mxu0 0.0
        %578 = vmatpush1.msra.mxu0 0.0
        %579 = vmatprep.subr.mxu0 0.0
        %580 = vmatpush1.msra.mxu0 0.0
        %581 = vmatprep.subr.mxu0 0.0
        %582 = vmatpush1.msra.mxu0 0.0
        %583 = vmatprep.subr.mxu0 0.0
        %584 = vmatpush1.msra.mxu0 0.0
        %585 = vmatprep.subr.mxu0 0.0
        %586 = vmatpush1.msra.mxu0 0.0
        %587 = vmatprep.mubr.f32.mxu0 0.0
        %v588 = vand.u32 %v202, 4294901760
        %589 = vmatmul.mubr.f32.gmra.mrb[0].mxu0 %v588
        %v590 = vpop.f32.mrb[0].mxu0
        %v591 = vadd.f32 %v514, %v590
        %v592 = vpop.f32.mrb[0].mxu0
        %593 = vdwg.mxu0
        %594 = vmatprep.subr.mxu0 0.0
        %v595 = vand.u32 %v193, 4294901760
        %596 = vmatpush1.msra.mxu0 %v595
        %597 = vmatprep.subr.mxu0 0.0
        %v598 = vand.u32 %v206, 4294901760
        %599 = vmatpush1.msra.mxu0 %v598
        %600 = vmatprep.subr.mxu0 0.0
        %601 = vmatpush1.msra.mxu0 0.0
        %602 = vmatprep.subr.mxu0 0.0
        %603 = vmatpush1.msra.mxu0 0.0
        %604 = vmatprep.subr.mxu0 0.0
        %605 = vmatpush1.msra.mxu0 0.0
        %606 = vmatprep.subr.mxu0 0.0
        %607 = vmatpush1.msra.mxu0 0.0
        %608 = vmatprep.subr.mxu0 0.0
        %609 = vmatpush1.msra.mxu0 0.0
        %610 = vmatprep.subr.mxu0 0.0
        %611 = vmatpush1.msra.mxu0 0.0
        %612 = vmatprep.subr.mxu0 0.0
        %613 = vmatpush1.msra.mxu0 0.0
        %614 = vmatprep.subr.mxu0 0.0
        %615 = vmatpush1.msra.mxu0 0.0
        %616 = vmatprep.subr.mxu0 0.0
        %617 = vmatpush1.msra.mxu0 0.0
        %618 = vmatprep.subr.mxu0 0.0
        %619 = vmatpush1.msra.mxu0 0.0
        %620 = vmatprep.subr.mxu0 0.0
        %621 = vmatpush1.msra.mxu0 0.0
        %622 = vmatprep.subr.mxu0 0.0
        %623 = vmatpush1.msra.mxu0 0.0
        %624 = vmatprep.subr.mxu0 0.0
        %625 = vmatpush1.msra.mxu0 0.0
        %626 = vmatprep.subr.mxu0 0.0
        %627 = vmatpush1.msra.mxu0 0.0
        %628 = vmatprep.subr.mxu0 0.0
        %629 = vmatpush1.msra.mxu0 0.0
        %630 = vmatprep.subr.mxu0 0.0
        %631 = vmatpush1.msra.mxu0 0.0
        %632 = vmatprep.subr.mxu0 0.0
        %633 = vmatpush1.msra.mxu0 0.0
        %634 = vmatprep.subr.mxu0 0.0
        %635 = vmatpush1.msra.mxu0 0.0
        %636 = vmatprep.subr.mxu0 0.0
        %637 = vmatpush1.msra.mxu0 0.0
        %638 = vmatprep.subr.mxu0 0.0
        %639 = vmatpush1.msra.mxu0 0.0
        %640 = vmatprep.subr.mxu0 0.0
        %641 = vmatpush1.msra.mxu0 0.0
        %642 = vmatprep.subr.mxu0 0.0
        %643 = vmatpush1.msra.mxu0 0.0
        %644 = vmatprep.subr.mxu0 0.0
        %645 = vmatpush1.msra.mxu0 0.0
        %646 = vmatprep.subr.mxu0 0.0
        %647 = vmatpush1.msra.mxu0 0.0
        %648 = vmatprep.subr.mxu0 0.0
        %649 = vmatpush1.msra.mxu0 0.0
        %650 = vmatprep.subr.mxu0 0.0
        %651 = vmatpush1.msra.mxu0 0.0
        %652 = vmatprep.subr.mxu0 0.0
        %653 = vmatpush1.msra.mxu0 0.0
        %654 = vmatprep.subr.mxu0 0.0
        %655 = vmatpush1.msra.mxu0 0.0
        %656 = vmatprep.subr.mxu0 0.0
        %657 = vmatpush1.msra.mxu0 0.0
        %658 = vmatprep.subr.mxu0 0.0
        %659 = vmatpush1.msra.mxu0 0.0
        %660 = vmatprep.mubr.f32.mxu0 0.0
        %v661 = vand.u32 %v202, 4294901760
        %662 = vmatmul.mubr.f32.gmra.mrb[0].mxu0 %v661
        %v663 = vpop.f32.mrb[0].mxu0
        %v664 = vadd.f32 %v591, %v663
        %v665 = vpop.f32.mrb[0].mxu0
        %666 = vdwg.mxu0
        %667 = vrot.lane.b32.xlu0 %v197, 16
        %v668 = vpop.permute.xlu0 %667
        %v669 = vsel %vm201, %v668, 0
        %671 = vmatprep.subr.mxu0 0.0
        %v672 = vand.u32 %v193, 4294901760
        %673 = vmatpush1.msra.mxu0 %v672
        %674 = vmatprep.subr.mxu0 0.0
        %v675 = vand.u32 %v206, 4294901760
        %676 = vmatpush1.msra.mxu0 %v675
        %677 = vmatprep.subr.mxu0 0.0
        %678 = vmatpush1.msra.mxu0 0.0
        %679 = vmatprep.subr.mxu0 0.0
        %680 = vmatpush1.msra.mxu0 0.0
        %681 = vmatprep.subr.mxu0 0.0
        %682 = vmatpush1.msra.mxu0 0.0
        %683 = vmatprep.subr.mxu0 0.0
        %684 = vmatpush1.msra.mxu0 0.0
        %685 = vmatprep.subr.mxu0 0.0
        %686 = vmatpush1.msra.mxu0 0.0
        %687 = vmatprep.subr.mxu0 0.0
        %688 = vmatpush1.msra.mxu0 0.0
        %689 = vmatprep.subr.mxu0 0.0
        %690 = vmatpush1.msra.mxu0 0.0
        %691 = vmatprep.subr.mxu0 0.0
        %692 = vmatpush1.msra.mxu0 0.0
        %693 = vmatprep.subr.mxu0 0.0
        %694 = vmatpush1.msra.mxu0 0.0
        %695 = vmatprep.subr.mxu0 0.0
        %696 = vmatpush1.msra.mxu0 0.0
        %697 = vmatprep.subr.mxu0 0.0
        %698 = vmatpush1.msra.mxu0 0.0
        %699 = vmatprep.subr.mxu0 0.0
        %700 = vmatpush1.msra.mxu0 0.0
        %701 = vmatprep.subr.mxu0 0.0
        %702 = vmatpush1.msra.mxu0 0.0
        %703 = vmatprep.subr.mxu0 0.0
        %704 = vmatpush1.msra.mxu0 0.0
        %705 = vmatprep.subr.mxu0 0.0
        %706 = vmatpush1.msra.mxu0 0.0
        %707 = vmatprep.subr.mxu0 0.0
        %708 = vmatpush1.msra.mxu0 0.0
        %709 = vmatprep.subr.mxu0 0.0
        %710 = vmatpush1.msra.mxu0 0.0
        %711 = vmatprep.subr.mxu0 0.0
        %712 = vmatpush1.msra.mxu0 0.0
        %713 = vmatprep.subr.mxu0 0.0
        %714 = vmatpush1.msra.mxu0 0.0
        %715 = vmatprep.subr.mxu0 0.0
        %716 = vmatpush1.msra.mxu0 0.0
        %717 = vmatprep.subr.mxu0 0.0
        %718 = vmatpush1.msra.mxu0 0.0
        %719 = vmatprep.subr.mxu0 0.0
        %720 = vmatpush1.msra.mxu0 0.0
        %721 = vmatprep.subr.mxu0 0.0
        %722 = vmatpush1.msra.mxu0 0.0
        %723 = vmatprep.subr.mxu0 0.0
        %724 = vmatpush1.msra.mxu0 0.0
        %725 = vmatprep.subr.mxu0 0.0
        %726 = vmatpush1.msra.mxu0 0.0
        %727 = vmatprep.subr.mxu0 0.0
        %728 = vmatpush1.msra.mxu0 0.0
        %729 = vmatprep.subr.mxu0 0.0
        %730 = vmatpush1.msra.mxu0 0.0
        %731 = vmatprep.subr.mxu0 0.0
        %732 = vmatpush1.msra.mxu0 0.0
        %733 = vmatprep.subr.mxu0 0.0
        %734 = vmatpush1.msra.mxu0 0.0
        %735 = vmatprep.subr.mxu0 0.0
        %736 = vmatpush1.msra.mxu0 0.0
        %737 = vmatprep.mubr.f32.mxu0 0.0
        %v738 = vand.u32 %v669, 4294901760
        %v739 = vsub.f32 %v669, %v738
        %v740 = vand.u32 %v739, 4294901760
        %v741 = vsub.f32 %v739, %v740
        %v742 = vand.u32 %v741, 4294901760
        %743 = vmatmul.mubr.f32.gmra.mrb[0].mxu0 %v742
        %v744 = vpop.f32.mrb[0].mxu0
        %v745 = vadd.f32 0.0, %v744
        %v746 = vpop.f32.mrb[0].mxu0
        %747 = vdwg.mxu0
        %748 = vmatprep.subr.mxu0 0.0
        %v749 = vand.u32 %v193, 4294901760
        %v750 = vsub.f32 %v193, %v749
        %v751 = vand.u32 %v750, 4294901760
        %v752 = vsub.f32 %v750, %v751
        %v753 = vand.u32 %v752, 4294901760
        %754 = vmatpush1.msra.mxu0 %v753
        %755 = vmatprep.subr.mxu0 0.0
        %v756 = vand.u32 %v206, 4294901760
        %v757 = vsub.f32 %v206, %v756
        %v758 = vand.u32 %v757, 4294901760
        %v759 = vsub.f32 %v757, %v758
        %v760 = vand.u32 %v759, 4294901760
        %761 = vmatpush1.msra.mxu0 %v760
        %762 = vmatprep.subr.mxu0 0.0
        %763 = vmatpush1.msra.mxu0 0.0
        %764 = vmatprep.subr.mxu0 0.0
        %765 = vmatpush1.msra.mxu0 0.0
        %766 = vmatprep.subr.mxu0 0.0
        %767 = vmatpush1.msra.mxu0 0.0
        %768 = vmatprep.subr.mxu0 0.0
        %769 = vmatpush1.msra.mxu0 0.0
        %770 = vmatprep.subr.mxu0 0.0
        %771 = vmatpush1.msra.mxu0 0.0
        %772 = vmatprep.subr.mxu0 0.0
        %773 = vmatpush1.msra.mxu0 0.0
        %774 = vmatprep.subr.mxu0 0.0
        %775 = vmatpush1.msra.mxu0 0.0
        %776 = vmatprep.subr.mxu0 0.0
        %777 = vmatpush1.msra.mxu0 0.0
        %778 = vmatprep.subr.mxu0 0.0
        %779 = vmatpush1.msra.mxu0 0.0
        %780 = vmatprep.subr.mxu0 0.0
        %781 = vmatpush1.msra.mxu0 0.0
        %782 = vmatprep.subr.mxu0 0.0
        %783 = vmatpush1.msra.mxu0 0.0
        %784 = vmatprep.subr.mxu0 0.0
        %785 = vmatpush1.msra.mxu0 0.0
        %786 = vmatprep.subr.mxu0 0.0
        %787 = vmatpush1.msra.mxu0 0.0
        %788 = vmatprep.subr.mxu0 0.0
        %789 = vmatpush1.msra.mxu0 0.0
        %790 = vmatprep.subr.mxu0 0.0
        %791 = vmatpush1.msra.mxu0 0.0
        %792 = vmatprep.subr.mxu0 0.0
        %793 = vmatpush1.msra.mxu0 0.0
        %794 = vmatprep.subr.mxu0 0.0
        %795 = vmatpush1.msra.mxu0 0.0
        %796 = vmatprep.subr.mxu0 0.0
        %797 = vmatpush1.msra.mxu0 0.0
        %798 = vmatprep.subr.mxu0 0.0
        %799 = vmatpush1.msra.mxu0 0.0
        %800 = vmatprep.subr.mxu0 0.0
        %801 = vmatpush1.msra.mxu0 0.0
        %802 = vmatprep.subr.mxu0 0.0
        %803 = vmatpush1.msra.mxu0 0.0
        %804 = vmatprep.subr.mxu0 0.0
        %805 = vmatpush1.msra.mxu0 0.0
        %806 = vmatprep.subr.mxu0 0.0
        %807 = vmatpush1.msra.mxu0 0.0
        %808 = vmatprep.subr.mxu0 0.0
        %809 = vmatpush1.msra.mxu0 0.0
        %810 = vmatprep.subr.mxu0 0.0
        %811 = vmatpush1.msra.mxu0 0.0
        %812 = vmatprep.subr.mxu0 0.0
        %813 = vmatpush1.msra.mxu0 0.0
        %814 = vmatprep.subr.mxu0 0.0
        %815 = vmatpush1.msra.mxu0 0.0
        %816 = vmatprep.subr.mxu0 0.0
        %817 = vmatpush1.msra.mxu0 0.0
        %818 = vmatprep.subr.mxu0 0.0
        %819 = vmatpush1.msra.mxu0 0.0
        %820 = vmatprep.subr.mxu0 0.0
        %821 = vmatpush1.msra.mxu0 0.0
        %822 = vmatprep.mubr.f32.mxu0 0.0
        %v823 = vand.u32 %v669, 4294901760
        %824 = vmatmul.mubr.f32.gmra.mrb[0].mxu0 %v823
        %v825 = vpop.f32.mrb[0].mxu0
        %v826 = vadd.f32 %v745, %v825
        %v827 = vpop.f32.mrb[0].mxu0
        %828 = vdwg.mxu0
        %829 = vmatprep.subr.mxu0 0.0
        %v830 = vand.u32 %v193, 4294901760
        %v831 = vsub.f32 %v193, %v830
        %832 = vmatpush1.msra.mxu0 %v831
        %833 = vmatprep.subr.mxu0 0.0
        %v834 = vand.u32 %v206, 4294901760
        %v835 = vsub.f32 %v206, %v834
        %836 = vmatpush1.msra.mxu0 %v835
        %837 = vmatprep.subr.mxu0 0.0
        %838 = vmatpush1.msra.mxu0 0.0
        %839 = vmatprep.subr.mxu0 0.0
        %840 = vmatpush1.msra.mxu0 0.0
        %841 = vmatprep.subr.mxu0 0.0
        %842 = vmatpush1.msra.mxu0 0.0
        %843 = vmatprep.subr.mxu0 0.0
        %844 = vmatpush1.msra.mxu0 0.0
        %845 = vmatprep.subr.mxu0 0.0
        %846 = vmatpush1.msra.mxu0 0.0
        %847 = vmatprep.subr.mxu0 0.0
        %848 = vmatpush1.msra.mxu0 0.0
        %849 = vmatprep.subr.mxu0 0.0
        %850 = vmatpush1.msra.mxu0 0.0
        %851 = vmatprep.subr.mxu0 0.0
        %852 = vmatpush1.msra.mxu0 0.0
        %853 = vmatprep.subr.mxu0 0.0
        %854 = vmatpush1.msra.mxu0 0.0
        %855 = vmatprep.subr.mxu0 0.0
        %856 = vmatpush1.msra.mxu0 0.0
        %857 = vmatprep.subr.mxu0 0.0
        %858 = vmatpush1.msra.mxu0 0.0
        %859 = vmatprep.subr.mxu0 0.0
        %860 = vmatpush1.msra.mxu0 0.0
        %861 = vmatprep.subr.mxu0 0.0
        %862 = vmatpush1.msra.mxu0 0.0
        %863 = vmatprep.subr.mxu0 0.0
        %864 = vmatpush1.msra.mxu0 0.0
        %865 = vmatprep.subr.mxu0 0.0
        %866 = vmatpush1.msra.mxu0 0.0
        %867 = vmatprep.subr.mxu0 0.0
        %868 = vmatpush1.msra.mxu0 0.0
        %869 = vmatprep.subr.mxu0 0.0
        %870 = vmatpush1.msra.mxu0 0.0
        %871 = vmatprep.subr.mxu0 0.0
        %872 = vmatpush1.msra.mxu0 0.0
        %873 = vmatprep.subr.mxu0 0.0
        %874 = vmatpush1.msra.mxu0 0.0
        %875 = vmatprep.subr.mxu0 0.0
        %876 = vmatpush1.msra.mxu0 0.0
        %877 = vmatprep.subr.mxu0 0.0
        %878 = vmatpush1.msra.mxu0 0.0
        %879 = vmatprep.subr.mxu0 0.0
        %880 = vmatpush1.msra.mxu0 0.0
        %881 = vmatprep.subr.mxu0 0.0
        %882 = vmatpush1.msra.mxu0 0.0
        %883 = vmatprep.subr.mxu0 0.0
        %884 = vmatpush1.msra.mxu0 0.0
        %885 = vmatprep.subr.mxu0 0.0
        %886 = vmatpush1.msra.mxu0 0.0
        %887 = vmatprep.subr.mxu0 0.0
        %888 = vmatpush1.msra.mxu0 0.0
        %889 = vmatprep.subr.mxu0 0.0
        %890 = vmatpush1.msra.mxu0 0.0
        %891 = vmatprep.subr.mxu0 0.0
        %892 = vmatpush1.msra.mxu0 0.0
        %893 = vmatprep.subr.mxu0 0.0
        %894 = vmatpush1.msra.mxu0 0.0
        %895 = vmatprep.subr.mxu0 0.0
        %896 = vmatpush1.msra.mxu0 0.0
        %897 = vmatprep.mubr.f32.mxu0 0.0
        %v898 = vand.u32 %v669, 4294901760
        %v899 = vsub.f32 %v669, %v898
        %900 = vmatmul.mubr.f32.gmra.mrb[0].mxu0 %v899
        %v901 = vpop.f32.mrb[0].mxu0
        %v902 = vadd.f32 %v826, %v901
        %v903 = vpop.f32.mrb[0].mxu0
        %904 = vdwg.mxu0
        %905 = vmatprep.subr.mxu0 0.0
        %v906 = vand.u32 %v193, 4294901760
        %907 = vmatpush1.msra.mxu0 %v906
        %908 = vmatprep.subr.mxu0 0.0
        %v909 = vand.u32 %v206, 4294901760
        %910 = vmatpush1.msra.mxu0 %v909
        %911 = vmatprep.subr.mxu0 0.0
        %912 = vmatpush1.msra.mxu0 0.0
        %913 = vmatprep.subr.mxu0 0.0
        %914 = vmatpush1.msra.mxu0 0.0
        %915 = vmatprep.subr.mxu0 0.0
        %916 = vmatpush1.msra.mxu0 0.0
        %917 = vmatprep.subr.mxu0 0.0
        %918 = vmatpush1.msra.mxu0 0.0
        %919 = vmatprep.subr.mxu0 0.0
        %920 = vmatpush1.msra.mxu0 0.0
        %921 = vmatprep.subr.mxu0 0.0
        %922 = vmatpush1.msra.mxu0 0.0
        %923 = vmatprep.subr.mxu0 0.0
        %924 = vmatpush1.msra.mxu0 0.0
        %925 = vmatprep.subr.mxu0 0.0
        %926 = vmatpush1.msra.mxu0 0.0
        %927 = vmatprep.subr.mxu0 0.0
        %928 = vmatpush1.msra.mxu0 0.0
        %929 = vmatprep.subr.mxu0 0.0
        %930 = vmatpush1.msra.mxu0 0.0
        %931 = vmatprep.subr.mxu0 0.0
        %932 = vmatpush1.msra.mxu0 0.0
        %933 = vmatprep.subr.mxu0 0.0
        %934 = vmatpush1.msra.mxu0 0.0
        %935 = vmatprep.subr.mxu0 0.0
        %936 = vmatpush1.msra.mxu0 0.0
        %937 = vmatprep.subr.mxu0 0.0
        %938 = vmatpush1.msra.mxu0 0.0
        %939 = vmatprep.subr.mxu0 0.0
        %940 = vmatpush1.msra.mxu0 0.0
        %941 = vmatprep.subr.mxu0 0.0
        %942 = vmatpush1.msra.mxu0 0.0
        %943 = vmatprep.subr.mxu0 0.0
        %944 = vmatpush1.msra.mxu0 0.0
        %945 = vmatprep.subr.mxu0 0.0
        %946 = vmatpush1.msra.mxu0 0.0
        %947 = vmatprep.subr.mxu0 0.0
        %948 = vmatpush1.msra.mxu0 0.0
        %949 = vmatprep.subr.mxu0 0.0
        %950 = vmatpush1.msra.mxu0 0.0
        %951 = vmatprep.subr.mxu0 0.0
        %952 = vmatpush1.msra.mxu0 0.0
        %953 = vmatprep.subr.mxu0 0.0
        %954 = vmatpush1.msra.mxu0 0.0
        %955 = vmatprep.subr.mxu0 0.0
        %956 = vmatpush1.msra.mxu0 0.0
        %957 = vmatprep.subr.mxu0 0.0
        %958 = vmatpush1.msra.mxu0 0.0
        %959 = vmatprep.subr.mxu0 0.0
        %960 = vmatpush1.msra.mxu0 0.0
        %961 = vmatprep.subr.mxu0 0.0
        %962 = vmatpush1.msra.mxu0 0.0
        %963 = vmatprep.subr.mxu0 0.0
        %964 = vmatpush1.msra.mxu0 0.0
        %965 = vmatprep.subr.mxu0 0.0
        %966 = vmatpush1.msra.mxu0 0.0
        %967 = vmatprep.subr.mxu0 0.0
        %968 = vmatpush1.msra.mxu0 0.0
        %969 = vmatprep.subr.mxu0 0.0
        %970 = vmatpush1.msra.mxu0 0.0
        %971 = vmatprep.mubr.f32.mxu0 0.0
        %v972 = vand.u32 %v669, 4294901760
        %v973 = vsub.f32 %v669, %v972
        %v974 = vand.u32 %v973, 4294901760
        %975 = vmatmul.mubr.f32.gmra.mrb[0].mxu0 %v974
        %v976 = vpop.f32.mrb[0].mxu0
        %v977 = vadd.f32 %v902, %v976
        %v978 = vpop.f32.mrb[0].mxu0
        %979 = vdwg.mxu0
        %980 = vmatprep.subr.mxu0 0.0
        %v981 = vand.u32 %v193, 4294901760
        %v982 = vsub.f32 %v193, %v981
        %v983 = vand.u32 %v982, 4294901760
        %984 = vmatpush1.msra.mxu0 %v983
        %985 = vmatprep.subr.mxu0 0.0
        %v986 = vand.u32 %v206, 4294901760
        %v987 = vsub.f32 %v206, %v986
        %v988 = vand.u32 %v987, 4294901760
        %989 = vmatpush1.msra.mxu0 %v988
        %990 = vmatprep.subr.mxu0 0.0
        %991 = vmatpush1.msra.mxu0 0.0
        %992 = vmatprep.subr.mxu0 0.0
        %993 = vmatpush1.msra.mxu0 0.0
        %994 = vmatprep.subr.mxu0 0.0
        %995 = vmatpush1.msra.mxu0 0.0
        %996 = vmatprep.subr.mxu0 0.0
        %997 = vmatpush1.msra.mxu0 0.0
        %998 = vmatprep.subr.mxu0 0.0
        %999 = vmatpush1.msra.mxu0 0.0
        %1000 = vmatprep.subr.mxu0 0.0
        %1001 = vmatpush1.msra.mxu0 0.0
        %1002 = vmatprep.subr.mxu0 0.0
        %1003 = vmatpush1.msra.mxu0 0.0
        %1004 = vmatprep.subr.mxu0 0.0
        %1005 = vmatpush1.msra.mxu0 0.0
        %1006 = vmatprep.subr.mxu0 0.0
        %1007 = vmatpush1.msra.mxu0 0.0
        %1008 = vmatprep.subr.mxu0 0.0
        %1009 = vmatpush1.msra.mxu0 0.0
        %1010 = vmatprep.subr.mxu0 0.0
        %1011 = vmatpush1.msra.mxu0 0.0
        %1012 = vmatprep.subr.mxu0 0.0
        %1013 = vmatpush1.msra.mxu0 0.0
        %1014 = vmatprep.subr.mxu0 0.0
        %1015 = vmatpush1.msra.mxu0 0.0
        %1016 = vmatprep.subr.mxu0 0.0
        %1017 = vmatpush1.msra.mxu0 0.0
        %1018 = vmatprep.subr.mxu0 0.0
        %1019 = vmatpush1.msra.mxu0 0.0
        %1020 = vmatprep.subr.mxu0 0.0
        %1021 = vmatpush1.msra.mxu0 0.0
        %1022 = vmatprep.subr.mxu0 0.0
        %1023 = vmatpush1.msra.mxu0 0.0
        %1024 = vmatprep.subr.mxu0 0.0
        %1025 = vmatpush1.msra.mxu0 0.0
        %1026 = vmatprep.subr.mxu0 0.0
        %1027 = vmatpush1.msra.mxu0 0.0
        %1028 = vmatprep.subr.mxu0 0.0
        %1029 = vmatpush1.msra.mxu0 0.0
        %1030 = vmatprep.subr.mxu0 0.0
        %1031 = vmatpush1.msra.mxu0 0.0
        %1032 = vmatprep.subr.mxu0 0.0
        %1033 = vmatpush1.msra.mxu0 0.0
        %1034 = vmatprep.subr.mxu0 0.0
        %1035 = vmatpush1.msra.mxu0 0.0
        %1036 = vmatprep.subr.mxu0 0.0
        %1037 = vmatpush1.msra.mxu0 0.0
        %1038 = vmatprep.subr.mxu0 0.0
        %1039 = vmatpush1.msra.mxu0 0.0
        %1040 = vmatprep.subr.mxu0 0.0
        %1041 = vmatpush1.msra.mxu0 0.0
        %1042 = vmatprep.subr.mxu0 0.0
        %1043 = vmatpush1.msra.mxu0 0.0
        %1044 = vmatprep.subr.mxu0 0.0
        %1045 = vmatpush1.msra.mxu0 0.0
        %1046 = vmatprep.subr.mxu0 0.0
        %1047 = vmatpush1.msra.mxu0 0.0
        %1048 = vmatprep.subr.mxu0 0.0
        %1049 = vmatpush1.msra.mxu0 0.0
        %1050 = vmatprep.mubr.f32.mxu0 0.0
        %v1051 = vand.u32 %v669, 4294901760
        %1052 = vmatmul.mubr.f32.gmra.mrb[0].mxu0 %v1051
        %v1053 = vpop.f32.mrb[0].mxu0
        %v1054 = vadd.f32 %v977, %v1053
        %v1055 = vpop.f32.mrb[0].mxu0
        %1056 = vdwg.mxu0
        %1057 = vmatprep.subr.mxu0 0.0
        %v1058 = vand.u32 %v193, 4294901760
        %1059 = vmatpush1.msra.mxu0 %v1058
        %1060 = vmatprep.subr.mxu0 0.0
        %v1061 = vand.u32 %v206, 4294901760
        %1062 = vmatpush1.msra.mxu0 %v1061
        %1063 = vmatprep.subr.mxu0 0.0
        %1064 = vmatpush1.msra.mxu0 0.0
        %1065 = vmatprep.subr.mxu0 0.0
        %1066 = vmatpush1.msra.mxu0 0.0
        %1067 = vmatprep.subr.mxu0 0.0
        %1068 = vmatpush1.msra.mxu0 0.0
        %1069 = vmatprep.subr.mxu0 0.0
        %1070 = vmatpush1.msra.mxu0 0.0
        %1071 = vmatprep.subr.mxu0 0.0
        %1072 = vmatpush1.msra.mxu0 0.0
        %1073 = vmatprep.subr.mxu0 0.0
        %1074 = vmatpush1.msra.mxu0 0.0
        %1075 = vmatprep.subr.mxu0 0.0
        %1076 = vmatpush1.msra.mxu0 0.0
        %1077 = vmatprep.subr.mxu0 0.0
        %1078 = vmatpush1.msra.mxu0 0.0
        %1079 = vmatprep.subr.mxu0 0.0
        %1080 = vmatpush1.msra.mxu0 0.0
        %1081 = vmatprep.subr.mxu0 0.0
        %1082 = vmatpush1.msra.mxu0 0.0
        %1083 = vmatprep.subr.mxu0 0.0
        %1084 = vmatpush1.msra.mxu0 0.0
        %1085 = vmatprep.subr.mxu0 0.0
        %1086 = vmatpush1.msra.mxu0 0.0
        %1087 = vmatprep.subr.mxu0 0.0
        %1088 = vmatpush1.msra.mxu0 0.0
        %1089 = vmatprep.subr.mxu0 0.0
        %1090 = vmatpush1.msra.mxu0 0.0
        %1091 = vmatprep.subr.mxu0 0.0
        %1092 = vmatpush1.msra.mxu0 0.0
        %1093 = vmatprep.subr.mxu0 0.0
        %1094 = vmatpush1.msra.mxu0 0.0
        %1095 = vmatprep.subr.mxu0 0.0
        %1096 = vmatpush1.msra.mxu0 0.0
        %1097 = vmatprep.subr.mxu0 0.0
        %1098 = vmatpush1.msra.mxu0 0.0
        %1099 = vmatprep.subr.mxu0 0.0
        %1100 = vmatpush1.msra.mxu0 0.0
        %1101 = vmatprep.subr.mxu0 0.0
        %1102 = vmatpush1.msra.mxu0 0.0
        %1103 = vmatprep.subr.mxu0 0.0
        %1104 = vmatpush1.msra.mxu0 0.0
        %1105 = vmatprep.subr.mxu0 0.0
        %1106 = vmatpush1.msra.mxu0 0.0
        %1107 = vmatprep.subr.mxu0 0.0
        %1108 = vmatpush1.msra.mxu0 0.0
        %1109 = vmatprep.subr.mxu0 0.0
        %1110 = vmatpush1.msra.mxu0 0.0
        %1111 = vmatprep.subr.mxu0 0.0
        %1112 = vmatpush1.msra.mxu0 0.0
        %1113 = vmatprep.subr.mxu0 0.0
        %1114 = vmatpush1.msra.mxu0 0.0
        %1115 = vmatprep.subr.mxu0 0.0
        %1116 = vmatpush1.msra.mxu0 0.0
        %1117 = vmatprep.subr.mxu0 0.0
        %1118 = vmatpush1.msra.mxu0 0.0
        %1119 = vmatprep.subr.mxu0 0.0
        %1120 = vmatpush1.msra.mxu0 0.0
        %1121 = vmatprep.subr.mxu0 0.0
        %1122 = vmatpush1.msra.mxu0 0.0
        %1123 = vmatprep.mubr.f32.mxu0 0.0
        %v1124 = vand.u32 %v669, 4294901760
        %1125 = vmatmul.mubr.f32.gmra.mrb[0].mxu0 %v1124
        %v1126 = vpop.f32.mrb[0].mxu0
        %v1127 = vadd.f32 %v1054, %v1126
        %v1128 = vpop.f32.mrb[0].mxu0
        %1129 = vdwg.mxu0
        %vm1130 = vcmask 117760
        %1131 = vst.msk [vmem:[#allocation2] sm:$0xf] %vm1130, %v664
        %1132 = vrot.lane.b32.xlu0 %v197, 15
        %v1133 = vpop.permute.xlu0 %1132
        %v1134 = vrot.slane %v1133, 4
        %v1135 = vsel %vm201, %v1134, %v1133
        %vm1137 = vcmask 1043576
        %vm1138 = vcmask 121860
        %vm1139 = vmor %vm1138, %vm1137
        %1140 = vst.msk [vmem:[#allocation2] sm:$0xff] %vm1139, %v1135
        %1142 = vrot.lane.b32.xlu0 %v1127, 15
        %v1143 = vpop.permute.xlu0 %1142
        %vm1145 = vcmask 240760
        %1146 = vst.msk [vmem:[#allocation2 + $0x4] sm:$0xf] %vm1145, %v1143
        %v1147 = vld [vmem:[#allocation2] sm:$0xff]
        %1148 = vst [vmem:[#allocation3] sm:$0xf] %v1147
        %v1150 = vcombine.high %v1147, %v1147
        %1151 = vrot.lane.b32.xlu0 %v1147, 127
        %v1152 = vpop.permute.xlu0 %1151
        %1153 = vrot.lane.b32.xlu0 %v1150, 127
        %v1154 = vpop.permute.xlu0 %1153
        %vm1155 = vcmask 1039360
        %v1156 = vsel %vm1155, %v1152, %v1154
        %1158 = vst [vmem:[#allocation3 + $0x4] sm:$0xf] %v1156
        %1159 = vrot.lane.b32.xlu0 %v1147, 126
        %v1160 = vpop.permute.xlu0 %1159
        %1161 = vrot.lane.b32.xlu0 %v1150, 126
        %v1162 = vpop.permute.xlu0 %1161
        %vm1163 = vcmask 1031168
        %v1164 = vsel %vm1163, %v1160, %v1162
        %1166 = vst [vmem:[#allocation3 + $0x8] sm:$0xf] %v1164
        %1167 = vrot.lane.b32.xlu0 %v1147, 125
        %v1168 = vpop.permute.xlu0 %1167
        %1169 = vrot.lane.b32.xlu0 %v1150, 125
        %v1170 = vpop.permute.xlu0 %1169
        %vm1171 = vcmask 1022976
        %v1172 = vsel %vm1171, %v1168, %v1170
        %1174 = vst [vmem:[#allocation3 + $0xc] sm:$0xf] %v1172
        %1175 = vrot.lane.b32.xlu0 %v1147, 124
        %v1176 = vpop.permute.xlu0 %1175
        %1177 = vrot.lane.b32.xlu0 %v1150, 124
        %v1178 = vpop.permute.xlu0 %1177
        %vm1179 = vcmask 1014784
        %v1180 = vsel %vm1179, %v1176, %v1178
        %1182 = vst [vmem:[#allocation3 + $0x10] sm:$0xf] %v1180
        %1183 = vrot.lane.b32.xlu0 %v1147, 123
        %v1184 = vpop.permute.xlu0 %1183
        %1185 = vrot.lane.b32.xlu0 %v1150, 123
        %v1186 = vpop.permute.xlu0 %1185
        %vm1187 = vcmask 1006592
        %v1188 = vsel %vm1187, %v1184, %v1186
        %1190 = vst [vmem:[#allocation3 + $0x14] sm:$0xf] %v1188
        %1191 = vrot.lane.b32.xlu0 %v1147, 122
        %v1192 = vpop.permute.xlu0 %1191
        %1193 = vrot.lane.b32.xlu0 %v1150, 122
        %v1194 = vpop.permute.xlu0 %1193
        %vm1195 = vcmask 998400
        %v1196 = vsel %vm1195, %v1192, %v1194
        %1198 = vst [vmem:[#allocation3 + $0x18] sm:$0xf] %v1196
        %1199 = vrot.lane.b32.xlu0 %v1147, 121
        %v1200 = vpop.permute.xlu0 %1199
        %1201 = vrot.lane.b32.xlu0 %v1150, 121
        %v1202 = vpop.permute.xlu0 %1201
        %vm1203 = vcmask 990208
        %v1204 = vsel %vm1203, %v1200, %v1202
        %1206 = vst [vmem:[#allocation3 + $0x1c] sm:$0xf] %v1204
        %1207 = vrot.lane.b32.xlu0 %v1147, 120
        %v1208 = vpop.permute.xlu0 %1207
        %1209 = vrot.lane.b32.xlu0 %v1150, 120
        %v1210 = vpop.permute.xlu0 %1209
        %vm1211 = vcmask 982016
        %v1212 = vsel %vm1211, %v1208, %v1210
        %1214 = vst [vmem:[#allocation3 + $0x20] sm:$0xf] %v1212
        %1215 = vrot.lane.b32.xlu0 %v1147, 119
        %v1216 = vpop.permute.xlu0 %1215
        %1217 = vrot.lane.b32.xlu0 %v1150, 119
        %v1218 = vpop.permute.xlu0 %1217
        %vm1219 = vcmask 973824
        %v1220 = vsel %vm1219, %v1216, %v1218
        %1222 = vst [vmem:[#allocation3 + $0x24] sm:$0xf] %v1220
        %1223 = vrot.lane.b32.xlu0 %v1147, 118
        %v1224 = vpop.permute.xlu0 %1223
        %1225 = vrot.lane.b32.xlu0 %v1150, 118
        %v1226 = vpop.permute.xlu0 %1225
        %vm1227 = vcmask 965632
        %v1228 = vsel %vm1227, %v1224, %v1226
        %1230 = vst [vmem:[#allocation3 + $0x28] sm:$0xf] %v1228
        %1231 = vrot.lane.b32.xlu0 %v1147, 117
        %v1232 = vpop.permute.xlu0 %1231
        %1233 = vrot.lane.b32.xlu0 %v1150, 117
        %v1234 = vpop.permute.xlu0 %1233
        %vm1235 = vcmask 957440
        %v1236 = vsel %vm1235, %v1232, %v1234
        %1238 = vst [vmem:[#allocation3 + $0x2c] sm:$0xf] %v1236
        %1239 = vrot.lane.b32.xlu0 %v1147, 116
        %v1240 = vpop.permute.xlu0 %1239
        %1241 = vrot.lane.b32.xlu0 %v1150, 116
        %v1242 = vpop.permute.xlu0 %1241
        %vm1243 = vcmask 949248
        %v1244 = vsel %vm1243, %v1240, %v1242
        %1246 = vst [vmem:[#allocation3 + $0x30] sm:$0xf] %v1244
        %1247 = vrot.lane.b32.xlu0 %v1147, 115
        %v1248 = vpop.permute.xlu0 %1247
        %1249 = vrot.lane.b32.xlu0 %v1150, 115
        %v1250 = vpop.permute.xlu0 %1249
        %vm1251 = vcmask 941056
        %v1252 = vsel %vm1251, %v1248, %v1250
        %1254 = vst [vmem:[#allocation3 + $0x34] sm:$0xf] %v1252
        %1255 = vrot.lane.b32.xlu0 %v1147, 114
        %v1256 = vpop.permute.xlu0 %1255
        %1257 = vrot.lane.b32.xlu0 %v1150, 114
        %v1258 = vpop.permute.xlu0 %1257
        %vm1259 = vcmask 932864
        %v1260 = vsel %vm1259, %v1256, %v1258
        %1262 = vst [vmem:[#allocation3 + $0x38] sm:$0xf] %v1260
        %1263 = vrot.lane.b32.xlu0 %v1147, 113
        %v1264 = vpop.permute.xlu0 %1263
        %1265 = vrot.lane.b32.xlu0 %v1150, 113
        %v1266 = vpop.permute.xlu0 %1265
        %vm1267 = vcmask 924672
        %v1268 = vsel %vm1267, %v1264, %v1266
        %1270 = vst [vmem:[#allocation3 + $0x3c] sm:$0xf] %v1268
        %1271 = vrot.lane.b32.xlu0 %v1147, 112
        %v1272 = vpop.permute.xlu0 %1271
        %1273 = vrot.lane.b32.xlu0 %v1150, 112
        %v1274 = vpop.permute.xlu0 %1273
        %vm1275 = vcmask 916480
        %v1276 = vsel %vm1275, %v1272, %v1274
        %1278 = vst [vmem:[#allocation3 + $0x40] sm:$0xf] %v1276
        %1279 = vrot.lane.b32.xlu0 %v1147, 111
        %v1280 = vpop.permute.xlu0 %1279
        %1281 = vrot.lane.b32.xlu0 %v1150, 111
        %v1282 = vpop.permute.xlu0 %1281
        %vm1283 = vcmask 908288
        %v1284 = vsel %vm1283, %v1280, %v1282
        %1286 = vst [vmem:[#allocation3 + $0x44] sm:$0xf] %v1284
        %1287 = vrot.lane.b32.xlu0 %v1147, 110
        %v1288 = vpop.permute.xlu0 %1287
        %1289 = vrot.lane.b32.xlu0 %v1150, 110
        %v1290 = vpop.permute.xlu0 %1289
        %vm1291 = vcmask 900096
        %v1292 = vsel %vm1291, %v1288, %v1290
        %1294 = vst [vmem:[#allocation3 + $0x48] sm:$0xf] %v1292
        %1295 = vrot.lane.b32.xlu0 %v1147, 109
        %v1296 = vpop.permute.xlu0 %1295
        %1297 = vrot.lane.b32.xlu0 %v1150, 109
        %v1298 = vpop.permute.xlu0 %1297
        %vm1299 = vcmask 891904
        %v1300 = vsel %vm1299, %v1296, %v1298
        %1302 = vst [vmem:[#allocation3 + $0x4c] sm:$0xf] %v1300
        %1303 = vrot.lane.b32.xlu0 %v1147, 108
        %v1304 = vpop.permute.xlu0 %1303
        %1305 = vrot.lane.b32.xlu0 %v1150, 108
        %v1306 = vpop.permute.xlu0 %1305
        %vm1307 = vcmask 883712
        %v1308 = vsel %vm1307, %v1304, %v1306
        %1310 = vst [vmem:[#allocation3 + $0x50] sm:$0xf] %v1308
        %1311 = vrot.lane.b32.xlu0 %v1147, 107
        %v1312 = vpop.permute.xlu0 %1311
        %1313 = vrot.lane.b32.xlu0 %v1150, 107
        %v1314 = vpop.permute.xlu0 %1313
        %vm1315 = vcmask 875520
        %v1316 = vsel %vm1315, %v1312, %v1314
        %1318 = vst [vmem:[#allocation3 + $0x54] sm:$0xf] %v1316
        %1319 = vrot.lane.b32.xlu0 %v1147, 106
        %v1320 = vpop.permute.xlu0 %1319
        %1321 = vrot.lane.b32.xlu0 %v1150, 106
        %v1322 = vpop.permute.xlu0 %1321
        %vm1323 = vcmask 867328
        %v1324 = vsel %vm1323, %v1320, %v1322
        %1326 = vst [vmem:[#allocation3 + $0x58] sm:$0xf] %v1324
        %1327 = vrot.lane.b32.xlu0 %v1147, 105
        %v1328 = vpop.permute.xlu0 %1327
        %1329 = vrot.lane.b32.xlu0 %v1150, 105
        %v1330 = vpop.permute.xlu0 %1329
        %vm1331 = vcmask 859136
        %v1332 = vsel %vm1331, %v1328, %v1330
        %1334 = vst [vmem:[#allocation3 + $0x5c] sm:$0xf] %v1332
        %1335 = vrot.lane.b32.xlu0 %v1147, 104
        %v1336 = vpop.permute.xlu0 %1335
        %1337 = vrot.lane.b32.xlu0 %v1150, 104
        %v1338 = vpop.permute.xlu0 %1337
        %vm1339 = vcmask 850944
        %v1340 = vsel %vm1339, %v1336, %v1338
        %1342 = vst [vmem:[#allocation3 + $0x60] sm:$0xf] %v1340
        %1343 = vrot.lane.b32.xlu0 %v1147, 103
        %v1344 = vpop.permute.xlu0 %1343
        %1345 = vrot.lane.b32.xlu0 %v1150, 103
        %v1346 = vpop.permute.xlu0 %1345
        %vm1347 = vcmask 842752
        %v1348 = vsel %vm1347, %v1344, %v1346
        %1350 = vst [vmem:[#allocation3 + $0x64] sm:$0xf] %v1348
        %1351 = vrot.lane.b32.xlu0 %v1147, 102
        %v1352 = vpop.permute.xlu0 %1351
        %1353 = vrot.lane.b32.xlu0 %v1150, 102
        %v1354 = vpop.permute.xlu0 %1353
        %vm1355 = vcmask 834560
        %v1356 = vsel %vm1355, %v1352, %v1354
        %1358 = vst [vmem:[#allocation3 + $0x68] sm:$0xf] %v1356
        %1359 = vrot.lane.b32.xlu0 %v1147, 101
        %v1360 = vpop.permute.xlu0 %1359
        %1361 = vrot.lane.b32.xlu0 %v1150, 101
        %v1362 = vpop.permute.xlu0 %1361
        %vm1363 = vcmask 826368
        %v1364 = vsel %vm1363, %v1360, %v1362
        %1366 = vst [vmem:[#allocation3 + $0x6c] sm:$0xf] %v1364
        %1367 = vrot.lane.b32.xlu0 %v1147, 100
        %v1368 = vpop.permute.xlu0 %1367
        %1369 = vrot.lane.b32.xlu0 %v1150, 100
        %v1370 = vpop.permute.xlu0 %1369
        %vm1371 = vcmask 818176
        %v1372 = vsel %vm1371, %v1368, %v1370
        %1374 = vst [vmem:[#allocation3 + $0x70] sm:$0xf] %v1372
        %1375 = vrot.lane.b32.xlu0 %v1147, 99
        %v1376 = vpop.permute.xlu0 %1375
        %1377 = vrot.lane.b32.xlu0 %v1150, 99
        %v1378 = vpop.permute.xlu0 %1377
        %vm1379 = vcmask 809984
        %v1380 = vsel %vm1379, %v1376, %v1378
        %1382 = vst [vmem:[#allocation3 + $0x74] sm:$0xf] %v1380
        %1383 = vrot.lane.b32.xlu0 %v1147, 98
        %v1384 = vpop.permute.xlu0 %1383
        %1385 = vrot.lane.b32.xlu0 %v1150, 98
        %v1386 = vpop.permute.xlu0 %1385
        %vm1387 = vcmask 801792
        %v1388 = vsel %vm1387, %v1384, %v1386
        %1390 = vst [vmem:[#allocation3 + $0x78] sm:$0xf] %v1388
        %v1391 = vld [vmem:[#allocation3] sm:$0xff]
        %v1392 = vld [vmem:[#allocation3 + $0x8] sm:$0xff]
        %v1393 = vld [vmem:[#allocation3 + $0x10] sm:$0xff]
        %v1394 = vld [vmem:[#allocation3 + $0x18] sm:$0xff]
        %v1395 = vld [vmem:[#allocation3 + $0x20] sm:$0xff]
        %v1396 = vld [vmem:[#allocation3 + $0x28] sm:$0xff]
        %v1397 = vld [vmem:[#allocation3 + $0x30] sm:$0xff]
        %v1398 = vld [vmem:[#allocation3 + $0x38] sm:$0xff]
        %v1399 = vld [vmem:[#allocation3 + $0x40] sm:$0xff]
        %v1400 = vld [vmem:[#allocation3 + $0x48] sm:$0xff]
        %v1401 = vld [vmem:[#allocation3 + $0x50] sm:$0xff]
        %v1402 = vld [vmem:[#allocation3 + $0x58] sm:$0xff]
        %v1403 = vld [vmem:[#allocation3 + $0x60] sm:$0xff]
        %v1404 = vld [vmem:[#allocation3 + $0x68] sm:$0xff]
        %v1405 = vld [vmem:[#allocation3 + $0x70] sm:$0xff]
        %v1406 = vld [vmem:[#allocation3 + $0x78] sm:$0xf]
        %v1408 = vsel %vm1179, %v195, 0
        %vm1410 = vcmask 1043456
        %v1412 = vsel %vm1410, %v1406, 0
        %1414 = vmatprep.subr.mxu0 0.0
        %1415 = vmatpush1.msra.mxu0 %v1391
        %1416 = vmatprep.subr.mxu0 0.0
        %1417 = vmatpush1.msra.mxu0 %v1392
        %1418 = vmatprep.subr.mxu0 0.0
        %1419 = vmatpush1.msra.mxu0 %v1393
        %1420 = vmatprep.subr.mxu0 0.0
        %1421 = vmatpush1.msra.mxu0 %v1394
        %1422 = vmatprep.subr.mxu0 0.0
        %1423 = vmatpush1.msra.mxu0 %v1395
        %1424 = vmatprep.subr.mxu0 0.0
        %1425 = vmatpush1.msra.mxu0 %v1396
        %1426 = vmatprep.subr.mxu0 0.0
        %1427 = vmatpush1.msra.mxu0 %v1397
        %1428 = vmatprep.subr.mxu0 0.0
        %1429 = vmatpush1.msra.mxu0 %v1398
        %1430 = vmatprep.subr.mxu0 0.0
        %1431 = vmatpush1.msra.mxu0 %v1399
        %1432 = vmatprep.subr.mxu0 0.0
        %1433 = vmatpush1.msra.mxu0 %v1400
        %1434 = vmatprep.subr.mxu0 0.0
        %1435 = vmatpush1.msra.mxu0 %v1401
        %1436 = vmatprep.subr.mxu0 0.0
        %1437 = vmatpush1.msra.mxu0 %v1402
        %1438 = vmatprep.subr.mxu0 0.0
        %1439 = vmatpush1.msra.mxu0 %v1403
        %1440 = vmatprep.subr.mxu0 0.0
        %1441 = vmatpush1.msra.mxu0 %v1404
        %1442 = vmatprep.subr.mxu0 0.0
        %1443 = vmatpush1.msra.mxu0 %v1405
        %1444 = vmatprep.subr.mxu0 0.0
        %1445 = vmatpush1.msra.mxu0 %v1412
        %1446 = vmatprep.subr.mxu0 0.0
        %1447 = vmatpush1.msra.mxu0 0.0
        %1448 = vmatprep.subr.mxu0 0.0
        %1449 = vmatpush1.msra.mxu0 0.0
        %1450 = vmatprep.subr.mxu0 0.0
        %1451 = vmatpush1.msra.mxu0 0.0
        %1452 = vmatprep.subr.mxu0 0.0
        %1453 = vmatpush1.msra.mxu0 0.0
        %1454 = vmatprep.subr.mxu0 0.0
        %1455 = vmatpush1.msra.mxu0 0.0
        %1456 = vmatprep.subr.mxu0 0.0
        %1457 = vmatpush1.msra.mxu0 0.0
        %1458 = vmatprep.subr.mxu0 0.0
        %1459 = vmatpush1.msra.mxu0 0.0
        %1460 = vmatprep.subr.mxu0 0.0
        %1461 = vmatpush1.msra.mxu0 0.0
        %1462 = vmatprep.subr.mxu0 0.0
        %1463 = vmatpush1.msra.mxu0 0.0
        %1464 = vmatprep.subr.mxu0 0.0
        %1465 = vmatpush1.msra.mxu0 0.0
        %1466 = vmatprep.subr.mxu0 0.0
        %1467 = vmatpush1.msra.mxu0 0.0
        %1468 = vmatprep.subr.mxu0 0.0
        %1469 = vmatpush1.msra.mxu0 0.0
        %1470 = vmatprep.subr.mxu0 0.0
        %1471 = vmatpush1.msra.mxu0 0.0
        %1472 = vmatprep.subr.mxu0 0.0
        %1473 = vmatpush1.msra.mxu0 0.0
        %1474 = vmatprep.subr.mxu0 0.0
        %1475 = vmatpush1.msra.mxu0 0.0
        %1476 = vmatprep.subr.mxu0 0.0
        %1477 = vmatpush1.msra.mxu0 0.0
        %1478 = vmatprep.mubr.f32.mxu0 0.0
        %1479 = vmatmul.mubr.f32.gmra.mrb[0].mxu0 %v1408
        %v1480 = vpop.f32.mrb[0].mxu0
        %v1481 = vadd.f32 0.0, %v1480
        %v1482 = vpop.f32.mrb[0].mxu0
        %1483 = vdwg.mxu0
        %v1484 = vsel %vm1410, %v1481, 0.0
        %1485 = vadd.xlane.f32.xlu0 %v1484
        %v1486 = vpop.xlane.xlu0 %1485
        %v1487 = vrcp.pop 128.0
        %v1488 = vmul.f32 %v1486, %v1487
        %v1489 = vsub.f32 %v1481, %v1488
        %v1490 = vmul.f32 %v1489, %v1489
        %v1491 = vsel %vm1410, %v1490, 0.0
        %1492 = vadd.xlane.f32.xlu0 %v1491
        %v1493 = vpop.xlane.xlu0 %1492
        %v1494 = vmul.f32 %v1493, %v1487
        %v1495 = vadd.f32 %v1494, 1e-05
        %v1496 = vrsqrt.pop %v1495
        %v1497 = vmul.f32 %v1489, %v1496
        %v1498 = vmax.f32 %v1497, 0.0
        %1500 = vrot.lane.b32.xlu0 %v1498, 127
        %v1501 = vpop.permute.xlu0 %1500
        %v1502 = vsel %vm201, %v1501, 0
        %1504 = vmatprep.subr.mxu0 0.0
        %v1505 = vand.u32 %v193, 4294901760
        %1506 = vmatpush1.msra.mxu0 %v1505
        %1507 = vmatprep.subr.mxu0 0.0
        %v1508 = vand.u32 %v206, 4294901760
        %1509 = vmatpush1.msra.mxu0 %v1508
        %1510 = vmatprep.subr.mxu0 0.0
        %1511 = vmatpush1.msra.mxu0 0.0
        %1512 = vmatprep.subr.mxu0 0.0
        %1513 = vmatpush1.msra.mxu0 0.0
        %1514 = vmatprep.subr.mxu0 0.0
        %1515 = vmatpush1.msra.mxu0 0.0
        %1516 = vmatprep.subr.mxu0 0.0
        %1517 = vmatpush1.msra.mxu0 0.0
        %1518 = vmatprep.subr.mxu0 0.0
        %1519 = vmatpush1.msra.mxu0 0.0
        %1520 = vmatprep.subr.mxu0 0.0
        %1521 = vmatpush1.msra.mxu0 0.0
        %1522 = vmatprep.subr.mxu0 0.0
        %1523 = vmatpush1.msra.mxu0 0.0
        %1524 = vmatprep.subr.mxu0 0.0
        %1525 = vmatpush1.msra.mxu0 0.0
        %1526 = vmatprep.subr.mxu0 0.0
        %1527 = vmatpush1.msra.mxu0 0.0
        %1528 = vmatprep.subr.mxu0 0.0
        %1529 = vmatpush1.msra.mxu0 0.0
        %1530 = vmatprep.subr.mxu0 0.0
        %1531 = vmatpush1.msra.mxu0 0.0
        %1532 = vmatprep.subr.mxu0 0.0
        %1533 = vmatpush1.msra.mxu0 0.0
        %1534 = vmatprep.subr.mxu0 0.0
        %1535 = vmatpush1.msra.mxu0 0.0
        %1536 = vmatprep.subr.mxu0 0.0
        %1537 = vmatpush1.msra.mxu0 0.0
        %1538 = vmatprep.subr.mxu0 0.0
        %1539 = vmatpush1.msra.mxu0 0.0
        %1540 = vmatprep.subr.mxu0 0.0
        %1541 = vmatpush1.msra.mxu0 0.0
        %1542 = vmatprep.subr.mxu0 0.0
        %1543 = vmatpush1.msra.mxu0 0.0
        %1544 = vmatprep.subr.mxu0 0.0
        %1545 = vmatpush1.msra.mxu0 0.0
        %1546 = vmatprep.subr.mxu0 0.0
        %1547 = vmatpush1.msra.mxu0 0.0
        %1548 = vmatprep.subr.mxu0 0.0
        %1549 = vmatpush1.msra.mxu0 0.0
        %1550 = vmatprep.subr.mxu0 0.0
        %1551 = vmatpush1.msra.mxu0 0.0
        %1552 = vmatprep.subr.mxu0 0.0
        %1553 = vmatpush1.msra.mxu0 0.0
        %1554 = vmatprep.subr.mxu0 0.0
        %1555 = vmatpush1.msra.mxu0 0.0
        %1556 = vmatprep.subr.mxu0 0.0
        %1557 = vmatpush1.msra.mxu0 0.0
        %1558 = vmatprep.subr.mxu0 0.0
        %1559 = vmatpush1.msra.mxu0 0.0
        %1560 = vmatprep.subr.mxu0 0.0
        %1561 = vmatpush1.msra.mxu0 0.0
        %1562 = vmatprep.subr.mxu0 0.0
        %1563 = vmatpush1.msra.mxu0 0.0
        %1564 = vmatprep.subr.mxu0 0.0
        %1565 = vmatpush1.msra.mxu0 0.0
        %1566 = vmatprep.subr.mxu0 0.0
        %1567 = vmatpush1.msra.mxu0 0.0
        %1568 = vmatprep.subr.mxu0 0.0
        %1569 = vmatpush1.msra.mxu0 0.0
        %1570 = vmatprep.mubr.f32.mxu0 0.0
        %v1571 = vand.u32 %v1502, 4294901760
        %v1572 = vsub.f32 %v1502, %v1571
        %v1573 = vand.u32 %v1572, 4294901760
        %v1574 = vsub.f32 %v1572, %v1573
        %v1575 = vand.u32 %v1574, 4294901760
        %1576 = vmatmul.mubr.f32.gmra.mrb[0].mxu0 %v1575
        %v1577 = vpop.f32.mrb[0].mxu0
        %v1578 = vadd.f32 0.0, %v1577
        %v1579 = vpop.f32.mrb[0].mxu0
        %1580 = vdwg.mxu0
        %1581 = vmatprep.subr.mxu0 0.0
        %v1582 = vand.u32 %v193, 4294901760
        %v1583 = vsub.f32 %v193, %v1582
        %v1584 = vand.u32 %v1583, 4294901760
        %v1585 = vsub.f32 %v1583, %v1584
        %v1586 = vand.u32 %v1585, 4294901760
        %1587 = vmatpush1.msra.mxu0 %v1586
        %1588 = vmatprep.subr.mxu0 0.0
        %v1589 = vand.u32 %v206, 4294901760
        %v1590 = vsub.f32 %v206, %v1589
        %v1591 = vand.u32 %v1590, 4294901760
        %v1592 = vsub.f32 %v1590, %v1591
        %v1593 = vand.u32 %v1592, 4294901760
        %1594 = vmatpush1.msra.mxu0 %v1593
        %1595 = vmatprep.subr.mxu0 0.0
        %1596 = vmatpush1.msra.mxu0 0.0
        %1597 = vmatprep.subr.mxu0 0.0
        %1598 = vmatpush1.msra.mxu0 0.0
        %1599 = vmatprep.subr.mxu0 0.0
        %1600 = vmatpush1.msra.mxu0 0.0
        %1601 = vmatprep.subr.mxu0 0.0
        %1602 = vmatpush1.msra.mxu0 0.0
        %1603 = vmatprep.subr.mxu0 0.0
        %1604 = vmatpush1.msra.mxu0 0.0
        %1605 = vmatprep.subr.mxu0 0.0
        %1606 = vmatpush1.msra.mxu0 0.0
        %1607 = vmatprep.subr.mxu0 0.0
        %1608 = vmatpush1.msra.mxu0 0.0
        %1609 = vmatprep.subr.mxu0 0.0
        %1610 = vmatpush1.msra.mxu0 0.0
        %1611 = vmatprep.subr.mxu0 0.0
        %1612 = vmatpush1.msra.mxu0 0.0
        %1613 = vmatprep.subr.mxu0 0.0
        %1614 = vmatpush1.msra.mxu0 0.0
        %1615 = vmatprep.subr.mxu0 0.0
        %1616 = vmatpush1.msra.mxu0 0.0
        %1617 = vmatprep.subr.mxu0 0.0
        %1618 = vmatpush1.msra.mxu0 0.0
        %1619 = vmatprep.subr.mxu0 0.0
        %1620 = vmatpush1.msra.mxu0 0.0
        %1621 = vmatprep.subr.mxu0 0.0
        %1622 = vmatpush1.msra.mxu0 0.0
        %1623 = vmatprep.subr.mxu0 0.0
        %1624 = vmatpush1.msra.mxu0 0.0
        %1625 = vmatprep.subr.mxu0 0.0
        %1626 = vmatpush1.msra.mxu0 0.0
        %1627 = vmatprep.subr.mxu0 0.0
        %1628 = vmatpush1.msra.mxu0 0.0
        %1629 = vmatprep.subr.mxu0 0.0
        %1630 = vmatpush1.msra.mxu0 0.0
        %1631 = vmatprep.subr.mxu0 0.0
        %1632 = vmatpush1.msra.mxu0 0.0
        %1633 = vmatprep.subr.mxu0 0.0
        %1634 = vmatpush1.msra.mxu0 0.0
        %1635 = vmatprep.subr.mxu0 0.0
        %1636 = vmatpush1.msra.mxu0 0.0
        %1637 = vmatprep.subr.mxu0 0.0
        %1638 = vmatpush1.msra.mxu0 0.0
        %1639 = vmatprep.subr.mxu0 0.0
        %1640 = vmatpush1.msra.mxu0 0.0
        %1641 = vmatprep.subr.mxu0 0.0
        %1642 = vmatpush1.msra.mxu0 0.0
        %1643 = vmatprep.subr.mxu0 0.0
        %1644 = vmatpush1.msra.mxu0 0.0
        %1645 = vmatprep.subr.mxu0 0.0
        %1646 = vmatpush1.msra.mxu0 0.0
        %1647 = vmatprep.subr.mxu0 0.0
        %1648 = vmatpush1.msra.mxu0 0.0
        %1649 = vmatprep.subr.mxu0 0.0
        %1650 = vmatpush1.msra.mxu0 0.0
        %1651 = vmatprep.subr.mxu0 0.0
        %1652 = vmatpush1.msra.mxu0 0.0
        %1653 = vmatprep.subr.mxu0 0.0
        %1654 = vmatpush1.msra.mxu0 0.0
        %1655 = vmatprep.mubr.f32.mxu0 0.0
        %v1656 = vand.u32 %v1502, 4294901760
        %1657 = vmatmul.mubr.f32.gmra.mrb[0].mxu0 %v1656
        %v1658 = vpop.f32.mrb[0].mxu0
        %v1659 = vadd.f32 %v1578, %v1658
        %v1660 = vpop.f32.mrb[0].mxu0
        %1661 = vdwg.mxu0
        %1662 = vmatprep.subr.mxu0 0.0
        %v1663 = vand.u32 %v193, 4294901760
        %v1664 = vsub.f32 %v193, %v1663
        %1665 = vmatpush1.msra.mxu0 %v1664
        %1666 = vmatprep.subr.mxu0 0.0
        %v1667 = vand.u32 %v206, 4294901760
        %v1668 = vsub.f32 %v206, %v1667
        %1669 = vmatpush1.msra.mxu0 %v1668
        %1670 = vmatprep.subr.mxu0 0.0
        %1671 = vmatpush1.msra.mxu0 0.0
        %1672 = vmatprep.subr.mxu0 0.0
        %1673 = vmatpush1.msra.mxu0 0.0
        %1674 = vmatprep.subr.mxu0 0.0
        %1675 = vmatpush1.msra.mxu0 0.0
        %1676 = vmatprep.subr.mxu0 0.0
        %1677 = vmatpush1.msra.mxu0 0.0
        %1678 = vmatprep.subr.mxu0 0.0
        %1679 = vmatpush1.msra.mxu0 0.0
        %1680 = vmatprep.subr.mxu0 0.0
        %1681 = vmatpush1.msra.mxu0 0.0
        %1682 = vmatprep.subr.mxu0 0.0
        %1683 = vmatpush1.msra.mxu0 0.0
        %1684 = vmatprep.subr.mxu0 0.0
        %1685 = vmatpush1.msra.mxu0 0.0
        %1686 = vmatprep.subr.mxu0 0.0
        %1687 = vmatpush1.msra.mxu0 0.0
        %1688 = vmatprep.subr.mxu0 0.0
        %1689 = vmatpush1.msra.mxu0 0.0
        %1690 = vmatprep.subr.mxu0 0.0
        %1691 = vmatpush1.msra.mxu0 0.0
        %1692 = vmatprep.subr.mxu0 0.0
        %1693 = vmatpush1.msra.mxu0 0.0
        %1694 = vmatprep.subr.mxu0 0.0
        %1695 = vmatpush1.msra.mxu0 0.0
        %1696 = vmatprep.subr.mxu0 0.0
        %1697 = vmatpush1.msra.mxu0 0.0
        %1698 = vmatprep.subr.mxu0 0.0
        %1699 = vmatpush1.msra.mxu0 0.0
        %1700 = vmatprep.subr.mxu0 0.0
        %1701 = vmatpush1.msra.mxu0 0.0
        %1702 = vmatprep.subr.mxu0 0.0
        %1703 = vmatpush1.msra.mxu0 0.0
        %1704 = vmatprep.subr.mxu0 0.0
        %1705 = vmatpush1.msra.mxu0 0.0
        %1706 = vmatprep.subr.mxu0 0.0
        %1707 = vmatpush1.msra.mxu0 0.0
        %1708 = vmatprep.subr.mxu0 0.0
        %1709 = vmatpush1.msra.mxu0 0.0
        %1710 = vmatprep.subr.mxu0 0.0
        %1711 = vmatpush1.msra.mxu0 0.0
        %1712 = vmatprep.subr.mxu0 0.0
        %1713 = vmatpush1.msra.mxu0 0.0
        %1714 = vmatprep.subr.mxu0 0.0
        %1715 = vmatpush1.msra.mxu0 0.0
        %1716 = vmatprep.subr.mxu0 0.0
        %1717 = vmatpush1.msra.mxu0 0.0
        %1718 = vmatprep.subr.mxu0 0.0
        %1719 = vmatpush1.msra.mxu0 0.0
        %1720 = vmatprep.subr.mxu0 0.0
        %1721 = vmatpush1.msra.mxu0 0.0
        %1722 = vmatprep.subr.mxu0 0.0
        %1723 = vmatpush1.msra.mxu0 0.0
        %1724 = vmatprep.subr.mxu0 0.0
        %1725 = vmatpush1.msra.mxu0 0.0
        %1726 = vmatprep.subr.mxu0 0.0
        %1727 = vmatpush1.msra.mxu0 0.0
        %1728 = vmatprep.subr.mxu0 0.0
        %1729 = vmatpush1.msra.mxu0 0.0
        %1730 = vmatprep.mubr.f32.mxu0 0.0
        %v1731 = vand.u32 %v1502, 4294901760
        %v1732 = vsub.f32 %v1502, %v1731
        %1733 = vmatmul.mubr.f32.gmra.mrb[0].mxu0 %v1732
        %v1734 = vpop.f32.mrb[0].mxu0
        %v1735 = vadd.f32 %v1659, %v1734
        %v1736 = vpop.f32.mrb[0].mxu0
        %1737 = vdwg.mxu0
        %1738 = vmatprep.subr.mxu0 0.0
        %v1739 = vand.u32 %v193, 4294901760
        %1740 = vmatpush1.msra.mxu0 %v1739
        %1741 = vmatprep.subr.mxu0 0.0
        %v1742 = vand.u32 %v206, 4294901760
        %1743 = vmatpush1.msra.mxu0 %v1742
        %1744 = vmatprep.subr.mxu0 0.0
        %1745 = vmatpush1.msra.mxu0 0.0
        %1746 = vmatprep.subr.mxu0 0.0
        %1747 = vmatpush1.msra.mxu0 0.0
        %1748 = vmatprep.subr.mxu0 0.0
        %1749 = vmatpush1.msra.mxu0 0.0
        %1750 = vmatprep.subr.mxu0 0.0
        %1751 = vmatpush1.msra.mxu0 0.0
        %1752 = vmatprep.subr.mxu0 0.0
        %1753 = vmatpush1.msra.mxu0 0.0
        %1754 = vmatprep.subr.mxu0 0.0
        %1755 = vmatpush1.msra.mxu0 0.0
        %1756 = vmatprep.subr.mxu0 0.0
        %1757 = vmatpush1.msra.mxu0 0.0
        %1758 = vmatprep.subr.mxu0 0.0
        %1759 = vmatpush1.msra.mxu0 0.0
        %1760 = vmatprep.subr.mxu0 0.0
        %1761 = vmatpush1.msra.mxu0 0.0
        %1762 = vmatprep.subr.mxu0 0.0
        %1763 = vmatpush1.msra.mxu0 0.0
        %1764 = vmatprep.subr.mxu0 0.0
        %1765 = vmatpush1.msra.mxu0 0.0
        %1766 = vmatprep.subr.mxu0 0.0
        %1767 = vmatpush1.msra.mxu0 0.0
        %1768 = vmatprep.subr.mxu0 0.0
        %1769 = vmatpush1.msra.mxu0 0.0
        %1770 = vmatprep.subr.mxu0 0.0
        %1771 = vmatpush1.msra.mxu0 0.0
        %1772 = vmatprep.subr.mxu0 0.0
        %1773 = vmatpush1.msra.mxu0 0.0
        %1774 = vmatprep.subr.mxu0 0.0
        %1775 = vmatpush1.msra.mxu0 0.0
        %1776 = vmatprep.subr.mxu0 0.0
        %1777 = vmatpush1.msra.mxu0 0.0
        %1778 = vmatprep.subr.mxu0 0.0
        %1779 = vmatpush1.msra.mxu0 0.0
        %1780 = vmatprep.subr.mxu0 0.0
        %1781 = vmatpush1.msra.mxu0 0.0
        %1782 = vmatprep.subr.mxu0 0.0
        %1783 = vmatpush1.msra.mxu0 0.0
        %1784 = vmatprep.subr.mxu0 0.0
        %1785 = vmatpush1.msra.mxu0 0.0
        %1786 = vmatprep.subr.mxu0 0.0
        %1787 = vmatpush1.msra.mxu0 0.0
        %1788 = vmatprep.subr.mxu0 0.0
        %1789 = vmatpush1.msra.mxu0 0.0
        %1790 = vmatprep.subr.mxu0 0.0
        %1791 = vmatpush1.msra.mxu0 0.0
        %1792 = vmatprep.subr.mxu0 0.0
        %1793 = vmatpush1.msra.mxu0 0.0
        %1794 = vmatprep.subr.mxu0 0.0
        %1795 = vmatpush1.msra.mxu0 0.0
        %1796 = vmatprep.subr.mxu0 0.0
        %1797 = vmatpush1.msra.mxu0 0.0
        %1798 = vmatprep.subr.mxu0 0.0
        %1799 = vmatpush1.msra.mxu0 0.0
        %1800 = vmatprep.subr.mxu0 0.0
        %1801 = vmatpush1.msra.mxu0 0.0
        %1802 = vmatprep.subr.mxu0 0.0
        %1803 = vmatpush1.msra.mxu0 0.0
        %1804 = vmatprep.mubr.f32.mxu0 0.0
        %v1805 = vand.u32 %v1502, 4294901760
        %v1806 = vsub.f32 %v1502, %v1805
        %v1807 = vand.u32 %v1806, 4294901760
        %1808 = vmatmul.mubr.f32.gmra.mrb[0].mxu0 %v1807
        %v1809 = vpop.f32.mrb[0].mxu0
        %v1810 = vadd.f32 %v1735, %v1809
        %v1811 = vpop.f32.mrb[0].mxu0
        %1812 = vdwg.mxu0
        %1813 = vmatprep.subr.mxu0 0.0
        %v1814 = vand.u32 %v193, 4294901760
        %v1815 = vsub.f32 %v193, %v1814
        %v1816 = vand.u32 %v1815, 4294901760
        %1817 = vmatpush1.msra.mxu0 %v1816
        %1818 = vmatprep.subr.mxu0 0.0
        %v1819 = vand.u32 %v206, 4294901760
        %v1820 = vsub.f32 %v206, %v1819
        %v1821 = vand.u32 %v1820, 4294901760
        %1822 = vmatpush1.msra.mxu0 %v1821
        %1823 = vmatprep.subr.mxu0 0.0
        %1824 = vmatpush1.msra.mxu0 0.0
        %1825 = vmatprep.subr.mxu0 0.0
        %1826 = vmatpush1.msra.mxu0 0.0
        %1827 = vmatprep.subr.mxu0 0.0
        %1828 = vmatpush1.msra.mxu0 0.0
        %1829 = vmatprep.subr.mxu0 0.0
        %1830 = vmatpush1.msra.mxu0 0.0
        %1831 = vmatprep.subr.mxu0 0.0
        %1832 = vmatpush1.msra.mxu0 0.0
        %1833 = vmatprep.subr.mxu0 0.0
        %1834 = vmatpush1.msra.mxu0 0.0
        %1835 = vmatprep.subr.mxu0 0.0
        %1836 = vmatpush1.msra.mxu0 0.0
        %1837 = vmatprep.subr.mxu0 0.0
        %1838 = vmatpush1.msra.mxu0 0.0
        %1839 = vmatprep.subr.mxu0 0.0
        %1840 = vmatpush1.msra.mxu0 0.0
        %1841 = vmatprep.subr.mxu0 0.0
        %1842 = vmatpush1.msra.mxu0 0.0
        %1843 = vmatprep.subr.mxu0 0.0
        %1844 = vmatpush1.msra.mxu0 0.0
        %1845 = vmatprep.subr.mxu0 0.0
        %1846 = vmatpush1.msra.mxu0 0.0
        %1847 = vmatprep.subr.mxu0 0.0
        %1848 = vmatpush1.msra.mxu0 0.0
        %1849 = vmatprep.subr.mxu0 0.0
        %1850 = vmatpush1.msra.mxu0 0.0
        %1851 = vmatprep.subr.mxu0 0.0
        %1852 = vmatpush1.msra.mxu0 0.0
        %1853 = vmatprep.subr.mxu0 0.0
        %1854 = vmatpush1.msra.mxu0 0.0
        %1855 = vmatprep.subr.mxu0 0.0
        %1856 = vmatpush1.msra.mxu0 0.0
        %1857 = vmatprep.subr.mxu0 0.0
        %1858 = vmatpush1.msra.mxu0 0.0
        %1859 = vmatprep.subr.mxu0 0.0
        %1860 = vmatpush1.msra.mxu0 0.0
        %1861 = vmatprep.subr.mxu0 0.0
        %1862 = vmatpush1.msra.mxu0 0.0
        %1863 = vmatprep.subr.mxu0 0.0
        %1864 = vmatpush1.msra.mxu0 0.0
        %1865 = vmatprep.subr.mxu0 0.0
        %1866 = vmatpush1.msra.mxu0 0.0
        %1867 = vmatprep.subr.mxu0 0.0
        %1868 = vmatpush1.msra.mxu0 0.0
        %1869 = vmatprep.subr.mxu0 0.0
        %1870 = vmatpush1.msra.mxu0 0.0
        %1871 = vmatprep.subr.mxu0 0.0
        %1872 = vmatpush1.msra.mxu0 0.0
        %1873 = vmatprep.subr.mxu0 0.0
        %1874 = vmatpush1.msra.mxu0 0.0
        %1875 = vmatprep.subr.mxu0 0.0
        %1876 = vmatpush1.msra.mxu0 0.0
        %1877 = vmatprep.subr.mxu0 0.0
        %1878 = vmatpush1.msra.mxu0 0.0
        %1879 = vmatprep.subr.mxu0 0.0
        %1880 = vmatpush1.msra.mxu0 0.0
        %1881 = vmatprep.subr.mxu0 0.0
        %1882 = vmatpush1.msra.mxu0 0.0
        %1883 = vmatprep.mubr.f32.mxu0 0.0
        %v1884 = vand.u32 %v1502, 4294901760
        %1885 = vmatmul.mubr.f32.gmra.mrb[0].mxu0 %v1884
        %v1886 = vpop.f32.mrb[0].mxu0
        %v1887 = vadd.f32 %v1810, %v1886
        %v1888 = vpop.f32.mrb[0].mxu0
        %1889 = vdwg.mxu0
        %1890 = vmatprep.subr.mxu0 0.0
        %v1891 = vand.u32 %v193, 4294901760
        %1892 = vmatpush1.msra.mxu0 %v1891
        %1893 = vmatprep.subr.mxu0 0.0
        %v1894 = vand.u32 %v206, 4294901760
        %1895 = vmatpush1.msra.mxu0 %v1894
        %1896 = vmatprep.subr.mxu0 0.0
        %1897 = vmatpush1.msra.mxu0 0.0
        %1898 = vmatprep.subr.mxu0 0.0
        %1899 = vmatpush1.msra.mxu0 0.0
        %1900 = vmatprep.subr.mxu0 0.0
        %1901 = vmatpush1.msra.mxu0 0.0
        %1902 = vmatprep.subr.mxu0 0.0
        %1903 = vmatpush1.msra.mxu0 0.0
        %1904 = vmatprep.subr.mxu0 0.0
        %1905 = vmatpush1.msra.mxu0 0.0
        %1906 = vmatprep.subr.mxu0 0.0
        %1907 = vmatpush1.msra.mxu0 0.0
        %1908 = vmatprep.subr.mxu0 0.0
        %1909 = vmatpush1.msra.mxu0 0.0
        %1910 = vmatprep.subr.mxu0 0.0
        %1911 = vmatpush1.msra.mxu0 0.0
        %1912 = vmatprep.subr.mxu0 0.0
        %1913 = vmatpush1.msra.mxu0 0.0
        %1914 = vmatprep.subr.mxu0 0.0
        %1915 = vmatpush1.msra.mxu0 0.0
        %1916 = vmatprep.subr.mxu0 0.0
        %1917 = vmatpush1.msra.mxu0 0.0
        %1918 = vmatprep.subr.mxu0 0.0
        %1919 = vmatpush1.msra.mxu0 0.0
        %1920 = vmatprep.subr.mxu0 0.0
        %1921 = vmatpush1.msra.mxu0 0.0
        %1922 = vmatprep.subr.mxu0 0.0
        %1923 = vmatpush1.msra.mxu0 0.0
        %1924 = vmatprep.subr.mxu0 0.0
        %1925 = vmatpush1.msra.mxu0 0.0
        %1926 = vmatprep.subr.mxu0 0.0
        %1927 = vmatpush1.msra.mxu0 0.0
        %1928 = vmatprep.subr.mxu0 0.0
        %1929 = vmatpush1.msra.mxu0 0.0
        %1930 = vmatprep.subr.mxu0 0.0
        %1931 = vmatpush1.msra.mxu0 0.0
        %1932 = vmatprep.subr.mxu0 0.0
        %1933 = vmatpush1.msra.mxu0 0.0
        %1934 = vmatprep.subr.mxu0 0.0
        %1935 = vmatpush1.msra.mxu0 0.0
        %1936 = vmatprep.subr.mxu0 0.0
        %1937 = vmatpush1.msra.mxu0 0.0
        %1938 = vmatprep.subr.mxu0 0.0
        %1939 = vmatpush1.msra.mxu0 0.0
        %1940 = vmatprep.subr.mxu0 0.0
        %1941 = vmatpush1.msra.mxu0 0.0
        %1942 = vmatprep.subr.mxu0 0.0
        %1943 = vmatpush1.msra.mxu0 0.0
        %1944 = vmatprep.subr.mxu0 0.0
        %1945 = vmatpush1.msra.mxu0 0.0
        %1946 = vmatprep.subr.mxu0 0.0
        %1947 = vmatpush1.msra.mxu0 0.0
        %1948 = vmatprep.subr.mxu0 0.0
        %1949 = vmatpush1.msra.mxu0 0.0
        %1950 = vmatprep.subr.mxu0 0.0
        %1951 = vmatpush1.msra.mxu0 0.0
        %1952 = vmatprep.subr.mxu0 0.0
        %1953 = vmatpush1.msra.mxu0 0.0
        %1954 = vmatprep.subr.mxu0 0.0
        %1955 = vmatpush1.msra.mxu0 0.0
        %1956 = vmatprep.mubr.f32.mxu0 0.0
        %v1957 = vand.u32 %v1502, 4294901760
        %1958 = vmatmul.mubr.f32.gmra.mrb[0].mxu0 %v1957
        %v1959 = vpop.f32.mrb[0].mxu0
        %v1960 = vadd.f32 %v1887, %v1959
        %v1961 = vpop.f32.mrb[0].mxu0
        %1962 = vdwg.mxu0
        %1963 = vrot.lane.b32.xlu0 %v1498, 16
        %v1964 = vpop.permute.xlu0 %1963
        %v1965 = vsel %vm201, %v1964, 0
        %1967 = vmatprep.subr.mxu0 0.0
        %v1968 = vand.u32 %v193, 4294901760
        %1969 = vmatpush1.msra.mxu0 %v1968
        %1970 = vmatprep.subr.mxu0 0.0
        %v1971 = vand.u32 %v206, 4294901760
        %1972 = vmatpush1.msra.mxu0 %v1971
        %1973 = vmatprep.subr.mxu0 0.0
        %1974 = vmatpush1.msra.mxu0 0.0
        %1975 = vmatprep.subr.mxu0 0.0
        %1976 = vmatpush1.msra.mxu0 0.0
        %1977 = vmatprep.subr.mxu0 0.0
        %1978 = vmatpush1.msra.mxu0 0.0
        %1979 = vmatprep.subr.mxu0 0.0
        %1980 = vmatpush1.msra.mxu0 0.0
        %1981 = vmatprep.subr.mxu0 0.0
        %1982 = vmatpush1.msra.mxu0 0.0
        %1983 = vmatprep.subr.mxu0 0.0
        %1984 = vmatpush1.msra.mxu0 0.0
        %1985 = vmatprep.subr.mxu0 0.0
        %1986 = vmatpush1.msra.mxu0 0.0
        %1987 = vmatprep.subr.mxu0 0.0
        %1988 = vmatpush1.msra.mxu0 0.0
        %1989 = vmatprep.subr.mxu0 0.0
        %1990 = vmatpush1.msra.mxu0 0.0
        %1991 = vmatprep.subr.mxu0 0.0
        %1992 = vmatpush1.msra.mxu0 0.0
        %1993 = vmatprep.subr.mxu0 0.0
        %1994 = vmatpush1.msra.mxu0 0.0
        %1995 = vmatprep.subr.mxu0 0.0
        %1996 = vmatpush1.msra.mxu0 0.0
        %1997 = vmatprep.subr.mxu0 0.0
        %1998 = vmatpush1.msra.mxu0 0.0
        %1999 = vmatprep.subr.mxu0 0.0
        %2000 = vmatpush1.msra.mxu0 0.0
        %2001 = vmatprep.subr.mxu0 0.0
        %2002 = vmatpush1.msra.mxu0 0.0
        %2003 = vmatprep.subr.mxu0 0.0
        %2004 = vmatpush1.msra.mxu0 0.0
        %2005 = vmatprep.subr.mxu0 0.0
        %2006 = vmatpush1.msra.mxu0 0.0
        %2007 = vmatprep.subr.mxu0 0.0
        %2008 = vmatpush1.msra.mxu0 0.0
        %2009 = vmatprep.subr.mxu0 0.0
        %2010 = vmatpush1.msra.mxu0 0.0
        %2011 = vmatprep.subr.mxu0 0.0
        %2012 = vmatpush1.msra.mxu0 0.0
        %2013 = vmatprep.subr.mxu0 0.0
        %2014 = vmatpush1.msra.mxu0 0.0
        %2015 = vmatprep.subr.mxu0 0.0
        %2016 = vmatpush1.msra.mxu0 0.0
        %2017 = vmatprep.subr.mxu0 0.0
        %2018 = vmatpush1.msra.mxu0 0.0
        %2019 = vmatprep.subr.mxu0 0.0
        %2020 = vmatpush1.msra.mxu0 0.0
        %2021 = vmatprep.subr.mxu0 0.0
        %2022 = vmatpush1.msra.mxu0 0.0
        %2023 = vmatprep.subr.mxu0 0.0
        %2024 = vmatpush1.msra.mxu0 0.0
        %2025 = vmatprep.subr.mxu0 0.0
        %2026 = vmatpush1.msra.mxu0 0.0
        %2027 = vmatprep.subr.mxu0 0.0
        %2028 = vmatpush1.msra.mxu0 0.0
        %2029 = vmatprep.subr.mxu0 0.0
        %2030 = vmatpush1.msra.mxu0 0.0
        %2031 = vmatprep.subr.mxu0 0.0
        %2032 = vmatpush1.msra.mxu0 0.0
        %2033 = vmatprep.mubr.f32.mxu0 0.0
        %v2034 = vand.u32 %v1965, 4294901760
        %v2035 = vsub.f32 %v1965, %v2034
        %v2036 = vand.u32 %v2035, 4294901760
        %v2037 = vsub.f32 %v2035, %v2036
        %v2038 = vand.u32 %v2037, 4294901760
        %2039 = vmatmul.mubr.f32.gmra.mrb[0].mxu0 %v2038
        %v2040 = vpop.f32.mrb[0].mxu0
        %v2041 = vadd.f32 0.0, %v2040
        %v2042 = vpop.f32.mrb[0].mxu0
        %2043 = vdwg.mxu0
        %2044 = vmatprep.subr.mxu0 0.0
        %v2045 = vand.u32 %v193, 4294901760
        %v2046 = vsub.f32 %v193, %v2045
        %v2047 = vand.u32 %v2046, 4294901760
        %v2048 = vsub.f32 %v2046, %v2047
        %v2049 = vand.u32 %v2048, 4294901760
        %2050 = vmatpush1.msra.mxu0 %v2049
        %2051 = vmatprep.subr.mxu0 0.0
        %v2052 = vand.u32 %v206, 4294901760
        %v2053 = vsub.f32 %v206, %v2052
        %v2054 = vand.u32 %v2053, 4294901760
        %v2055 = vsub.f32 %v2053, %v2054
        %v2056 = vand.u32 %v2055, 4294901760
        %2057 = vmatpush1.msra.mxu0 %v2056
        %2058 = vmatprep.subr.mxu0 0.0
        %2059 = vmatpush1.msra.mxu0 0.0
        %2060 = vmatprep.subr.mxu0 0.0
        %2061 = vmatpush1.msra.mxu0 0.0
        %2062 = vmatprep.subr.mxu0 0.0
        %2063 = vmatpush1.msra.mxu0 0.0
        %2064 = vmatprep.subr.mxu0 0.0
        %2065 = vmatpush1.msra.mxu0 0.0
        %2066 = vmatprep.subr.mxu0 0.0
        %2067 = vmatpush1.msra.mxu0 0.0
        %2068 = vmatprep.subr.mxu0 0.0
        %2069 = vmatpush1.msra.mxu0 0.0
        %2070 = vmatprep.subr.mxu0 0.0
        %2071 = vmatpush1.msra.mxu0 0.0
        %2072 = vmatprep.subr.mxu0 0.0
        %2073 = vmatpush1.msra.mxu0 0.0
        %2074 = vmatprep.subr.mxu0 0.0
        %2075 = vmatpush1.msra.mxu0 0.0
        %2076 = vmatprep.subr.mxu0 0.0
        %2077 = vmatpush1.msra.mxu0 0.0
        %2078 = vmatprep.subr.mxu0 0.0
        %2079 = vmatpush1.msra.mxu0 0.0
        %2080 = vmatprep.subr.mxu0 0.0
        %2081 = vmatpush1.msra.mxu0 0.0
        %2082 = vmatprep.subr.mxu0 0.0
        %2083 = vmatpush1.msra.mxu0 0.0
        %2084 = vmatprep.subr.mxu0 0.0
        %2085 = vmatpush1.msra.mxu0 0.0
        %2086 = vmatprep.subr.mxu0 0.0
        %2087 = vmatpush1.msra.mxu0 0.0
        %2088 = vmatprep.subr.mxu0 0.0
        %2089 = vmatpush1.msra.mxu0 0.0
        %2090 = vmatprep.subr.mxu0 0.0
        %2091 = vmatpush1.msra.mxu0 0.0
        %2092 = vmatprep.subr.mxu0 0.0
        %2093 = vmatpush1.msra.mxu0 0.0
        %2094 = vmatprep.subr.mxu0 0.0
        %2095 = vmatpush1.msra.mxu0 0.0
        %2096 = vmatprep.subr.mxu0 0.0
        %2097 = vmatpush1.msra.mxu0 0.0
        %2098 = vmatprep.subr.mxu0 0.0
        %2099 = vmatpush1.msra.mxu0 0.0
        %2100 = vmatprep.subr.mxu0 0.0
        %2101 = vmatpush1.msra.mxu0 0.0
        %2102 = vmatprep.subr.mxu0 0.0
        %2103 = vmatpush1.msra.mxu0 0.0
        %2104 = vmatprep.subr.mxu0 0.0
        %2105 = vmatpush1.msra.mxu0 0.0
        %2106 = vmatprep.subr.mxu0 0.0
        %2107 = vmatpush1.msra.mxu0 0.0
        %2108 = vmatprep.subr.mxu0 0.0
        %2109 = vmatpush1.msra.mxu0 0.0
        %2110 = vmatprep.subr.mxu0 0.0
        %2111 = vmatpush1.msra.mxu0 0.0
        %2112 = vmatprep.subr.mxu0 0.0
        %2113 = vmatpush1.msra.mxu0 0.0
        %2114 = vmatprep.subr.mxu0 0.0
        %2115 = vmatpush1.msra.mxu0 0.0
        %2116 = vmatprep.subr.mxu0 0.0
        %2117 = vmatpush1.msra.mxu0 0.0
        %2118 = vmatprep.mubr.f32.mxu0 0.0
        %v2119 = vand.u32 %v1965, 4294901760
        %2120 = vmatmul.mubr.f32.gmra.mrb[0].mxu0 %v2119
        %v2121 = vpop.f32.mrb[0].mxu0
        %v2122 = vadd.f32 %v2041, %v2121
        %v2123 = vpop.f32.mrb[0].mxu0
        %2124 = vdwg.mxu0
        %2125 = vmatprep.subr.mxu0 0.0
        %v2126 = vand.u32 %v193, 4294901760
        %v2127 = vsub.f32 %v193, %v2126
        %2128 = vmatpush1.msra.mxu0 %v2127
        %2129 = vmatprep.subr.mxu0 0.0
        %v2130 = vand.u32 %v206, 4294901760
        %v2131 = vsub.f32 %v206, %v2130
        %2132 = vmatpush1.msra.mxu0 %v2131
        %2133 = vmatprep.subr.mxu0 0.0
        %2134 = vmatpush1.msra.mxu0 0.0
        %2135 = vmatprep.subr.mxu0 0.0
        %2136 = vmatpush1.msra.mxu0 0.0
        %2137 = vmatprep.subr.mxu0 0.0
        %2138 = vmatpush1.msra.mxu0 0.0
        %2139 = vmatprep.subr.mxu0 0.0
        %2140 = vmatpush1.msra.mxu0 0.0
        %2141 = vmatprep.subr.mxu0 0.0
        %2142 = vmatpush1.msra.mxu0 0.0
        %2143 = vmatprep.subr.mxu0 0.0
        %2144 = vmatpush1.msra.mxu0 0.0
        %2145 = vmatprep.subr.mxu0 0.0
        %2146 = vmatpush1.msra.mxu0 0.0
        %2147 = vmatprep.subr.mxu0 0.0
        %2148 = vmatpush1.msra.mxu0 0.0
        %2149 = vmatprep.subr.mxu0 0.0
        %2150 = vmatpush1.msra.mxu0 0.0
        %2151 = vmatprep.subr.mxu0 0.0
        %2152 = vmatpush1.msra.mxu0 0.0
        %2153 = vmatprep.subr.mxu0 0.0
        %2154 = vmatpush1.msra.mxu0 0.0
        %2155 = vmatprep.subr.mxu0 0.0
        %2156 = vmatpush1.msra.mxu0 0.0
        %2157 = vmatprep.subr.mxu0 0.0
        %2158 = vmatpush1.msra.mxu0 0.0
        %2159 = vmatprep.subr.mxu0 0.0
        %2160 = vmatpush1.msra.mxu0 0.0
        %2161 = vmatprep.subr.mxu0 0.0
        %2162 = vmatpush1.msra.mxu0 0.0
        %2163 = vmatprep.subr.mxu0 0.0
        %2164 = vmatpush1.msra.mxu0 0.0
        %2165 = vmatprep.subr.mxu0 0.0
        %2166 = vmatpush1.msra.mxu0 0.0
        %2167 = vmatprep.subr.mxu0 0.0
        %2168 = vmatpush1.msra.mxu0 0.0
        %2169 = vmatprep.subr.mxu0 0.0
        %2170 = vmatpush1.msra.mxu0 0.0
        %2171 = vmatprep.subr.mxu0 0.0
        %2172 = vmatpush1.msra.mxu0 0.0
        %2173 = vmatprep.subr.mxu0 0.0
        %2174 = vmatpush1.msra.mxu0 0.0
        %2175 = vmatprep.subr.mxu0 0.0
        %2176 = vmatpush1.msra.mxu0 0.0
        %2177 = vmatprep.subr.mxu0 0.0
        %2178 = vmatpush1.msra.mxu0 0.0
        %2179 = vmatprep.subr.mxu0 0.0
        %2180 = vmatpush1.msra.mxu0 0.0
        %2181 = vmatprep.subr.mxu0 0.0
        %2182 = vmatpush1.msra.mxu0 0.0
        %2183 = vmatprep.subr.mxu0 0.0
        %2184 = vmatpush1.msra.mxu0 0.0
        %2185 = vmatprep.subr.mxu0 0.0
        %2186 = vmatpush1.msra.mxu0 0.0
        %2187 = vmatprep.subr.mxu0 0.0
        %2188 = vmatpush1.msra.mxu0 0.0
        %2189 = vmatprep.subr.mxu0 0.0
        %2190 = vmatpush1.msra.mxu0 0.0
        %2191 = vmatprep.subr.mxu0 0.0
        %2192 = vmatpush1.msra.mxu0 0.0
        %2193 = vmatprep.mubr.f32.mxu0 0.0
        %v2194 = vand.u32 %v1965, 4294901760
        %v2195 = vsub.f32 %v1965, %v2194
        %2196 = vmatmul.mubr.f32.gmra.mrb[0].mxu0 %v2195
        %v2197 = vpop.f32.mrb[0].mxu0
        %v2198 = vadd.f32 %v2122, %v2197
        %v2199 = vpop.f32.mrb[0].mxu0
        %2200 = vdwg.mxu0
        %2201 = vmatprep.subr.mxu0 0.0
        %v2202 = vand.u32 %v193, 4294901760
        %2203 = vmatpush1.msra.mxu0 %v2202
        %2204 = vmatprep.subr.mxu0 0.0
        %v2205 = vand.u32 %v206, 4294901760
        %2206 = vmatpush1.msra.mxu0 %v2205
        %2207 = vmatprep.subr.mxu0 0.0
        %2208 = vmatpush1.msra.mxu0 0.0
        %2209 = vmatprep.subr.mxu0 0.0
        %2210 = vmatpush1.msra.mxu0 0.0
        %2211 = vmatprep.subr.mxu0 0.0
        %2212 = vmatpush1.msra.mxu0 0.0
        %2213 = vmatprep.subr.mxu0 0.0
        %2214 = vmatpush1.msra.mxu0 0.0
        %2215 = vmatprep.subr.mxu0 0.0
        %2216 = vmatpush1.msra.mxu0 0.0
        %2217 = vmatprep.subr.mxu0 0.0
        %2218 = vmatpush1.msra.mxu0 0.0
        %2219 = vmatprep.subr.mxu0 0.0
        %2220 = vmatpush1.msra.mxu0 0.0
        %2221 = vmatprep.subr.mxu0 0.0
        %2222 = vmatpush1.msra.mxu0 0.0
        %2223 = vmatprep.subr.mxu0 0.0
        %2224 = vmatpush1.msra.mxu0 0.0
        %2225 = vmatprep.subr.mxu0 0.0
        %2226 = vmatpush1.msra.mxu0 0.0
        %2227 = vmatprep.subr.mxu0 0.0
        %2228 = vmatpush1.msra.mxu0 0.0
        %2229 = vmatprep.subr.mxu0 0.0
        %2230 = vmatpush1.msra.mxu0 0.0
        %2231 = vmatprep.subr.mxu0 0.0
        %2232 = vmatpush1.msra.mxu0 0.0
        %2233 = vmatprep.subr.mxu0 0.0
        %2234 = vmatpush1.msra.mxu0 0.0
        %2235 = vmatprep.subr.mxu0 0.0
        %2236 = vmatpush1.msra.mxu0 0.0
        %2237 = vmatprep.subr.mxu0 0.0
        %2238 = vmatpush1.msra.mxu0 0.0
        %2239 = vmatprep.subr.mxu0 0.0
        %2240 = vmatpush1.msra.mxu0 0.0
        %2241 = vmatprep.subr.mxu0 0.0
        %2242 = vmatpush1.msra.mxu0 0.0
        %2243 = vmatprep.subr.mxu0 0.0
        %2244 = vmatpush1.msra.mxu0 0.0
        %2245 = vmatprep.subr.mxu0 0.0
        %2246 = vmatpush1.msra.mxu0 0.0
        %2247 = vmatprep.subr.mxu0 0.0
        %2248 = vmatpush1.msra.mxu0 0.0
        %2249 = vmatprep.subr.mxu0 0.0
        %2250 = vmatpush1.msra.mxu0 0.0
        %2251 = vmatprep.subr.mxu0 0.0
        %2252 = vmatpush1.msra.mxu0 0.0
        %2253 = vmatprep.subr.mxu0 0.0
        %2254 = vmatpush1.msra.mxu0 0.0
        %2255 = vmatprep.subr.mxu0 0.0
        %2256 = vmatpush1.msra.mxu0 0.0
        %2257 = vmatprep.subr.mxu0 0.0
        %2258 = vmatpush1.msra.mxu0 0.0
        %2259 = vmatprep.subr.mxu0 0.0
        %2260 = vmatpush1.msra.mxu0 0.0
        %2261 = vmatprep.subr.mxu0 0.0
        %2262 = vmatpush1.msra.mxu0 0.0
        %2263 = vmatprep.subr.mxu0 0.0
        %2264 = vmatpush1.msra.mxu0 0.0
        %2265 = vmatprep.subr.mxu0 0.0
        %2266 = vmatpush1.msra.mxu0 0.0
        %2267 = vmatprep.mubr.f32.mxu0 0.0
        %v2268 = vand.u32 %v1965, 4294901760
        %v2269 = vsub.f32 %v1965, %v2268
        %v2270 = vand.u32 %v2269, 4294901760
        %2271 = vmatmul.mubr.f32.gmra.mrb[0].mxu0 %v2270
        %v2272 = vpop.f32.mrb[0].mxu0
        %v2273 = vadd.f32 %v2198, %v2272
        %v2274 = vpop.f32.mrb[0].mxu0
        %2275 = vdwg.mxu0
        %2276 = vmatprep.subr.mxu0 0.0
        %v2277 = vand.u32 %v193, 4294901760
        %v2278 = vsub.f32 %v193, %v2277
        %v2279 = vand.u32 %v2278, 4294901760
        %2280 = vmatpush1.msra.mxu0 %v2279
        %2281 = vmatprep.subr.mxu0 0.0
        %v2282 = vand.u32 %v206, 4294901760
        %v2283 = vsub.f32 %v206, %v2282
        %v2284 = vand.u32 %v2283, 4294901760
        %2285 = vmatpush1.msra.mxu0 %v2284
        %2286 = vmatprep.subr.mxu0 0.0
        %2287 = vmatpush1.msra.mxu0 0.0
        %2288 = vmatprep.subr.mxu0 0.0
        %2289 = vmatpush1.msra.mxu0 0.0
        %2290 = vmatprep.subr.mxu0 0.0
        %2291 = vmatpush1.msra.mxu0 0.0
        %2292 = vmatprep.subr.mxu0 0.0
        %2293 = vmatpush1.msra.mxu0 0.0
        %2294 = vmatprep.subr.mxu0 0.0
        %2295 = vmatpush1.msra.mxu0 0.0
        %2296 = vmatprep.subr.mxu0 0.0
        %2297 = vmatpush1.msra.mxu0 0.0
        %2298 = vmatprep.subr.mxu0 0.0
        %2299 = vmatpush1.msra.mxu0 0.0
        %2300 = vmatprep.subr.mxu0 0.0
        %2301 = vmatpush1.msra.mxu0 0.0
        %2302 = vmatprep.subr.mxu0 0.0
        %2303 = vmatpush1.msra.mxu0 0.0
        %2304 = vmatprep.subr.mxu0 0.0
        %2305 = vmatpush1.msra.mxu0 0.0
        %2306 = vmatprep.subr.mxu0 0.0
        %2307 = vmatpush1.msra.mxu0 0.0
        %2308 = vmatprep.subr.mxu0 0.0
        %2309 = vmatpush1.msra.mxu0 0.0
        %2310 = vmatprep.subr.mxu0 0.0
        %2311 = vmatpush1.msra.mxu0 0.0
        %2312 = vmatprep.subr.mxu0 0.0
        %2313 = vmatpush1.msra.mxu0 0.0
        %2314 = vmatprep.subr.mxu0 0.0
        %2315 = vmatpush1.msra.mxu0 0.0
        %2316 = vmatprep.subr.mxu0 0.0
        %2317 = vmatpush1.msra.mxu0 0.0
        %2318 = vmatprep.subr.mxu0 0.0
        %2319 = vmatpush1.msra.mxu0 0.0
        %2320 = vmatprep.subr.mxu0 0.0
        %2321 = vmatpush1.msra.mxu0 0.0
        %2322 = vmatprep.subr.mxu0 0.0
        %2323 = vmatpush1.msra.mxu0 0.0
        %2324 = vmatprep.subr.mxu0 0.0
        %2325 = vmatpush1.msra.mxu0 0.0
        %2326 = vmatprep.subr.mxu0 0.0
        %2327 = vmatpush1.msra.mxu0 0.0
        %2328 = vmatprep.subr.mxu0 0.0
        %2329 = vmatpush1.msra.mxu0 0.0
        %2330 = vmatprep.subr.mxu0 0.0
        %2331 = vmatpush1.msra.mxu0 0.0
        %2332 = vmatprep.subr.mxu0 0.0
        %2333 = vmatpush1.msra.mxu0 0.0
        %2334 = vmatprep.subr.mxu0 0.0
        %2335 = vmatpush1.msra.mxu0 0.0
        %2336 = vmatprep.subr.mxu0 0.0
        %2337 = vmatpush1.msra.mxu0 0.0
        %2338 = vmatprep.subr.mxu0 0.0
        %2339 = vmatpush1.msra.mxu0 0.0
        %2340 = vmatprep.subr.mxu0 0.0
        %2341 = vmatpush1.msra.mxu0 0.0
        %2342 = vmatprep.subr.mxu0 0.0
        %2343 = vmatpush1.msra.mxu0 0.0
        %2344 = vmatprep.subr.mxu0 0.0
        %2345 = vmatpush1.msra.mxu0 0.0
        %2346 = vmatprep.mubr.f32.mxu0 0.0
        %v2347 = vand.u32 %v1965, 4294901760
        %2348 = vmatmul.mubr.f32.gmra.mrb[0].mxu0 %v2347
        %v2349 = vpop.f32.mrb[0].mxu0
        %v2350 = vadd.f32 %v2273, %v2349
        %v2351 = vpop.f32.mrb[0].mxu0
        %2352 = vdwg.mxu0
        %2353 = vmatprep.subr.mxu0 0.0
        %v2354 = vand.u32 %v193, 4294901760
        %2355 = vmatpush1.msra.mxu0 %v2354
        %2356 = vmatprep.subr.mxu0 0.0
        %v2357 = vand.u32 %v206, 4294901760
        %2358 = vmatpush1.msra.mxu0 %v2357
        %2359 = vmatprep.subr.mxu0 0.0
        %2360 = vmatpush1.msra.mxu0 0.0
        %2361 = vmatprep.subr.mxu0 0.0
        %2362 = vmatpush1.msra.mxu0 0.0
        %2363 = vmatprep.subr.mxu0 0.0
        %2364 = vmatpush1.msra.mxu0 0.0
        %2365 = vmatprep.subr.mxu0 0.0
        %2366 = vmatpush1.msra.mxu0 0.0
        %2367 = vmatprep.subr.mxu0 0.0
        %2368 = vmatpush1.msra.mxu0 0.0
        %2369 = vmatprep.subr.mxu0 0.0
        %2370 = vmatpush1.msra.mxu0 0.0
        %2371 = vmatprep.subr.mxu0 0.0
        %2372 = vmatpush1.msra.mxu0 0.0
        %2373 = vmatprep.subr.mxu0 0.0
        %2374 = vmatpush1.msra.mxu0 0.0
        %2375 = vmatprep.subr.mxu0 0.0
        %2376 = vmatpush1.msra.mxu0 0.0
        %2377 = vmatprep.subr.mxu0 0.0
        %2378 = vmatpush1.msra.mxu0 0.0
        %2379 = vmatprep.subr.mxu0 0.0
        %2380 = vmatpush1.msra.mxu0 0.0
        %2381 = vmatprep.subr.mxu0 0.0
        %2382 = vmatpush1.msra.mxu0 0.0
        %2383 = vmatprep.subr.mxu0 0.0
        %2384 = vmatpush1.msra.mxu0 0.0
        %2385 = vmatprep.subr.mxu0 0.0
        %2386 = vmatpush1.msra.mxu0 0.0
        %2387 = vmatprep.subr.mxu0 0.0
        %2388 = vmatpush1.msra.mxu0 0.0
        %2389 = vmatprep.subr.mxu0 0.0
        %2390 = vmatpush1.msra.mxu0 0.0
        %2391 = vmatprep.subr.mxu0 0.0
        %2392 = vmatpush1.msra.mxu0 0.0
        %2393 = vmatprep.subr.mxu0 0.0
        %2394 = vmatpush1.msra.mxu0 0.0
        %2395 = vmatprep.subr.mxu0 0.0
        %2396 = vmatpush1.msra.mxu0 0.0
        %2397 = vmatprep.subr.mxu0 0.0
        %2398 = vmatpush1.msra.mxu0 0.0
        %2399 = vmatprep.subr.mxu0 0.0
        %2400 = vmatpush1.msra.mxu0 0.0
        %2401 = vmatprep.subr.mxu0 0.0
        %2402 = vmatpush1.msra.mxu0 0.0
        %2403 = vmatprep.subr.mxu0 0.0
        %2404 = vmatpush1.msra.mxu0 0.0
        %2405 = vmatprep.subr.mxu0 0.0
        %2406 = vmatpush1.msra.mxu0 0.0
        %2407 = vmatprep.subr.mxu0 0.0
        %2408 = vmatpush1.msra.mxu0 0.0
        %2409 = vmatprep.subr.mxu0 0.0
        %2410 = vmatpush1.msra.mxu0 0.0
        %2411 = vmatprep.subr.mxu0 0.0
        %2412 = vmatpush1.msra.mxu0 0.0
        %2413 = vmatprep.subr.mxu0 0.0
        %2414 = vmatpush1.msra.mxu0 0.0
        %2415 = vmatprep.subr.mxu0 0.0
        %2416 = vmatpush1.msra.mxu0 0.0
        %2417 = vmatprep.subr.mxu0 0.0
        %2418 = vmatpush1.msra.mxu0 0.0
        %2419 = vmatprep.mubr.f32.mxu0 0.0
        %v2420 = vand.u32 %v1965, 4294901760
        %2421 = vmatmul.mubr.f32.gmra.mrb[0].mxu0 %v2420
        %v2422 = vpop.f32.mrb[0].mxu0
        %v2423 = vadd.f32 %v2350, %v2422
        %v2424 = vpop.f32.mrb[0].mxu0
        %2425 = vdwg.mxu0
        %2426 = vst.msk [vmem:[#allocation2] sm:$0xf] %vm1130, %v1960
        %2427 = vrot.lane.b32.xlu0 %v1498, 15
        %v2428 = vpop.permute.xlu0 %2427
        %v2429 = vrot.slane %v2428, 4
        %v2430 = vsel %vm201, %v2429, %v2428
        %2432 = vst.msk [vmem:[#allocation2] sm:$0xff] %vm1139, %v2430
        %2434 = vrot.lane.b32.xlu0 %v2423, 15
        %v2435 = vpop.permute.xlu0 %2434
        %2437 = vst.msk [vmem:[#allocation2 + $0x4] sm:$0xf] %vm1145, %v2435
        %v2438 = vld [vmem:[#allocation2] sm:$0xff]
        %2439 = vst [vmem:[#allocation3] sm:$0xf] %v2438
        %v2441 = vcombine.high %v2438, %v2438
        %2442 = vrot.lane.b32.xlu0 %v2438, 127
        %v2443 = vpop.permute.xlu0 %2442
        %2444 = vrot.lane.b32.xlu0 %v2441, 127
        %v2445 = vpop.permute.xlu0 %2444
        %v2446 = vsel %vm1155, %v2443, %v2445
        %2448 = vst [vmem:[#allocation3 + $0x4] sm:$0xf] %v2446
        %2449 = vrot.lane.b32.xlu0 %v2438, 126
        %v2450 = vpop.permute.xlu0 %2449
        %2451 = vrot.lane.b32.xlu0 %v2441, 126
        %v2452 = vpop.permute.xlu0 %2451
        %v2453 = vsel %vm1163, %v2450, %v2452
        %2455 = vst [vmem:[#allocation3 + $0x8] sm:$0xf] %v2453
        %2456 = vrot.lane.b32.xlu0 %v2438, 125
        %v2457 = vpop.permute.xlu0 %2456
        %2458 = vrot.lane.b32.xlu0 %v2441, 125
        %v2459 = vpop.permute.xlu0 %2458
        %v2460 = vsel %vm1171, %v2457, %v2459
        %2462 = vst [vmem:[#allocation3 + $0xc] sm:$0xf] %v2460
        %2463 = vrot.lane.b32.xlu0 %v2438, 124
        %v2464 = vpop.permute.xlu0 %2463
        %2465 = vrot.lane.b32.xlu0 %v2441, 124
        %v2466 = vpop.permute.xlu0 %2465
        %v2467 = vsel %vm1179, %v2464, %v2466
        %2469 = vst [vmem:[#allocation3 + $0x10] sm:$0xf] %v2467
        %2470 = vrot.lane.b32.xlu0 %v2438, 123
        %v2471 = vpop.permute.xlu0 %2470
        %2472 = vrot.lane.b32.xlu0 %v2441, 123
        %v2473 = vpop.permute.xlu0 %2472
        %v2474 = vsel %vm1187, %v2471, %v2473
        %2476 = vst [vmem:[#allocation3 + $0x14] sm:$0xf] %v2474
        %2477 = vrot.lane.b32.xlu0 %v2438, 122
        %v2478 = vpop.permute.xlu0 %2477
        %2479 = vrot.lane.b32.xlu0 %v2441, 122
        %v2480 = vpop.permute.xlu0 %2479
        %v2481 = vsel %vm1195, %v2478, %v2480
        %2483 = vst [vmem:[#allocation3 + $0x18] sm:$0xf] %v2481
        %2484 = vrot.lane.b32.xlu0 %v2438, 121
        %v2485 = vpop.permute.xlu0 %2484
        %2486 = vrot.lane.b32.xlu0 %v2441, 121
        %v2487 = vpop.permute.xlu0 %2486
        %v2488 = vsel %vm1203, %v2485, %v2487
        %2490 = vst [vmem:[#allocation3 + $0x1c] sm:$0xf] %v2488
        %2491 = vrot.lane.b32.xlu0 %v2438, 120
        %v2492 = vpop.permute.xlu0 %2491
        %2493 = vrot.lane.b32.xlu0 %v2441, 120
        %v2494 = vpop.permute.xlu0 %2493
        %v2495 = vsel %vm1211, %v2492, %v2494
        %2497 = vst [vmem:[#allocation3 + $0x20] sm:$0xf] %v2495
        %2498 = vrot.lane.b32.xlu0 %v2438, 119
        %v2499 = vpop.permute.xlu0 %2498
        %2500 = vrot.lane.b32.xlu0 %v2441, 119
        %v2501 = vpop.permute.xlu0 %2500
        %v2502 = vsel %vm1219, %v2499, %v2501
        %2504 = vst [vmem:[#allocation3 + $0x24] sm:$0xf] %v2502
        %2505 = vrot.lane.b32.xlu0 %v2438, 118
        %v2506 = vpop.permute.xlu0 %2505
        %2507 = vrot.lane.b32.xlu0 %v2441, 118
        %v2508 = vpop.permute.xlu0 %2507
        %v2509 = vsel %vm1227, %v2506, %v2508
        %2511 = vst [vmem:[#allocation3 + $0x28] sm:$0xf] %v2509
        %2512 = vrot.lane.b32.xlu0 %v2438, 117
        %v2513 = vpop.permute.xlu0 %2512
        %2514 = vrot.lane.b32.xlu0 %v2441, 117
        %v2515 = vpop.permute.xlu0 %2514
        %v2516 = vsel %vm1235, %v2513, %v2515
        %2518 = vst [vmem:[#allocation3 + $0x2c] sm:$0xf] %v2516
        %2519 = vrot.lane.b32.xlu0 %v2438, 116
        %v2520 = vpop.permute.xlu0 %2519
        %2521 = vrot.lane.b32.xlu0 %v2441, 116
        %v2522 = vpop.permute.xlu0 %2521
        %v2523 = vsel %vm1243, %v2520, %v2522
        %2525 = vst [vmem:[#allocation3 + $0x30] sm:$0xf] %v2523
        %2526 = vrot.lane.b32.xlu0 %v2438, 115
        %v2527 = vpop.permute.xlu0 %2526
        %2528 = vrot.lane.b32.xlu0 %v2441, 115
        %v2529 = vpop.permute.xlu0 %2528
        %v2530 = vsel %vm1251, %v2527, %v2529
        %2532 = vst [vmem:[#allocation3 + $0x34] sm:$0xf] %v2530
        %2533 = vrot.lane.b32.xlu0 %v2438, 114
        %v2534 = vpop.permute.xlu0 %2533
        %2535 = vrot.lane.b32.xlu0 %v2441, 114
        %v2536 = vpop.permute.xlu0 %2535
        %v2537 = vsel %vm1259, %v2534, %v2536
        %2539 = vst [vmem:[#allocation3 + $0x38] sm:$0xf] %v2537
        %2540 = vrot.lane.b32.xlu0 %v2438, 113
        %v2541 = vpop.permute.xlu0 %2540
        %2542 = vrot.lane.b32.xlu0 %v2441, 113
        %v2543 = vpop.permute.xlu0 %2542
        %v2544 = vsel %vm1267, %v2541, %v2543
        %2546 = vst [vmem:[#allocation3 + $0x3c] sm:$0xf] %v2544
        %2547 = vrot.lane.b32.xlu0 %v2438, 112
        %v2548 = vpop.permute.xlu0 %2547
        %2549 = vrot.lane.b32.xlu0 %v2441, 112
        %v2550 = vpop.permute.xlu0 %2549
        %v2551 = vsel %vm1275, %v2548, %v2550
        %2553 = vst [vmem:[#allocation3 + $0x40] sm:$0xf] %v2551
        %2554 = vrot.lane.b32.xlu0 %v2438, 111
        %v2555 = vpop.permute.xlu0 %2554
        %2556 = vrot.lane.b32.xlu0 %v2441, 111
        %v2557 = vpop.permute.xlu0 %2556
        %v2558 = vsel %vm1283, %v2555, %v2557
        %2560 = vst [vmem:[#allocation3 + $0x44] sm:$0xf] %v2558
        %2561 = vrot.lane.b32.xlu0 %v2438, 110
        %v2562 = vpop.permute.xlu0 %2561
        %2563 = vrot.lane.b32.xlu0 %v2441, 110
        %v2564 = vpop.permute.xlu0 %2563
        %v2565 = vsel %vm1291, %v2562, %v2564
        %2567 = vst [vmem:[#allocation3 + $0x48] sm:$0xf] %v2565
        %2568 = vrot.lane.b32.xlu0 %v2438, 109
        %v2569 = vpop.permute.xlu0 %2568
        %2570 = vrot.lane.b32.xlu0 %v2441, 109
        %v2571 = vpop.permute.xlu0 %2570
        %v2572 = vsel %vm1299, %v2569, %v2571
        %2574 = vst [vmem:[#allocation3 + $0x4c] sm:$0xf] %v2572
        %2575 = vrot.lane.b32.xlu0 %v2438, 108
        %v2576 = vpop.permute.xlu0 %2575
        %2577 = vrot.lane.b32.xlu0 %v2441, 108
        %v2578 = vpop.permute.xlu0 %2577
        %v2579 = vsel %vm1307, %v2576, %v2578
        %2581 = vst [vmem:[#allocation3 + $0x50] sm:$0xf] %v2579
        %2582 = vrot.lane.b32.xlu0 %v2438, 107
        %v2583 = vpop.permute.xlu0 %2582
        %2584 = vrot.lane.b32.xlu0 %v2441, 107
        %v2585 = vpop.permute.xlu0 %2584
        %v2586 = vsel %vm1315, %v2583, %v2585
        %2588 = vst [vmem:[#allocation3 + $0x54] sm:$0xf] %v2586
        %2589 = vrot.lane.b32.xlu0 %v2438, 106
        %v2590 = vpop.permute.xlu0 %2589
        %2591 = vrot.lane.b32.xlu0 %v2441, 106
        %v2592 = vpop.permute.xlu0 %2591
        %v2593 = vsel %vm1323, %v2590, %v2592
        %2595 = vst [vmem:[#allocation3 + $0x58] sm:$0xf] %v2593
        %2596 = vrot.lane.b32.xlu0 %v2438, 105
        %v2597 = vpop.permute.xlu0 %2596
        %2598 = vrot.lane.b32.xlu0 %v2441, 105
        %v2599 = vpop.permute.xlu0 %2598
        %v2600 = vsel %vm1331, %v2597, %v2599
        %2602 = vst [vmem:[#allocation3 + $0x5c] sm:$0xf] %v2600
        %2603 = vrot.lane.b32.xlu0 %v2438, 104
        %v2604 = vpop.permute.xlu0 %2603
        %2605 = vrot.lane.b32.xlu0 %v2441, 104
        %v2606 = vpop.permute.xlu0 %2605
        %v2607 = vsel %vm1339, %v2604, %v2606
        %2609 = vst [vmem:[#allocation3 + $0x60] sm:$0xf] %v2607
        %2610 = vrot.lane.b32.xlu0 %v2438, 103
        %v2611 = vpop.permute.xlu0 %2610
        %2612 = vrot.lane.b32.xlu0 %v2441, 103
        %v2613 = vpop.permute.xlu0 %2612
        %v2614 = vsel %vm1347, %v2611, %v2613
        %2616 = vst [vmem:[#allocation3 + $0x64] sm:$0xf] %v2614
        %2617 = vrot.lane.b32.xlu0 %v2438, 102
        %v2618 = vpop.permute.xlu0 %2617
        %2619 = vrot.lane.b32.xlu0 %v2441, 102
        %v2620 = vpop.permute.xlu0 %2619
        %v2621 = vsel %vm1355, %v2618, %v2620
        %2623 = vst [vmem:[#allocation3 + $0x68] sm:$0xf] %v2621
        %2624 = vrot.lane.b32.xlu0 %v2438, 101
        %v2625 = vpop.permute.xlu0 %2624
        %2626 = vrot.lane.b32.xlu0 %v2441, 101
        %v2627 = vpop.permute.xlu0 %2626
        %v2628 = vsel %vm1363, %v2625, %v2627
        %2630 = vst [vmem:[#allocation3 + $0x6c] sm:$0xf] %v2628
        %2631 = vrot.lane.b32.xlu0 %v2438, 100
        %v2632 = vpop.permute.xlu0 %2631
        %2633 = vrot.lane.b32.xlu0 %v2441, 100
        %v2634 = vpop.permute.xlu0 %2633
        %v2635 = vsel %vm1371, %v2632, %v2634
        %2637 = vst [vmem:[#allocation3 + $0x70] sm:$0xf] %v2635
        %2638 = vrot.lane.b32.xlu0 %v2438, 99
        %v2639 = vpop.permute.xlu0 %2638
        %2640 = vrot.lane.b32.xlu0 %v2441, 99
        %v2641 = vpop.permute.xlu0 %2640
        %v2642 = vsel %vm1379, %v2639, %v2641
        %2644 = vst [vmem:[#allocation3 + $0x74] sm:$0xf] %v2642
        %2645 = vrot.lane.b32.xlu0 %v2438, 98
        %v2646 = vpop.permute.xlu0 %2645
        %2647 = vrot.lane.b32.xlu0 %v2441, 98
        %v2648 = vpop.permute.xlu0 %2647
        %v2649 = vsel %vm1387, %v2646, %v2648
        %2651 = vst [vmem:[#allocation3 + $0x78] sm:$0xf] %v2649
        %v2652 = vld [vmem:[#allocation3] sm:$0xff]
        %v2653 = vld [vmem:[#allocation3 + $0x8] sm:$0xff]
        %v2654 = vld [vmem:[#allocation3 + $0x10] sm:$0xff]
        %v2655 = vld [vmem:[#allocation3 + $0x18] sm:$0xff]
        %v2656 = vld [vmem:[#allocation3 + $0x20] sm:$0xff]
        %v2657 = vld [vmem:[#allocation3 + $0x28] sm:$0xff]
        %v2658 = vld [vmem:[#allocation3 + $0x30] sm:$0xff]
        %v2659 = vld [vmem:[#allocation3 + $0x38] sm:$0xff]
        %v2660 = vld [vmem:[#allocation3 + $0x40] sm:$0xff]
        %v2661 = vld [vmem:[#allocation3 + $0x48] sm:$0xff]
        %v2662 = vld [vmem:[#allocation3 + $0x50] sm:$0xff]
        %v2663 = vld [vmem:[#allocation3 + $0x58] sm:$0xff]
        %v2664 = vld [vmem:[#allocation3 + $0x60] sm:$0xff]
        %v2665 = vld [vmem:[#allocation3 + $0x68] sm:$0xff]
        %v2666 = vld [vmem:[#allocation3 + $0x70] sm:$0xff]
        %v2667 = vld [vmem:[#allocation3 + $0x78] sm:$0xf]
        %v2669 = vsel %vm1179, %v196, 0
        %v2672 = vsel %vm1410, %v2667, 0
        %2674 = vmatprep.subr.mxu0 0.0
        %2675 = vmatpush1.msra.mxu0 %v2652
        %2676 = vmatprep.subr.mxu0 0.0
        %2677 = vmatpush1.msra.mxu0 %v2653
        %2678 = vmatprep.subr.mxu0 0.0
        %2679 = vmatpush1.msra.mxu0 %v2654
        %2680 = vmatprep.subr.mxu0 0.0
        %2681 = vmatpush1.msra.mxu0 %v2655
        %2682 = vmatprep.subr.mxu0 0.0
        %2683 = vmatpush1.msra.mxu0 %v2656
        %2684 = vmatprep.subr.mxu0 0.0
        %2685 = vmatpush1.msra.mxu0 %v2657
        %2686 = vmatprep.subr.mxu0 0.0
        %2687 = vmatpush1.msra.mxu0 %v2658
        %2688 = vmatprep.subr.mxu0 0.0
        %2689 = vmatpush1.msra.mxu0 %v2659
        %2690 = vmatprep.subr.mxu0 0.0
        %2691 = vmatpush1.msra.mxu0 %v2660
        %2692 = vmatprep.subr.mxu0 0.0
        %2693 = vmatpush1.msra.mxu0 %v2661
        %2694 = vmatprep.subr.mxu0 0.0
        %2695 = vmatpush1.msra.mxu0 %v2662
        %2696 = vmatprep.subr.mxu0 0.0
        %2697 = vmatpush1.msra.mxu0 %v2663
        %2698 = vmatprep.subr.mxu0 0.0
        %2699 = vmatpush1.msra.mxu0 %v2664
        %2700 = vmatprep.subr.mxu0 0.0
        %2701 = vmatpush1.msra.mxu0 %v2665
        %2702 = vmatprep.subr.mxu0 0.0
        %2703 = vmatpush1.msra.mxu0 %v2666
        %2704 = vmatprep.subr.mxu0 0.0
        %2705 = vmatpush1.msra.mxu0 %v2672
        %2706 = vmatprep.subr.mxu0 0.0
        %2707 = vmatpush1.msra.mxu0 0.0
        %2708 = vmatprep.subr.mxu0 0.0
        %2709 = vmatpush1.msra.mxu0 0.0
        %2710 = vmatprep.subr.mxu0 0.0
        %2711 = vmatpush1.msra.mxu0 0.0
        %2712 = vmatprep.subr.mxu0 0.0
        %2713 = vmatpush1.msra.mxu0 0.0
        %2714 = vmatprep.subr.mxu0 0.0
        %2715 = vmatpush1.msra.mxu0 0.0
        %2716 = vmatprep.subr.mxu0 0.0
        %2717 = vmatpush1.msra.mxu0 0.0
        %2718 = vmatprep.subr.mxu0 0.0
        %2719 = vmatpush1.msra.mxu0 0.0
        %2720 = vmatprep.subr.mxu0 0.0
        %2721 = vmatpush1.msra.mxu0 0.0
        %2722 = vmatprep.subr.mxu0 0.0
        %2723 = vmatpush1.msra.mxu0 0.0
        %2724 = vmatprep.subr.mxu0 0.0
        %2725 = vmatpush1.msra.mxu0 0.0
        %2726 = vmatprep.subr.mxu0 0.0
        %2727 = vmatpush1.msra.mxu0 0.0
        %2728 = vmatprep.subr.mxu0 0.0
        %2729 = vmatpush1.msra.mxu0 0.0
        %2730 = vmatprep.subr.mxu0 0.0
        %2731 = vmatpush1.msra.mxu0 0.0
        %2732 = vmatprep.subr.mxu0 0.0
        %2733 = vmatpush1.msra.mxu0 0.0
        %2734 = vmatprep.subr.mxu0 0.0
        %2735 = vmatpush1.msra.mxu0 0.0
        %2736 = vmatprep.subr.mxu0 0.0
        %2737 = vmatpush1.msra.mxu0 0.0
        %2738 = vmatprep.mubr.f32.mxu0 0.0
        %2739 = vmatmul.mubr.f32.gmra.mrb[0].mxu0 %v2669
        %v2740 = vpop.f32.mrb[0].mxu0
        %v2741 = vadd.f32 0.0, %v2740
        %v2742 = vpop.f32.mrb[0].mxu0
        %2743 = vdwg.mxu0
        %v2744 = vsel %vm1410, %v2741, 0.0
        %2745 = vadd.xlane.f32.xlu0 %v2744
        %v2746 = vpop.xlane.xlu0 %2745
        %v2747 = vmul.f32 %v2746, %v1487
        %v2748 = vsub.f32 %v2741, %v2747
        %v2749 = vmul.f32 %v2748, %v2748
        %v2750 = vsel %vm1410, %v2749, 0.0
        %2751 = vadd.xlane.f32.xlu0 %v2750
        %v2752 = vpop.xlane.xlu0 %2751
        %v2753 = vmul.f32 %v2752, %v1487
        %v2754 = vadd.f32 %v2753, 1e-05
        %v2755 = vrsqrt.pop %v2754
        %v2756 = vmul.f32 %v2748, %v2755
        %v2757 = vadd.f32 %v2756, %v197
        %2758 = vst [vmem:[%s188] sm:$0xf] %v2757
        %s2759 = sand.u32 %s115, 1
        %s2760 = scalar_lea.sflag [#allocation5], %s2759
        %s2761 = sand.u32 %s115, 1
        %s2762 = smul.addr %s2761, 4
        %s2763 = scalar_lea.vmem [#allocation4], %s2762
        // Predicated region
        $region37: #{resblock_forward.1} parent=35 // pred_check
          %p2764 = pneg %p125
        $region38: #{resblock_forward.1} parent=35 // pred_check_branch
          %2766 = sbr.rel (%p2764) target = $region40
        $region39: #{resblock_forward.1} parent=35 // pred_region
          %s2768 = ssub.s32 64, 64
          %2769 = vsyncadd %s2760, %s2768
          %s2770 = smul.addr %s18, 64
          %s2771 = scalar_lea.hbm %s4, %s2770
          %s2773 = sshll.u32 %s2763, 4
          %s2774 = int_to_ptr.vmem [resolvable:$true] %s2773
          %2776 = dma.vmem_to_hbm [thread:$0]  %s2774, 64, %s2771, %s2760
        $region40: #{resblock_forward.1} parent=35 // pred_fallthru
          _
      $region36: #{resblock_forward.1} parent=5 // pred_fallthru
        _
      %p2777 = scmp.le.s32.totalorder 2, %s13
      // Predicated region
      $region41: #{resblock_forward.1} parent=5 // pred_check
        %p2778 = pneg %p2777
      $region42: #{resblock_forward.1} parent=5 // pred_check_branch
        %2780 = sbr.rel (%p2778) target = $region44
      $region43: #{resblock_forward.1} parent=5 // pred_region
        %s2781 = ssub.s32 %s13, 2
        // Predicated region
        $region45: #{resblock_forward.1} parent=43 // pred_check
          %p2782 = pneg %p131
        $region46: #{resblock_forward.1} parent=43 // pred_check_branch
          %2784 = sbr.rel (%p2782) target = $region48
        $region47: #{resblock_forward.1} parent=43 // pred_region
          %s2785 = sand.u32 %s116, 1
          %s2786 = scalar_lea.sflag [#allocation5], %s2785
          %s2787 = sand.u32 %s116, 1
          %s2788 = smul.addr %s2787, 4
          %s2789 = scalar_lea.vmem [#allocation4], %s2788
          %2790 = dma.done %s2786, 64
        $region48: #{resblock_forward.1} parent=43 // pred_fallthru
          _
      $region44: #{resblock_forward.1} parent=5 // pred_fallthru
        _
    $region6: #{resblock_forward.1} parent=1 // loop_footer
      %s17 = sadd.s32 1, %s13
    $region7: #{resblock_forward.1} parent=1 // loop_footer_branch
      %12 = sbr.rel target = $region3
    $region8: #{resblock_forward.1} parent=1 // loop_exit
      _
    %2791 = vsyncpa [#allocation5], 1
    %s2792 = scalar_lea.sflag [#allocation5], 1
    %2793 = vsyncpa %s2792, 1

</llo_original>
